<compile_context>
chip_gen: v7x
topology: tpu7x:2x2x1
jax: 0.10.0
libtpu: 0.0.40
codegen_flags: <defaults>
</compile_context>

<pallas_src>
import jax
import jax.numpy as jnp
from jax.experimental import pallas as pl
from jax.experimental.pallas import tpu as pltpu


# --------------------------------------------------------------------------- #
# Kernel
# --------------------------------------------------------------------------- #
def _memory_expression_kernel(logits_ref, matrix_ref, normalizer_ref,
                              mat_out_ref, norm_out_ref):
    """One batch tile of memory-expression attention.

    logits_ref:     (TB, H, M)    input dtype
    matrix_ref:     (TB, M, DD)   input dtype, DD = d_head * d_head
    normalizer_ref: (TB, M, D)    input dtype
    mat_out_ref:    (TB, H*DD)    lane-dense output
    norm_out_ref:   (TB, H*D)     lane-dense output
    """
    _, H, M = logits_ref.shape
    DD = matrix_ref.shape[-1]
    D = normalizer_ref.shape[-1]

    norm_chunks = []
    for h in range(H):
        # Softmax over memories for head h, computed in f32 on 2-D (TB, M) data.
        lg = logits_ref[:, h, :].astype(jnp.float32)
        lg = lg - jnp.max(lg, axis=-1, keepdims=True)
        e = jnp.exp(lg)
        p = e / jnp.sum(e, axis=-1, keepdims=True)                    # (TB, M)

        # Unrolled VPU multiply-accumulate over the tiny memories axis.
        # This keeps compute on otherwise-idle VPU slots (kernel is HBM-bound),
        # avoids TB tiny batched MXU matmuls and any 3-D value relayouts, and
        # only promotes one (TB, DD) slice to f32 at a time.
        w = p[:, 0:1]
        mat_acc = w * matrix_ref[:, 0, :].astype(jnp.float32)         # (TB, DD)
        norm_acc = w * normalizer_ref[:, 0, :].astype(jnp.float32)    # (TB, D)
        for m in range(1, M):
            w = p[:, m:m + 1]
            mat_acc = mat_acc + w * matrix_ref[:, m, :].astype(jnp.float32)
            norm_acc = norm_acc + w * normalizer_ref[:, m, :].astype(jnp.float32)

        # Dominant output stream: 128-aligned, lane-dense store per head.
        mat_out_ref[:, h * DD:(h + 1) * DD] = mat_acc.astype(mat_out_ref.dtype)
        norm_chunks.append(norm_acc)

    # Small normalizer output: one full-width store (no masked partial stores
    # per head).
    norm_out_ref[...] = jnp.concatenate(norm_chunks, axis=-1).astype(norm_out_ref.dtype)


# --------------------------------------------------------------------------- #
# Tile-size / VMEM-budget selection
# --------------------------------------------------------------------------- #
def _round_up(x: int, m: int) -> int:
    return ((x + m - 1) // m) * m


def _per_row_padded_bytes(d0: int, d1: int, itemsize: int) -> int:
    """VMEM bytes per leading-dim row of a block whose last two dims are (d0, d1)."""
    sub = max(8, 32 // max(itemsize, 1))       # sublane multiple for this dtype
    return _round_up(d0, sub) * _round_up(d1, 128) * itemsize


def _per_row_padded_bytes_2d(d_last: int, itemsize: int) -> int:
    """VMEM bytes per row of a 2-D block (TB, d_last); TB is the sublane dim."""
    return _round_up(d_last, 128) * itemsize


def _vmem_physical_bytes() -> int:
    try:
        return int(pltpu.get_tpu_info().vmem_capacity_bytes)
    except Exception:
        kind = jax.devices()[0].device_kind.lower()
        if "v7" in kind:
            return 64 * 1024 * 1024
        return 128 * 1024 * 1024


def _vmem_block_budget_bytes(phys_bytes: int) -> int:
    """Target bytes for the whole pipelined working set, per TPU generation."""
    kind = jax.devices()[0].device_kind.lower()
    if "v7" in kind or phys_bytes <= 64 * 1024 * 1024:
        return 24 * 1024 * 1024            # v7x: 64 MiB/TC physical -> stay well under
    if "v5e" in kind or "v5 lite" in kind or "v5lite" in kind:
        return 14 * 1024 * 1024            # v5e: modest scoped-VMEM headroom
    if "v6" in kind:
        return 48 * 1024 * 1024            # v6e: 128 MiB physical, lots of headroom
    return 24 * 1024 * 1024                # unknown chip: conservative


def _pick_tile(batch: int, bytes_per_row: int, budget_bytes: int) -> int:
    """Pick TB: as large as VMEM allows, multiple of 8, and >=2 grid steps."""
    cap = max(1, budget_bytes // max(bytes_per_row, 1))
    if batch <= 8:
        return batch                      # block must equal the full dim when < 8
    tb = min(batch, cap, max(8, pl.cdiv(batch, 2)))
    tb = max(8, (tb // 8) * 8)            # sublane-aligned output blocks
    return tb


# --------------------------------------------------------------------------- #
# Fused pallas_call wrapper (flattened batch)
# --------------------------------------------------------------------------- #
@jax.jit
def _memory_expression_flat(logits_flat, matrix_flat, normalizer_flat):
    # logits_flat:     (B, H, M)
    # matrix_flat:     (B, M, DD)
    # normalizer_flat: (B, M, D)
    B, H, M = logits_flat.shape
    DD = matrix_flat.shape[-1]
    D = normalizer_flat.shape[-1]

    l_isz = logits_flat.dtype.itemsize
    m_isz = matrix_flat.dtype.itemsize
    n_isz = normalizer_flat.dtype.itemsize

    # Honest per-row VMEM footprint (with (sublane,128) padding), inputs and
    # outputs double-buffered by the BlockSpec pipeline, plus f32 temporaries.
    row_in = (_per_row_padded_bytes(H, M, l_isz)
              + _per_row_padded_bytes(M, DD, m_isz)
              + _per_row_padded_bytes(M, D, n_isz))
    row_out = (_per_row_padded_bytes_2d(H * DD, m_isz)
               + _per_row_padded_bytes_2d(H * D, n_isz))
    row_scratch = 4 * (2 * _round_up(DD, 128) + 2 * _round_up(D, 128)
                       + 4 * _round_up(M, 128))
    bytes_per_row = 2 * (row_in + row_out) + row_scratch

    phys = _vmem_physical_bytes()
    budget = _vmem_block_budget_bytes(phys)
    TB = _pick_tile(B, bytes_per_row, budget)
    grid = (pl.cdiv(B, TB),)

    vmem_limit = TB * bytes_per_row + 8 * 1024 * 1024
    vmem_limit = int(min(max(vmem_limit, 16 * 1024 * 1024), phys - 8 * 1024 * 1024))

    cost = pl.CostEstimate(
        flops=2 * B * H * M * (DD + D),
        transcendentals=B * H * M,
        bytes_accessed=B * (H * M * l_isz + M * DD * m_isz + M * D * n_isz
                            + H * DD * m_isz + H * D * n_isz),
    )

    mat_out, norm_out = pl.pallas_call(
        _memory_expression_kernel,
        out_shape=(
            jax.ShapeDtypeStruct((B, H * DD), matrix_flat.dtype),
            jax.ShapeDtypeStruct((B, H * D), normalizer_flat.dtype),
        ),
        grid=grid,
        in_specs=[
            pl.BlockSpec((TB, H, M), lambda b: (b, 0, 0)),
            pl.BlockSpec((TB, M, DD), lambda b: (b, 0, 0)),
            pl.BlockSpec((TB, M, D), lambda b: (b, 0, 0)),
        ],
        out_specs=(
            pl.BlockSpec((TB, H * DD), lambda b: (b, 0)),
            pl.BlockSpec((TB, H * D), lambda b: (b, 0)),
        ),
        compiler_params=pltpu.CompilerParams(
            dimension_semantics=("parallel",),
            vmem_limit_bytes=vmem_limit,
        ),
        cost_estimate=cost,
    )(logits_flat, matrix_flat, normalizer_flat)
    return mat_out, norm_out


# --------------------------------------------------------------------------- #
# Module wrapper
# --------------------------------------------------------------------------- #
class MemoryExpressionAttention:
    """JAX/Pallas port of the PyTorch MemoryExpressionAttention module."""

    def __call__(self, connective_logits, matrix, normalizer):
        # connective_logits: (*batch, heads, memories)
        # matrix:            (*batch, memories, d_head, d_head)
        # normalizer:        (*batch, memories, d_head)
        *_, heads, memories = connective_logits.shape
        mem_m, d_head, d_head2 = matrix.shape[-3:]
        assert mem_m == memories and d_head2 == d_head
        assert normalizer.shape[-2:] == (memories, d_head)

        batch_shape = tuple(matrix.shape[:-3])
        B = 1
        for s in batch_shape:
            B *= s

        logits_flat = connective_logits.reshape(B, heads, memories)
        matrix_flat = matrix.reshape(B, memories, d_head * d_head)
        normalizer_flat = normalizer.reshape(B, memories, d_head)

        mat_out, norm_out = _memory_expression_flat(
            logits_flat, matrix_flat, normalizer_flat
        )

        # Row-major reshapes back to the module's output shapes (free).
        mat_out = mat_out.reshape(batch_shape + (heads, d_head, d_head))
        norm_out = norm_out.reshape(batch_shape + (heads, d_head))
        return mat_out, norm_out


if __name__ == "__main__":
    key = jax.random.PRNGKey(0)
    batch, seq, heads, memories, d_head = 2, 8, 4, 4, 16

    k1, k2, k3 = jax.random.split(key, 3)
    connective_logits = jax.random.normal(
        k1, (batch, seq, heads, memories), dtype=jnp.float32
    )
    matrix = jax.random.normal(
        k2, (batch, seq, memories, d_head, d_head), dtype=jnp.float32
    )
    normalizer = jax.random.normal(
        k3, (batch, seq, memories, d_head), dtype=jnp.float32
    )

    module = MemoryExpressionAttention()
    out_matrix, out_normalizer = module(connective_logits, matrix, normalizer)
    jax.block_until_ready((out_matrix, out_normalizer))

    assert out_matrix.shape == (batch, seq, heads, d_head, d_head)
    assert out_normalizer.shape == (batch, seq, heads, d_head)

    # Pure-JAX reference.
    probs = jax.nn.softmax(connective_logits, axis=-1)
    ref_matrix = jnp.einsum("bshm,bsmij->bshij", probs, matrix)
    ref_normalizer = jnp.einsum("bshm,bsmd->bshd", probs, normalizer)

    assert jnp.allclose(out_matrix, ref_matrix, atol=1e-5, rtol=1e-5)
    assert jnp.allclose(out_normalizer, ref_normalizer, atol=1e-5, rtol=1e-5)

    print("KERNEL_OK")
</pallas_src>

<mosaic_0001>
module attributes {stable_mosaic.version = 11 : i64} {
  func.func @_memory_expression_kernel(%arg0: i32, %arg1: memref<8x4x4xf32, #tpu.memory_space<vmem>>, %arg2: memref<8x4x256xf32, #tpu.memory_space<vmem>>, %arg3: memref<8x4x16xf32, #tpu.memory_space<vmem>>, %arg4: memref<8x1024xf32, #tpu.memory_space<vmem>>, %arg5: memref<8x64xf32, #tpu.memory_space<vmem>>) attributes {dimension_semantics = [#tpu.dimension_semantics<parallel>], iteration_bounds = array<i64: 2>, scalar_prefetch = 0 : i64, scratch_operands = 0 : i64, tpu.core_type = #tpu.core_type<tc>, window_params = [{transform_indices = @transform_0, window_bounds = array<i64: 8, 4, 4>}, {transform_indices = @transform_1, window_bounds = array<i64: 8, 4, 256>}, {transform_indices = @transform_2, window_bounds = array<i64: 8, 4, 16>}, {transform_indices = @transform_3, window_bounds = array<i64: 8, 1024>}, {transform_indices = @transform_4, window_bounds = array<i64: 8, 64>}]} {
    %c0 = arith.constant 0 : index
    %c0_0 = arith.constant 0 : index
    %c0_1 = arith.constant 0 : index
    %0 = vector.load %arg1[%c0, %c0_0, %c0_1] : memref<8x4x4xf32, #tpu.memory_space<vmem>>, vector<8x1x4xf32>
    %1 = vector.shape_cast %0 : vector<8x1x4xf32> to vector<8x4xf32>
    %cst = arith.constant dense<0xFF800000> : vector<8xf32>
    %2 = vector.multi_reduction <maximumf>, %1, %cst [1] : vector<8x4xf32> to vector<8xf32>
    %3 = vector.shape_cast %2 : vector<8xf32> to vector<8x1xf32>
    %4 = vector.broadcast %3 : vector<8x1xf32> to vector<8x4xf32>
    %5 = arith.subf %1, %4 : vector<8x4xf32>
    %6 = math.exp %5 : vector<8x4xf32>
    %cst_2 = arith.constant dense<0.000000e+00> : vector<8xf32>
    %7 = vector.multi_reduction <add>, %6, %cst_2 [1] : vector<8x4xf32> to vector<8xf32>
    %8 = vector.shape_cast %7 : vector<8xf32> to vector<8x1xf32>
    %9 = vector.broadcast %8 : vector<8x1xf32> to vector<8x4xf32>
    %10 = arith.divf %6, %9 : vector<8x4xf32>
    %11 = vector.extract_strided_slice %10 {offsets = [0, 0], sizes = [8, 1], strides = [1, 1]} : vector<8x4xf32> to vector<8x1xf32>
    %c0_3 = arith.constant 0 : index
    %c0_4 = arith.constant 0 : index
    %c0_5 = arith.constant 0 : index
    %12 = vector.load %arg2[%c0_3, %c0_4, %c0_5] : memref<8x4x256xf32, #tpu.memory_space<vmem>>, vector<8x1x256xf32>
    %13 = vector.shape_cast %12 : vector<8x1x256xf32> to vector<8x256xf32>
    %14 = vector.broadcast %11 : vector<8x1xf32> to vector<8x256xf32>
    %15 = arith.mulf %14, %13 : vector<8x256xf32>
    %c0_6 = arith.constant 0 : index
    %c0_7 = arith.constant 0 : index
    %c0_8 = arith.constant 0 : index
    %16 = vector.load %arg3[%c0_6, %c0_7, %c0_8] : memref<8x4x16xf32, #tpu.memory_space<vmem>>, vector<8x1x16xf32>
    %17 = vector.shape_cast %16 : vector<8x1x16xf32> to vector<8x16xf32>
    %18 = vector.broadcast %11 : vector<8x1xf32> to vector<8x16xf32>
    %19 = arith.mulf %18, %17 : vector<8x16xf32>
    %20 = vector.extract_strided_slice %10 {offsets = [0, 1], sizes = [8, 1], strides = [1, 1]} : vector<8x4xf32> to vector<8x1xf32>
    %c0_9 = arith.constant 0 : index
    %c1 = arith.constant 1 : index
    %c0_10 = arith.constant 0 : index
    %21 = vector.load %arg2[%c0_9, %c1, %c0_10] : memref<8x4x256xf32, #tpu.memory_space<vmem>>, vector<8x1x256xf32>
    %22 = vector.shape_cast %21 : vector<8x1x256xf32> to vector<8x256xf32>
    %23 = vector.broadcast %20 : vector<8x1xf32> to vector<8x256xf32>
    %24 = arith.mulf %23, %22 : vector<8x256xf32>
    %25 = arith.addf %15, %24 : vector<8x256xf32>
    %c0_11 = arith.constant 0 : index
    %c1_12 = arith.constant 1 : index
    %c0_13 = arith.constant 0 : index
    %26 = vector.load %arg3[%c0_11, %c1_12, %c0_13] : memref<8x4x16xf32, #tpu.memory_space<vmem>>, vector<8x1x16xf32>
    %27 = vector.shape_cast %26 : vector<8x1x16xf32> to vector<8x16xf32>
    %28 = vector.broadcast %20 : vector<8x1xf32> to vector<8x16xf32>
    %29 = arith.mulf %28, %27 : vector<8x16xf32>
    %30 = arith.addf %19, %29 : vector<8x16xf32>
    %31 = vector.extract_strided_slice %10 {offsets = [0, 2], sizes = [8, 1], strides = [1, 1]} : vector<8x4xf32> to vector<8x1xf32>
    %c0_14 = arith.constant 0 : index
    %c2 = arith.constant 2 : index
    %c0_15 = arith.constant 0 : index
    %32 = vector.load %arg2[%c0_14, %c2, %c0_15] : memref<8x4x256xf32, #tpu.memory_space<vmem>>, vector<8x1x256xf32>
    %33 = vector.shape_cast %32 : vector<8x1x256xf32> to vector<8x256xf32>
    %34 = vector.broadcast %31 : vector<8x1xf32> to vector<8x256xf32>
    %35 = arith.mulf %34, %33 : vector<8x256xf32>
    %36 = arith.addf %25, %35 : vector<8x256xf32>
    %c0_16 = arith.constant 0 : index
    %c2_17 = arith.constant 2 : index
    %c0_18 = arith.constant 0 : index
    %37 = vector.load %arg3[%c0_16, %c2_17, %c0_18] : memref<8x4x16xf32, #tpu.memory_space<vmem>>, vector<8x1x16xf32>
    %38 = vector.shape_cast %37 : vector<8x1x16xf32> to vector<8x16xf32>
    %39 = vector.broadcast %31 : vector<8x1xf32> to vector<8x16xf32>
    %40 = arith.mulf %39, %38 : vector<8x16xf32>
    %41 = arith.addf %30, %40 : vector<8x16xf32>
    %42 = vector.extract_strided_slice %10 {offsets = [0, 3], sizes = [8, 1], strides = [1, 1]} : vector<8x4xf32> to vector<8x1xf32>
    %c0_19 = arith.constant 0 : index
    %c3 = arith.constant 3 : index
    %c0_20 = arith.constant 0 : index
    %43 = vector.load %arg2[%c0_19, %c3, %c0_20] : memref<8x4x256xf32, #tpu.memory_space<vmem>>, vector<8x1x256xf32>
    %44 = vector.shape_cast %43 : vector<8x1x256xf32> to vector<8x256xf32>
    %45 = vector.broadcast %42 : vector<8x1xf32> to vector<8x256xf32>
    %46 = arith.mulf %45, %44 : vector<8x256xf32>
    %47 = arith.addf %36, %46 : vector<8x256xf32>
    %c0_21 = arith.constant 0 : index
    %c3_22 = arith.constant 3 : index
    %c0_23 = arith.constant 0 : index
    %48 = vector.load %arg3[%c0_21, %c3_22, %c0_23] : memref<8x4x16xf32, #tpu.memory_space<vmem>>, vector<8x1x16xf32>
    %49 = vector.shape_cast %48 : vector<8x1x16xf32> to vector<8x16xf32>
    %50 = vector.broadcast %42 : vector<8x1xf32> to vector<8x16xf32>
    %51 = arith.mulf %50, %49 : vector<8x16xf32>
    %52 = arith.addf %41, %51 : vector<8x16xf32>
    %c0_24 = arith.constant 0 : index
    %c0_25 = arith.constant 0 : index
    %53 = vector.load %arg4[%c0_24, %c0_25] : memref<8x1024xf32, #tpu.memory_space<vmem>>, vector<8x256xf32>
    tpu.vector_store %arg4[%c0_24, %c0_25], %47 {strides = array<i32>} : memref<8x1024xf32, #tpu.memory_space<vmem>>, vector<8x256xf32>,
    %c0_26 = arith.constant 0 : index
    %c1_27 = arith.constant 1 : index
    %c0_28 = arith.constant 0 : index
    %54 = vector.load %arg1[%c0_26, %c1_27, %c0_28] : memref<8x4x4xf32, #tpu.memory_space<vmem>>, vector<8x1x4xf32>
    %55 = vector.shape_cast %54 : vector<8x1x4xf32> to vector<8x4xf32>
    %cst_29 = arith.constant dense<0xFF800000> : vector<8xf32>
    %56 = vector.multi_reduction <maximumf>, %55, %cst_29 [1] : vector<8x4xf32> to vector<8xf32>
    %57 = vector.shape_cast %56 : vector<8xf32> to vector<8x1xf32>
    %58 = vector.broadcast %57 : vector<8x1xf32> to vector<8x4xf32>
    %59 = arith.subf %55, %58 : vector<8x4xf32>
    %60 = math.exp %59 : vector<8x4xf32>
    %cst_30 = arith.constant dense<0.000000e+00> : vector<8xf32>
    %61 = vector.multi_reduction <add>, %60, %cst_30 [1] : vector<8x4xf32> to vector<8xf32>
    %62 = vector.shape_cast %61 : vector<8xf32> to vector<8x1xf32>
    %63 = vector.broadcast %62 : vector<8x1xf32> to vector<8x4xf32>
    %64 = arith.divf %60, %63 : vector<8x4xf32>
    %65 = vector.extract_strided_slice %64 {offsets = [0, 0], sizes = [8, 1], strides = [1, 1]} : vector<8x4xf32> to vector<8x1xf32>
    %c0_31 = arith.constant 0 : index
    %c0_32 = arith.constant 0 : index
    %c0_33 = arith.constant 0 : index
    %66 = vector.load %arg2[%c0_31, %c0_32, %c0_33] : memref<8x4x256xf32, #tpu.memory_space<vmem>>, vector<8x1x256xf32>
    %67 = vector.shape_cast %66 : vector<8x1x256xf32> to vector<8x256xf32>
    %68 = vector.broadcast %65 : vector<8x1xf32> to vector<8x256xf32>
    %69 = arith.mulf %68, %67 : vector<8x256xf32>
    %c0_34 = arith.constant 0 : index
    %c0_35 = arith.constant 0 : index
    %c0_36 = arith.constant 0 : index
    %70 = vector.load %arg3[%c0_34, %c0_35, %c0_36] : memref<8x4x16xf32, #tpu.memory_space<vmem>>, vector<8x1x16xf32>
    %71 = vector.shape_cast %70 : vector<8x1x16xf32> to vector<8x16xf32>
    %72 = vector.broadcast %65 : vector<8x1xf32> to vector<8x16xf32>
    %73 = arith.mulf %72, %71 : vector<8x16xf32>
    %74 = vector.extract_strided_slice %64 {offsets = [0, 1], sizes = [8, 1], strides = [1, 1]} : vector<8x4xf32> to vector<8x1xf32>
    %c0_37 = arith.constant 0 : index
    %c1_38 = arith.constant 1 : index
    %c0_39 = arith.constant 0 : index
    %75 = vector.load %arg2[%c0_37, %c1_38, %c0_39] : memref<8x4x256xf32, #tpu.memory_space<vmem>>, vector<8x1x256xf32>
    %76 = vector.shape_cast %75 : vector<8x1x256xf32> to vector<8x256xf32>
    %77 = vector.broadcast %74 : vector<8x1xf32> to vector<8x256xf32>
    %78 = arith.mulf %77, %76 : vector<8x256xf32>
    %79 = arith.addf %69, %78 : vector<8x256xf32>
    %c0_40 = arith.constant 0 : index
    %c1_41 = arith.constant 1 : index
    %c0_42 = arith.constant 0 : index
    %80 = vector.load %arg3[%c0_40, %c1_41, %c0_42] : memref<8x4x16xf32, #tpu.memory_space<vmem>>, vector<8x1x16xf32>
    %81 = vector.shape_cast %80 : vector<8x1x16xf32> to vector<8x16xf32>
    %82 = vector.broadcast %74 : vector<8x1xf32> to vector<8x16xf32>
    %83 = arith.mulf %82, %81 : vector<8x16xf32>
    %84 = arith.addf %73, %83 : vector<8x16xf32>
    %85 = vector.extract_strided_slice %64 {offsets = [0, 2], sizes = [8, 1], strides = [1, 1]} : vector<8x4xf32> to vector<8x1xf32>
    %c0_43 = arith.constant 0 : index
    %c2_44 = arith.constant 2 : index
    %c0_45 = arith.constant 0 : index
    %86 = vector.load %arg2[%c0_43, %c2_44, %c0_45] : memref<8x4x256xf32, #tpu.memory_space<vmem>>, vector<8x1x256xf32>
    %87 = vector.shape_cast %86 : vector<8x1x256xf32> to vector<8x256xf32>
    %88 = vector.broadcast %85 : vector<8x1xf32> to vector<8x256xf32>
    %89 = arith.mulf %88, %87 : vector<8x256xf32>
    %90 = arith.addf %79, %89 : vector<8x256xf32>
    %c0_46 = arith.constant 0 : index
    %c2_47 = arith.constant 2 : index
    %c0_48 = arith.constant 0 : index
    %91 = vector.load %arg3[%c0_46, %c2_47, %c0_48] : memref<8x4x16xf32, #tpu.memory_space<vmem>>, vector<8x1x16xf32>
    %92 = vector.shape_cast %91 : vector<8x1x16xf32> to vector<8x16xf32>
    %93 = vector.broadcast %85 : vector<8x1xf32> to vector<8x16xf32>
    %94 = arith.mulf %93, %92 : vector<8x16xf32>
    %95 = arith.addf %84, %94 : vector<8x16xf32>
    %96 = vector.extract_strided_slice %64 {offsets = [0, 3], sizes = [8, 1], strides = [1, 1]} : vector<8x4xf32> to vector<8x1xf32>
    %c0_49 = arith.constant 0 : index
    %c3_50 = arith.constant 3 : index
    %c0_51 = arith.constant 0 : index
    %97 = vector.load %arg2[%c0_49, %c3_50, %c0_51] : memref<8x4x256xf32, #tpu.memory_space<vmem>>, vector<8x1x256xf32>
    %98 = vector.shape_cast %97 : vector<8x1x256xf32> to vector<8x256xf32>
    %99 = vector.broadcast %96 : vector<8x1xf32> to vector<8x256xf32>
    %100 = arith.mulf %99, %98 : vector<8x256xf32>
    %101 = arith.addf %90, %100 : vector<8x256xf32>
    %c0_52 = arith.constant 0 : index
    %c3_53 = arith.constant 3 : index
    %c0_54 = arith.constant 0 : index
    %102 = vector.load %arg3[%c0_52, %c3_53, %c0_54] : memref<8x4x16xf32, #tpu.memory_space<vmem>>, vector<8x1x16xf32>
    %103 = vector.shape_cast %102 : vector<8x1x16xf32> to vector<8x16xf32>
    %104 = vector.broadcast %96 : vector<8x1xf32> to vector<8x16xf32>
    %105 = arith.mulf %104, %103 : vector<8x16xf32>
    %106 = arith.addf %95, %105 : vector<8x16xf32>
    %c0_55 = arith.constant 0 : index
    %c256 = arith.constant 256 : index
    %107 = vector.load %arg4[%c0_55, %c256] : memref<8x1024xf32, #tpu.memory_space<vmem>>, vector<8x256xf32>
    tpu.vector_store %arg4[%c0_55, %c256], %101 {strides = array<i32>} : memref<8x1024xf32, #tpu.memory_space<vmem>>, vector<8x256xf32>,
    %c0_56 = arith.constant 0 : index
    %c2_57 = arith.constant 2 : index
    %c0_58 = arith.constant 0 : index
    %108 = vector.load %arg1[%c0_56, %c2_57, %c0_58] : memref<8x4x4xf32, #tpu.memory_space<vmem>>, vector<8x1x4xf32>
    %109 = vector.shape_cast %108 : vector<8x1x4xf32> to vector<8x4xf32>
    %cst_59 = arith.constant dense<0xFF800000> : vector<8xf32>
    %110 = vector.multi_reduction <maximumf>, %109, %cst_59 [1] : vector<8x4xf32> to vector<8xf32>
    %111 = vector.shape_cast %110 : vector<8xf32> to vector<8x1xf32>
    %112 = vector.broadcast %111 : vector<8x1xf32> to vector<8x4xf32>
    %113 = arith.subf %109, %112 : vector<8x4xf32>
    %114 = math.exp %113 : vector<8x4xf32>
    %cst_60 = arith.constant dense<0.000000e+00> : vector<8xf32>
    %115 = vector.multi_reduction <add>, %114, %cst_60 [1] : vector<8x4xf32> to vector<8xf32>
    %116 = vector.shape_cast %115 : vector<8xf32> to vector<8x1xf32>
    %117 = vector.broadcast %116 : vector<8x1xf32> to vector<8x4xf32>
    %118 = arith.divf %114, %117 : vector<8x4xf32>
    %119 = vector.extract_strided_slice %118 {offsets = [0, 0], sizes = [8, 1], strides = [1, 1]} : vector<8x4xf32> to vector<8x1xf32>
    %c0_61 = arith.constant 0 : index
    %c0_62 = arith.constant 0 : index
    %c0_63 = arith.constant 0 : index
    %120 = vector.load %arg2[%c0_61, %c0_62, %c0_63] : memref<8x4x256xf32, #tpu.memory_space<vmem>>, vector<8x1x256xf32>
    %121 = vector.shape_cast %120 : vector<8x1x256xf32> to vector<8x256xf32>
    %122 = vector.broadcast %119 : vector<8x1xf32> to vector<8x256xf32>
    %123 = arith.mulf %122, %121 : vector<8x256xf32>
    %c0_64 = arith.constant 0 : index
    %c0_65 = arith.constant 0 : index
    %c0_66 = arith.constant 0 : index
    %124 = vector.load %arg3[%c0_64, %c0_65, %c0_66] : memref<8x4x16xf32, #tpu.memory_space<vmem>>, vector<8x1x16xf32>
    %125 = vector.shape_cast %124 : vector<8x1x16xf32> to vector<8x16xf32>
    %126 = vector.broadcast %119 : vector<8x1xf32> to vector<8x16xf32>
    %127 = arith.mulf %126, %125 : vector<8x16xf32>
    %128 = vector.extract_strided_slice %118 {offsets = [0, 1], sizes = [8, 1], strides = [1, 1]} : vector<8x4xf32> to vector<8x1xf32>
    %c0_67 = arith.constant 0 : index
    %c1_68 = arith.constant 1 : index
    %c0_69 = arith.constant 0 : index
    %129 = vector.load %arg2[%c0_67, %c1_68, %c0_69] : memref<8x4x256xf32, #tpu.memory_space<vmem>>, vector<8x1x256xf32>
    %130 = vector.shape_cast %129 : vector<8x1x256xf32> to vector<8x256xf32>
    %131 = vector.broadcast %128 : vector<8x1xf32> to vector<8x256xf32>
    %132 = arith.mulf %131, %130 : vector<8x256xf32>
    %133 = arith.addf %123, %132 : vector<8x256xf32>
    %c0_70 = arith.constant 0 : index
    %c1_71 = arith.constant 1 : index
    %c0_72 = arith.constant 0 : index
    %134 = vector.load %arg3[%c0_70, %c1_71, %c0_72] : memref<8x4x16xf32, #tpu.memory_space<vmem>>, vector<8x1x16xf32>
    %135 = vector.shape_cast %134 : vector<8x1x16xf32> to vector<8x16xf32>
    %136 = vector.broadcast %128 : vector<8x1xf32> to vector<8x16xf32>
    %137 = arith.mulf %136, %135 : vector<8x16xf32>
    %138 = arith.addf %127, %137 : vector<8x16xf32>
    %139 = vector.extract_strided_slice %118 {offsets = [0, 2], sizes = [8, 1], strides = [1, 1]} : vector<8x4xf32> to vector<8x1xf32>
    %c0_73 = arith.constant 0 : index
    %c2_74 = arith.constant 2 : index
    %c0_75 = arith.constant 0 : index
    %140 = vector.load %arg2[%c0_73, %c2_74, %c0_75] : memref<8x4x256xf32, #tpu.memory_space<vmem>>, vector<8x1x256xf32>
    %141 = vector.shape_cast %140 : vector<8x1x256xf32> to vector<8x256xf32>
    %142 = vector.broadcast %139 : vector<8x1xf32> to vector<8x256xf32>
    %143 = arith.mulf %142, %141 : vector<8x256xf32>
    %144 = arith.addf %133, %143 : vector<8x256xf32>
    %c0_76 = arith.constant 0 : index
    %c2_77 = arith.constant 2 : index
    %c0_78 = arith.constant 0 : index
    %145 = vector.load %arg3[%c0_76, %c2_77, %c0_78] : memref<8x4x16xf32, #tpu.memory_space<vmem>>, vector<8x1x16xf32>
    %146 = vector.shape_cast %145 : vector<8x1x16xf32> to vector<8x16xf32>
    %147 = vector.broadcast %139 : vector<8x1xf32> to vector<8x16xf32>
    %148 = arith.mulf %147, %146 : vector<8x16xf32>
    %149 = arith.addf %138, %148 : vector<8x16xf32>
    %150 = vector.extract_strided_slice %118 {offsets = [0, 3], sizes = [8, 1], strides = [1, 1]} : vector<8x4xf32> to vector<8x1xf32>
    %c0_79 = arith.constant 0 : index
    %c3_80 = arith.constant 3 : index
    %c0_81 = arith.constant 0 : index
    %151 = vector.load %arg2[%c0_79, %c3_80, %c0_81] : memref<8x4x256xf32, #tpu.memory_space<vmem>>, vector<8x1x256xf32>
    %152 = vector.shape_cast %151 : vector<8x1x256xf32> to vector<8x256xf32>
    %153 = vector.broadcast %150 : vector<8x1xf32> to vector<8x256xf32>
    %154 = arith.mulf %153, %152 : vector<8x256xf32>
    %155 = arith.addf %144, %154 : vector<8x256xf32>
    %c0_82 = arith.constant 0 : index
    %c3_83 = arith.constant 3 : index
    %c0_84 = arith.constant 0 : index
    %156 = vector.load %arg3[%c0_82, %c3_83, %c0_84] : memref<8x4x16xf32, #tpu.memory_space<vmem>>, vector<8x1x16xf32>
    %157 = vector.shape_cast %156 : vector<8x1x16xf32> to vector<8x16xf32>
    %158 = vector.broadcast %150 : vector<8x1xf32> to vector<8x16xf32>
    %159 = arith.mulf %158, %157 : vector<8x16xf32>
    %160 = arith.addf %149, %159 : vector<8x16xf32>
    %c0_85 = arith.constant 0 : index
    %c512 = arith.constant 512 : index
    %161 = vector.load %arg4[%c0_85, %c512] : memref<8x1024xf32, #tpu.memory_space<vmem>>, vector<8x256xf32>
    tpu.vector_store %arg4[%c0_85, %c512], %155 {strides = array<i32>} : memref<8x1024xf32, #tpu.memory_space<vmem>>, vector<8x256xf32>,
    %c0_86 = arith.constant 0 : index
    %c3_87 = arith.constant 3 : index
    %c0_88 = arith.constant 0 : index
    %162 = vector.load %arg1[%c0_86, %c3_87, %c0_88] : memref<8x4x4xf32, #tpu.memory_space<vmem>>, vector<8x1x4xf32>
    %163 = vector.shape_cast %162 : vector<8x1x4xf32> to vector<8x4xf32>
    %cst_89 = arith.constant dense<0xFF800000> : vector<8xf32>
    %164 = vector.multi_reduction <maximumf>, %163, %cst_89 [1] : vector<8x4xf32> to vector<8xf32>
    %165 = vector.shape_cast %164 : vector<8xf32> to vector<8x1xf32>
    %166 = vector.broadcast %165 : vector<8x1xf32> to vector<8x4xf32>
    %167 = arith.subf %163, %166 : vector<8x4xf32>
    %168 = math.exp %167 : vector<8x4xf32>
    %cst_90 = arith.constant dense<0.000000e+00> : vector<8xf32>
    %169 = vector.multi_reduction <add>, %168, %cst_90 [1] : vector<8x4xf32> to vector<8xf32>
    %170 = vector.shape_cast %169 : vector<8xf32> to vector<8x1xf32>
    %171 = vector.broadcast %170 : vector<8x1xf32> to vector<8x4xf32>
    %172 = arith.divf %168, %171 : vector<8x4xf32>
    %173 = vector.extract_strided_slice %172 {offsets = [0, 0], sizes = [8, 1], strides = [1, 1]} : vector<8x4xf32> to vector<8x1xf32>
    %c0_91 = arith.constant 0 : index
    %c0_92 = arith.constant 0 : index
    %c0_93 = arith.constant 0 : index
    %174 = vector.load %arg2[%c0_91, %c0_92, %c0_93] : memref<8x4x256xf32, #tpu.memory_space<vmem>>, vector<8x1x256xf32>
    %175 = vector.shape_cast %174 : vector<8x1x256xf32> to vector<8x256xf32>
    %176 = vector.broadcast %173 : vector<8x1xf32> to vector<8x256xf32>
    %177 = arith.mulf %176, %175 : vector<8x256xf32>
    %c0_94 = arith.constant 0 : index
    %c0_95 = arith.constant 0 : index
    %c0_96 = arith.constant 0 : index
    %178 = vector.load %arg3[%c0_94, %c0_95, %c0_96] : memref<8x4x16xf32, #tpu.memory_space<vmem>>, vector<8x1x16xf32>
    %179 = vector.shape_cast %178 : vector<8x1x16xf32> to vector<8x16xf32>
    %180 = vector.broadcast %173 : vector<8x1xf32> to vector<8x16xf32>
    %181 = arith.mulf %180, %179 : vector<8x16xf32>
    %182 = vector.extract_strided_slice %172 {offsets = [0, 1], sizes = [8, 1], strides = [1, 1]} : vector<8x4xf32> to vector<8x1xf32>
    %c0_97 = arith.constant 0 : index
    %c1_98 = arith.constant 1 : index
    %c0_99 = arith.constant 0 : index
    %183 = vector.load %arg2[%c0_97, %c1_98, %c0_99] : memref<8x4x256xf32, #tpu.memory_space<vmem>>, vector<8x1x256xf32>
    %184 = vector.shape_cast %183 : vector<8x1x256xf32> to vector<8x256xf32>
    %185 = vector.broadcast %182 : vector<8x1xf32> to vector<8x256xf32>
    %186 = arith.mulf %185, %184 : vector<8x256xf32>
    %187 = arith.addf %177, %186 : vector<8x256xf32>
    %c0_100 = arith.constant 0 : index
    %c1_101 = arith.constant 1 : index
    %c0_102 = arith.constant 0 : index
    %188 = vector.load %arg3[%c0_100, %c1_101, %c0_102] : memref<8x4x16xf32, #tpu.memory_space<vmem>>, vector<8x1x16xf32>
    %189 = vector.shape_cast %188 : vector<8x1x16xf32> to vector<8x16xf32>
    %190 = vector.broadcast %182 : vector<8x1xf32> to vector<8x16xf32>
    %191 = arith.mulf %190, %189 : vector<8x16xf32>
    %192 = arith.addf %181, %191 : vector<8x16xf32>
    %193 = vector.extract_strided_slice %172 {offsets = [0, 2], sizes = [8, 1], strides = [1, 1]} : vector<8x4xf32> to vector<8x1xf32>
    %c0_103 = arith.constant 0 : index
    %c2_104 = arith.constant 2 : index
    %c0_105 = arith.constant 0 : index
    %194 = vector.load %arg2[%c0_103, %c2_104, %c0_105] : memref<8x4x256xf32, #tpu.memory_space<vmem>>, vector<8x1x256xf32>
    %195 = vector.shape_cast %194 : vector<8x1x256xf32> to vector<8x256xf32>
    %196 = vector.broadcast %193 : vector<8x1xf32> to vector<8x256xf32>
    %197 = arith.mulf %196, %195 : vector<8x256xf32>
    %198 = arith.addf %187, %197 : vector<8x256xf32>
    %c0_106 = arith.constant 0 : index
    %c2_107 = arith.constant 2 : index
    %c0_108 = arith.constant 0 : index
    %199 = vector.load %arg3[%c0_106, %c2_107, %c0_108] : memref<8x4x16xf32, #tpu.memory_space<vmem>>, vector<8x1x16xf32>
    %200 = vector.shape_cast %199 : vector<8x1x16xf32> to vector<8x16xf32>
    %201 = vector.broadcast %193 : vector<8x1xf32> to vector<8x16xf32>
    %202 = arith.mulf %201, %200 : vector<8x16xf32>
    %203 = arith.addf %192, %202 : vector<8x16xf32>
    %204 = vector.extract_strided_slice %172 {offsets = [0, 3], sizes = [8, 1], strides = [1, 1]} : vector<8x4xf32> to vector<8x1xf32>
    %c0_109 = arith.constant 0 : index
    %c3_110 = arith.constant 3 : index
    %c0_111 = arith.constant 0 : index
    %205 = vector.load %arg2[%c0_109, %c3_110, %c0_111] : memref<8x4x256xf32, #tpu.memory_space<vmem>>, vector<8x1x256xf32>
    %206 = vector.shape_cast %205 : vector<8x1x256xf32> to vector<8x256xf32>
    %207 = vector.broadcast %204 : vector<8x1xf32> to vector<8x256xf32>
    %208 = arith.mulf %207, %206 : vector<8x256xf32>
    %209 = arith.addf %198, %208 : vector<8x256xf32>
    %c0_112 = arith.constant 0 : index
    %c3_113 = arith.constant 3 : index
    %c0_114 = arith.constant 0 : index
    %210 = vector.load %arg3[%c0_112, %c3_113, %c0_114] : memref<8x4x16xf32, #tpu.memory_space<vmem>>, vector<8x1x16xf32>
    %211 = vector.shape_cast %210 : vector<8x1x16xf32> to vector<8x16xf32>
    %212 = vector.broadcast %204 : vector<8x1xf32> to vector<8x16xf32>
    %213 = arith.mulf %212, %211 : vector<8x16xf32>
    %214 = arith.addf %203, %213 : vector<8x16xf32>
    %c0_115 = arith.constant 0 : index
    %c768 = arith.constant 768 : index
    %215 = vector.load %arg4[%c0_115, %c768] : memref<8x1024xf32, #tpu.memory_space<vmem>>, vector<8x256xf32>
    tpu.vector_store %arg4[%c0_115, %c768], %209 {strides = array<i32>} : memref<8x1024xf32, #tpu.memory_space<vmem>>, vector<8x256xf32>,
    %216 = tpu.concatenate %52, %106, %160, %214 in 1 : vector<8x16xf32>, vector<8x16xf32>, vector<8x16xf32>, vector<8x16xf32> -> vector<8x64xf32>
    %c0_116 = arith.constant 0 : index
    %c0_117 = arith.constant 0 : index
    %217 = vector.load %arg5[%c0_116, %c0_117] : memref<8x64xf32, #tpu.memory_space<vmem>>, vector<8x64xf32>
    tpu.vector_store %arg5[%c0_116, %c0_117], %216 {strides = array<i32>} : memref<8x64xf32, #tpu.memory_space<vmem>>, vector<8x64xf32>,
    return
  }
  func.func @transform_0(%arg0: i32) -> (i32, i32, i32) {
    %c0_i32 = arith.constant 0 : i32
    %c0_i32_0 = arith.constant 0 : i32
    %c0_i32_1 = arith.constant 0 : i32
    return %arg0, %c0_i32, %c0_i32_0 : i32, i32, i32
  }
  func.func @transform_1(%arg0: i32) -> (i32, i32, i32) {
    %c0_i32 = arith.constant 0 : i32
    %c0_i32_0 = arith.constant 0 : i32
    %c0_i32_1 = arith.constant 0 : i32
    return %arg0, %c0_i32, %c0_i32_0 : i32, i32, i32
  }
  func.func @transform_2(%arg0: i32) -> (i32, i32, i32) {
    %c0_i32 = arith.constant 0 : i32
    %c0_i32_0 = arith.constant 0 : i32
    %c0_i32_1 = arith.constant 0 : i32
    return %arg0, %c0_i32, %c0_i32_0 : i32, i32, i32
  }
  func.func @transform_3(%arg0: i32) -> (i32, i32) {
    %c0_i32 = arith.constant 0 : i32
    %c0_i32_0 = arith.constant 0 : i32
    return %arg0, %c0_i32 : i32, i32
  }
  func.func @transform_4(%arg0: i32) -> (i32, i32) {
    %c0_i32 = arith.constant 0 : i32
    %c0_i32_0 = arith.constant 0 : i32
    return %arg0, %c0_i32 : i32, i32
  }
}

</mosaic_0001>

<llo_original>
// kernel: _memory_expression_flat.1
$region0: #{_memory_expression_flat.1}
  #allocation0 [shape = 'u32[]', space=smem, size = 0x4, offset = 0x4, fixed_abs, tag = 'smem constant byte address 0x4 - core index']
  #allocation1 [shape = 'u32[144,128]{1,0:T(1,128)}', space=vmem, size = 0x12000, scoped, tag = 'internal scratch']
  %s0 = inlined_call_operand.vmem [shape: f32[16,4,4], index: 0, kind: input, shape index: {}]
  %s1 = inlined_call_operand.hbm [shape: f32[16,4,256], index: 1, kind: input, shape index: {}]
  %s2 = inlined_call_operand.vmem [shape: f32[16,4,16], index: 2, kind: input, shape index: {}]
  %s3 = inlined_call_operand.hbm [shape: f32[16,1024], index: 3, kind: output, shape index: {0}]
  %s4 = inlined_call_operand.hbm [shape: f32[16,64], index: 4, kind: output, shape index: {1}]
  %5 = xla_tuple %s3, %s4
  %s6 = sld [smem:[#allocation0]]
  $region57: #{_memory_expression_flat.1} parent=0
    _
  %s8 = ssub.s32 1, %s6
  %s9 = scalar_select 0, %s8, %s6
  $region1: #{_memory_expression_flat.1} parent=0
    #allocation2 [shape = 'u8[65536]{0}', space=vmem, size = 0x10000, scoped, tag = 'input window, operand 1']
    #allocation3 [shape = 's32[2]{0}', space=sflag, size = 0x8, scoped, tag = 'scoped memory for _memory_expression_flat.1']
    #allocation4 [shape = 's32[2]{0}', space=sflag, size = 0x8, scoped, tag = 'scoped memory for _memory_expression_flat.1']
    #allocation5 [shape = 'u8[65536]{0}', space=vmem, size = 0x10000, scoped, tag = 'output window, operand 0']
    #allocation6 [shape = 'u8[8192]{0}', space=vmem, size = 0x2000, scoped, tag = 'output window, operand 1']
    #allocation7 [shape = 's32[2]{0}', space=sflag, size = 0x8, scoped, tag = 'scoped memory for _memory_expression_flat.1']
    %10 = vsyncpa [#allocation3], 0
    %s11 = scalar_lea.sflag [#allocation3], 1
    %12 = vsyncpa %s11, 0
    %13 = vsyncpa [#allocation4], 0
    %s14 = scalar_lea.sflag [#allocation4], 1
    %15 = vsyncpa %s14, 0
    %16 = vsyncpa [#allocation7], 0
    %s17 = scalar_lea.sflag [#allocation7], 1
    %18 = vsyncpa %s17, 0
    loop: start=0, step=1, limit=4
    $region2: #{_memory_expression_flat.1} parent=1 // loop_pre_header
      _
    $region3: #{_memory_expression_flat.1} parent=1 // loop_header
      %s20 = sphi 0, %s24
      %p21 = scmp.ge.s32.totalorder %s20, 4
      %s30 = sphi 0, %s32
      %s33 = sphi 0, %s30
      %s34 = sphi 0, %s33
      %s50 = sphi 0, %s34
      %s56 = sphi 0, %s58
      %s59 = sphi 0, %s56
      %s60 = sphi 0, %s59
      %s76 = sphi 0, %s60
      %s82 = sphi 0, %s84
      %s85 = sphi 0, %s82
      %s86 = sphi 0, %s85
      %s102 = sphi 0, %s86
      %s108 = sphi 0, %s110
      %s111 = sphi 0, %s108
      %s112 = sphi 0, %s111
      %s128 = sphi 0, %s112
      %s134 = sphi 0, %s136
      %s137 = sphi 0, %s134
      %s138 = sphi 0, %s137
      %s154 = sphi 0, %s138
    $region4: #{_memory_expression_flat.1} parent=1 // loop_header_branch
      %23 = sbr.rel (%p21) target = $region8
    $region5: #{_memory_expression_flat.1} parent=1 // loop_body
      %s25 = ssub.s32 %s20, 1
      %s26 = ssub.s32 %s20, 2
      %s27 = sadd.s32 %s20, 1
      %s28 = ssub.s32 %s20, %s27
      %p29 = scmp.eq.s32.totalorder %s28, 0
      %s31 = sadd.s32 %s30, 1
      %s32 = scalar_select %p29, %s30, %s31
      %p35 = pneg %p29
      %p36 = scmp.eq.s32.totalorder %s20, 1
      %p37 = por %p35, %p36
      %p38 = scmp.ne.s32.totalorder %s30, %s33
      %p39 = scmp.eq.s32.totalorder %s20, 0
      %p40 = por %p38, %p39
      %p41 = scmp.ne.s32.totalorder %s30, %s33
      %p42 = scmp.eq.s32.totalorder %s25, 1
      %p43 = por %p41, %p42
      %p44 = scmp.ne.s32.totalorder %s33, %s34
      %p45 = scmp.eq.s32.totalorder %s25, 0
      %p46 = por %p44, %p45
      %p47 = scmp.ne.s32.totalorder %s33, %s34
      %p48 = scmp.eq.s32.totalorder %s26, 1
      %p49 = por %p47, %p48
      %p51 = scmp.ne.s32.totalorder %s34, %s50
      %p52 = scmp.eq.s32.totalorder %s26, 0
      %p53 = por %p51, %p52
      %s54 = ssub.s32 %s20, %s27
      %p55 = scmp.eq.s32.totalorder %s54, 0
      %s57 = sadd.s32 %s56, 1
      %s58 = scalar_select %p55, %s56, %s57
      %p61 = pneg %p55
      %p62 = scmp.eq.s32.totalorder %s20, 1
      %p63 = por %p61, %p62
      %p64 = scmp.ne.s32.totalorder %s56, %s59
      %p65 = scmp.eq.s32.totalorder %s20, 0
      %p66 = por %p64, %p65
      %p67 = scmp.ne.s32.totalorder %s56, %s59
      %p68 = scmp.eq.s32.totalorder %s25, 1
      %p69 = por %p67, %p68
      %p70 = scmp.ne.s32.totalorder %s59, %s60
      %p71 = scmp.eq.s32.totalorder %s25, 0
      %p72 = por %p70, %p71
      %p73 = scmp.ne.s32.totalorder %s59, %s60
      %p74 = scmp.eq.s32.totalorder %s26, 1
      %p75 = por %p73, %p74
      %p77 = scmp.ne.s32.totalorder %s60, %s76
      %p78 = scmp.eq.s32.totalorder %s26, 0
      %p79 = por %p77, %p78
      %s80 = ssub.s32 %s20, %s27
      %p81 = scmp.eq.s32.totalorder %s80, 0
      %s83 = sadd.s32 %s82, 1
      %s84 = scalar_select %p81, %s82, %s83
      %p87 = pneg %p81
      %p88 = scmp.eq.s32.totalorder %s20, 1
      %p89 = por %p87, %p88
      %p90 = scmp.ne.s32.totalorder %s82, %s85
      %p91 = scmp.eq.s32.totalorder %s20, 0
      %p92 = por %p90, %p91
      %p93 = scmp.ne.s32.totalorder %s82, %s85
      %p94 = scmp.eq.s32.totalorder %s25, 1
      %p95 = por %p93, %p94
      %p96 = scmp.ne.s32.totalorder %s85, %s86
      %p97 = scmp.eq.s32.totalorder %s25, 0
      %p98 = por %p96, %p97
      %p99 = scmp.ne.s32.totalorder %s85, %s86
      %p100 = scmp.eq.s32.totalorder %s26, 1
      %p101 = por %p99, %p100
      %p103 = scmp.ne.s32.totalorder %s86, %s102
      %p104 = scmp.eq.s32.totalorder %s26, 0
      %p105 = por %p103, %p104
      %s106 = ssub.s32 %s20, %s27
      %p107 = scmp.eq.s32.totalorder %s106, 0
      %s109 = sadd.s32 %s108, 1
      %s110 = scalar_select %p107, %s108, %s109
      %p113 = pneg %p107
      %p114 = scmp.eq.s32.totalorder %s20, 1
      %p115 = por %p113, %p114
      %p116 = scmp.ne.s32.totalorder %s108, %s111
      %p117 = scmp.eq.s32.totalorder %s20, 0
      %p118 = por %p116, %p117
      %p119 = scmp.ne.s32.totalorder %s108, %s111
      %p120 = scmp.eq.s32.totalorder %s25, 1
      %p121 = por %p119, %p120
      %p122 = scmp.ne.s32.totalorder %s111, %s112
      %p123 = scmp.eq.s32.totalorder %s25, 0
      %p124 = por %p122, %p123
      %p125 = scmp.ne.s32.totalorder %s111, %s112
      %p126 = scmp.eq.s32.totalorder %s26, 1
      %p127 = por %p125, %p126
      %p129 = scmp.ne.s32.totalorder %s112, %s128
      %p130 = scmp.eq.s32.totalorder %s26, 0
      %p131 = por %p129, %p130
      %s132 = ssub.s32 %s20, %s27
      %p133 = scmp.eq.s32.totalorder %s132, 0
      %s135 = sadd.s32 %s134, 1
      %s136 = scalar_select %p133, %s134, %s135
      %p139 = pneg %p133
      %p140 = scmp.eq.s32.totalorder %s20, 1
      %p141 = por %p139, %p140
      %p142 = scmp.ne.s32.totalorder %s134, %s137
      %p143 = scmp.eq.s32.totalorder %s20, 0
      %p144 = por %p142, %p143
      %p145 = scmp.ne.s32.totalorder %s134, %s137
      %p146 = scmp.eq.s32.totalorder %s25, 1
      %p147 = por %p145, %p146
      %p148 = scmp.ne.s32.totalorder %s137, %s138
      %p149 = scmp.eq.s32.totalorder %s25, 0
      %p150 = por %p148, %p149
      %p151 = scmp.ne.s32.totalorder %s137, %s138
      %p152 = scmp.eq.s32.totalorder %s26, 1
      %p153 = por %p151, %p152
      %p155 = scmp.ne.s32.totalorder %s138, %s154
      %p156 = scmp.eq.s32.totalorder %s26, 0
      %p157 = por %p155, %p156
      %p158 = scmp.le.s32.totalorder 1, %s20
      %p159 = scmp.lt.s32.totalorder %s20, 3
      %p160 = pnand %p158, %p159
      %p161 = pneg %p160
      // Predicated region
      $region9: #{_memory_expression_flat.1} parent=5 // pred_check
        _
      $region10: #{_memory_expression_flat.1} parent=5 // pred_check_branch
        %163 = sbr.rel (%p160) target = $region12
      $region11: #{_memory_expression_flat.1} parent=5 // pred_region
        %s164 = ssub.s32 %s20, 1
      $region12: #{_memory_expression_flat.1} parent=5 // pred_fallthru
        _
      %p165 = scmp.lt.s32.totalorder %s20, 2
      // Predicated region
      $region13: #{_memory_expression_flat.1} parent=5 // pred_check
        %p166 = pneg %p165
      $region14: #{_memory_expression_flat.1} parent=5 // pred_check_branch
        %168 = sbr.rel (%p166) target = $region16
      $region15: #{_memory_expression_flat.1} parent=5 // pred_region
        // Predicated region
        $region17: #{_memory_expression_flat.1} parent=15 // pred_check
          %p169 = pneg %p40
        $region18: #{_memory_expression_flat.1} parent=15 // pred_check_branch
          %171 = sbr.rel (%p169) target = $region20
        $region19: #{_memory_expression_flat.1} parent=15 // pred_region
          %s172 = smul.u32 8, %s20
          %p173 = scmp.lt.s32.totalorder %s172, 15
          %s174 = scalar_select %p173, %s172, 15
          %s175 = smul.addr %s174, 4
          %s176 = scalar_lea.vmem %s0, %s175
          %s177 = smul.u32 8, %s20
        $region20: #{_memory_expression_flat.1} parent=15 // pred_fallthru
          _
        // Predicated region
        $region21: #{_memory_expression_flat.1} parent=15 // pred_check
          %p178 = pneg %p66
        $region22: #{_memory_expression_flat.1} parent=15 // pred_check_branch
          %180 = sbr.rel (%p178) target = $region24
        $region23: #{_memory_expression_flat.1} parent=15 // pred_region
          %s181 = sand.u32 %s56, 1
          %s182 = scalar_lea.sflag [#allocation3], %s181
          %s183 = sand.u32 %s56, 1
          %s184 = smul.addr %s183, 64
          %s185 = scalar_lea.vmem [#allocation2], %s184
          %s186 = smul.u32 8, %s20
          %s188 = ssub.s32 1024, 1024
          %189 = vsyncadd %s182, %s188
          %s190 = smul.addr %s186, 2
          %s191 = smul.addr %s190, 64
          %s192 = scalar_lea.hbm %s1, %s191
          %s193 = sshll.u32 %s185, 4
          %s194 = int_to_ptr.vmem [resolvable:$true] %s193
          %199 = dma.hbm_to_vmem [thread:$0]  %s192, 1024, %s194, %s182, 128, 128, 8
        $region24: #{_memory_expression_flat.1} parent=15 // pred_fallthru
          _
        // Predicated region
        $region25: #{_memory_expression_flat.1} parent=15 // pred_check
          %p200 = pneg %p92
        $region26: #{_memory_expression_flat.1} parent=15 // pred_check_branch
          %202 = sbr.rel (%p200) target = $region28
        $region27: #{_memory_expression_flat.1} parent=15 // pred_region
          %s203 = smul.u32 8, %s20
          %p204 = scmp.lt.s32.totalorder %s203, 15
          %s205 = scalar_select %p204, %s203, 15
          %s206 = smul.addr %s205, 4
          %s207 = scalar_lea.vmem %s2, %s206
          %s208 = smul.u32 8, %s20
        $region28: #{_memory_expression_flat.1} parent=15 // pred_fallthru
          _
      $region16: #{_memory_expression_flat.1} parent=5 // pred_fallthru
        _
      %p209 = scmp.le.s32.totalorder 1, %s20
      %p210 = scmp.lt.s32.totalorder %s20, 3
      %p211 = pnand %p209, %p210
      %p212 = pneg %p211
      // Predicated region
      $region29: #{_memory_expression_flat.1} parent=5 // pred_check
        _
      $region30: #{_memory_expression_flat.1} parent=5 // pred_check_branch
        %214 = sbr.rel (%p211) target = $region32
      $region31: #{_memory_expression_flat.1} parent=5 // pred_region
        %s215 = ssub.s32 %s20, 1
        %s216 = sand.u32 %s59, 1
        %s217 = scalar_lea.sflag [#allocation3], %s216
        %s218 = sand.u32 %s59, 1
        %s219 = smul.addr %s218, 64
        %s220 = scalar_lea.vmem [#allocation2], %s219
        // Predicated region
        $region33: #{_memory_expression_flat.1} parent=31 // pred_check
          %p221 = pneg %p72
        $region34: #{_memory_expression_flat.1} parent=31 // pred_check_branch
          %223 = sbr.rel (%p221) target = $region36
        $region35: #{_memory_expression_flat.1} parent=31 // pred_region
          %224 = dma.done %s217, 1024
        $region36: #{_memory_expression_flat.1} parent=31 // pred_fallthru
          _
        %s225 = smul.u32 8, %s25
        %p226 = scmp.lt.s32.totalorder %s225, 15
        %s227 = scalar_select %p226, %s225, 15
        %s228 = smul.addr %s227, 4
        %s229 = scalar_lea.vmem %s0, %s228
        %p230 = pneg %p46
        %p231 = pneg %p43
        %s232 = sand.u32 %s59, 1
        %s233 = scalar_lea.sflag [#allocation3], %s232
        %s234 = sand.u32 %s59, 1
        %s235 = smul.addr %s234, 64
        %s236 = scalar_lea.vmem [#allocation2], %s235
        %p237 = pneg %p72
        %p238 = pneg %p69
        %s239 = smul.u32 8, %s25
        %p240 = scmp.lt.s32.totalorder %s239, 15
        %s241 = scalar_select %p240, %s239, 15
        %s242 = smul.addr %s241, 4
        %s243 = scalar_lea.vmem %s2, %s242
        %p244 = pneg %p98
        %p245 = pneg %p95
        %p246 = pneg %p124
        %p247 = pneg %p121
        %s248 = sand.u32 %s111, 1
        %s249 = scalar_lea.sflag [#allocation4], %s248
        %s250 = sand.u32 %s111, 1
        %s251 = smul.addr %s250, 64
        %s252 = scalar_lea.vmem [#allocation5], %s251
        %p253 = pneg %p150
        %p254 = pneg %p147
        %s255 = sand.u32 %s137, 1
        %s256 = scalar_lea.sflag [#allocation7], %s255
        %s257 = sand.u32 %s137, 1
        %s258 = smul.addr %s257, 8
        %s259 = scalar_lea.vmem [#allocation6], %s258
        %s260 = smul.u32 8, %s25
        %p261 = scmp.lt.s32.totalorder %s260, 15
        %s262 = scalar_select %p261, %s260, 15
        %s263 = smul.addr %s262, 4
        %s264 = scalar_lea.vmem %s0, %s263
        %s265 = smul.u32 8, %s25
        %s266 = smul.u32 8, %s25
        %s267 = smul.u32 8, %s25
        %p268 = scmp.lt.s32.totalorder %s267, 15
        %s269 = scalar_select %p268, %s267, 15
        %s270 = smul.addr %s269, 4
        %s271 = scalar_lea.vmem %s2, %s270
        %s272 = smul.u32 8, %s25
        %v273 = vld [vmem:[%s264] sm:$0x1]
        %v274 = vld [vmem:[%s264 + $0x4] sm:$0x1]
        %v275 = vld [vmem:[%s264 + $0x8] sm:$0x1]
        %v276 = vld [vmem:[%s264 + $0xc] sm:$0x1]
        %v277 = vld [vmem:[%s264 + $0x10] sm:$0x1]
        %v278 = vld [vmem:[%s264 + $0x14] sm:$0x1]
        %v279 = vld [vmem:[%s264 + $0x18] sm:$0x1]
        %v280 = vld [vmem:[%s264 + $0x1c] sm:$0x1]
        %v289 = vrot.slane %v274, 7
        %vm290 = vcmask 1041409
        %v291 = vsel %vm290, %v289, %v273
        %v292 = vrot.slane %v275, 6
        %vm293 = vcmask 1042434
        %v294 = vsel %vm293, %v292, %v291
        %v295 = vrot.slane %v276, 5
        %vm296 = vcmask 1043459
        %v297 = vsel %vm296, %v295, %v294
        %v298 = vrot.slane %v277, 4
        %vm299 = vcmask 1044484
        %v300 = vsel %vm299, %v298, %v297
        %v301 = vrot.slane %v278, 3
        %vm302 = vcmask 1045509
        %v303 = vsel %vm302, %v301, %v300
        %v304 = vrot.slane %v279, 2
        %vm305 = vcmask 1046534
        %v306 = vsel %vm305, %v304, %v303
        %v307 = vrot.slane %v280, 1
        %vm308 = vcmask 1047559
        %v309 = vsel %vm308, %v307, %v306
        %vm311 = vcmask 31744
        %v312 = vsel %vm311, %v309, -inf
        %313 = vmax.xlane.f32.xlu0 %v312
        %v314 = vpop.xlane.xlu0 %313
        %v316 = vrot.slane %v314, 1
        %v317 = vrot.slane %v314, 2
        %v318 = vrot.slane %v314, 3
        %v319 = vrot.slane %v314, 4
        %v320 = vrot.slane %v314, 5
        %v321 = vrot.slane %v314, 6
        %v322 = vrot.slane %v314, 7
        %v331 = vsub.f32 %v273, %v314
        %v332 = vsub.f32 %v274, %v316
        %v333 = vsub.f32 %v275, %v317
        %v334 = vsub.f32 %v276, %v318
        %v335 = vsub.f32 %v277, %v319
        %v336 = vsub.f32 %v278, %v320
        %v337 = vsub.f32 %v279, %v321
        %v338 = vsub.f32 %v280, %v322
        %v339 = vmul.f32 %v331, 1.442695
        %v340 = vpow.pop %v339
        %v341 = vmul.f32 %v332, 1.442695
        %v342 = vpow.pop %v341
        %v343 = vmul.f32 %v333, 1.442695
        %v344 = vpow.pop %v343
        %v345 = vmul.f32 %v334, 1.442695
        %v346 = vpow.pop %v345
        %v347 = vmul.f32 %v335, 1.442695
        %v348 = vpow.pop %v347
        %v349 = vmul.f32 %v336, 1.442695
        %v350 = vpow.pop %v349
        %v351 = vmul.f32 %v337, 1.442695
        %v352 = vpow.pop %v351
        %v353 = vmul.f32 %v338, 1.442695
        %v354 = vpow.pop %v353
        %v363 = vrot.slane %v342, 7
        %v364 = vsel %vm290, %v363, %v340
        %v365 = vrot.slane %v344, 6
        %v366 = vsel %vm293, %v365, %v364
        %v367 = vrot.slane %v346, 5
        %v368 = vsel %vm296, %v367, %v366
        %v369 = vrot.slane %v348, 4
        %v370 = vsel %vm299, %v369, %v368
        %v371 = vrot.slane %v350, 3
        %v372 = vsel %vm302, %v371, %v370
        %v373 = vrot.slane %v352, 2
        %v374 = vsel %vm305, %v373, %v372
        %v375 = vrot.slane %v354, 1
        %v376 = vsel %vm308, %v375, %v374
        %v378 = vsel %vm311, %v376, 0.0
        %379 = vadd.xlane.f32.xlu0 %v378
        %v380 = vpop.xlane.xlu0 %379
        %v382 = vrot.slane %v380, 1
        %v383 = vrot.slane %v380, 2
        %v384 = vrot.slane %v380, 3
        %v385 = vrot.slane %v380, 4
        %v386 = vrot.slane %v380, 5
        %v387 = vrot.slane %v380, 6
        %v388 = vrot.slane %v380, 7
        %v397 = vrcp.pop %v380
        %v398 = vmul.f32 %v340, %v397
        %v399 = vrcp.pop %v382
        %v400 = vmul.f32 %v342, %v399
        %v401 = vrcp.pop %v383
        %v402 = vmul.f32 %v344, %v401
        %v403 = vrcp.pop %v384
        %v404 = vmul.f32 %v346, %v403
        %v405 = vrcp.pop %v385
        %v406 = vmul.f32 %v348, %v405
        %v407 = vrcp.pop %v386
        %v408 = vmul.f32 %v350, %v407
        %v409 = vrcp.pop %v387
        %v410 = vmul.f32 %v352, %v409
        %v411 = vrcp.pop %v388
        %v412 = vmul.f32 %v354, %v411
        %v413 = vld [vmem:[%s220] ss:$4 sm:$0x3]
        %s414 = scalar_lea.vmem %s220, 8 [#allocation2]
        %v415 = vld [vmem:[%s414] ss:$4 sm:$0x3]
        %s416 = scalar_lea.vmem %s220, 16 [#allocation2]
        %v417 = vld [vmem:[%s416] ss:$4 sm:$0x3]
        %s418 = scalar_lea.vmem %s220, 24 [#allocation2]
        %v419 = vld [vmem:[%s418] ss:$4 sm:$0x3]
        %s420 = scalar_lea.vmem %s220, 32 [#allocation2]
        %v421 = vld [vmem:[%s420] ss:$4 sm:$0x3]
        %s422 = scalar_lea.vmem %s220, 40 [#allocation2]
        %v423 = vld [vmem:[%s422] ss:$4 sm:$0x3]
        %s424 = scalar_lea.vmem %s220, 48 [#allocation2]
        %v425 = vld [vmem:[%s424] ss:$4 sm:$0x3]
        %s426 = scalar_lea.vmem %s220, 56 [#allocation2]
        %v427 = vld [vmem:[%s426] ss:$4 sm:$0x3]
        %429 = vset.pattern.permute.xlu0 0
        %430 = vperm.xlu0 %429, %v398
        %v431 = vpop.permute.xlu0 %430
        %434 = vset.pattern.permute.xlu0 0
        %435 = vperm.xlu0 %434, %v400
        %v436 = vpop.permute.xlu0 %435
        %439 = vset.pattern.permute.xlu0 0
        %440 = vperm.xlu0 %439, %v402
        %v441 = vpop.permute.xlu0 %440
        %444 = vset.pattern.permute.xlu0 0
        %445 = vperm.xlu0 %444, %v404
        %v446 = vpop.permute.xlu0 %445
        %449 = vset.pattern.permute.xlu0 0
        %450 = vperm.xlu0 %449, %v406
        %v451 = vpop.permute.xlu0 %450
        %454 = vset.pattern.permute.xlu0 0
        %455 = vperm.xlu0 %454, %v408
        %v456 = vpop.permute.xlu0 %455
        %459 = vset.pattern.permute.xlu0 0
        %460 = vperm.xlu0 %459, %v410
        %v461 = vpop.permute.xlu0 %460
        %464 = vset.pattern.permute.xlu0 0
        %465 = vperm.xlu0 %464, %v412
        %v466 = vpop.permute.xlu0 %465
        %v476 = vlaneseq
        %v477 = vshrl.u32 %v476, 7
        %v478 = vsub.s32 0, %v477
        %v479 = vrot.slane %v413, %v478
        %v480 = vlaneseq
        %v481 = vshrl.u32 %v480, 7
        %v482 = vsub.s32 1, %v481
        %v483 = vrot.slane %v413, %v482
        %v484 = vlaneseq
        %v485 = vshrl.u32 %v484, 7
        %v486 = vsub.s32 0, %v485
        %v487 = vrot.slane %v415, %v486
        %v488 = vlaneseq
        %v489 = vshrl.u32 %v488, 7
        %v490 = vsub.s32 1, %v489
        %v491 = vrot.slane %v415, %v490
        %v492 = vlaneseq
        %v493 = vshrl.u32 %v492, 7
        %v494 = vsub.s32 0, %v493
        %v495 = vrot.slane %v417, %v494
        %v496 = vlaneseq
        %v497 = vshrl.u32 %v496, 7
        %v498 = vsub.s32 1, %v497
        %v499 = vrot.slane %v417, %v498
        %v500 = vlaneseq
        %v501 = vshrl.u32 %v500, 7
        %v502 = vsub.s32 0, %v501
        %v503 = vrot.slane %v419, %v502
        %v504 = vlaneseq
        %v505 = vshrl.u32 %v504, 7
        %v506 = vsub.s32 1, %v505
        %v507 = vrot.slane %v419, %v506
        %v508 = vlaneseq
        %v509 = vshrl.u32 %v508, 7
        %v510 = vsub.s32 0, %v509
        %v511 = vrot.slane %v421, %v510
        %v512 = vlaneseq
        %v513 = vshrl.u32 %v512, 7
        %v514 = vsub.s32 1, %v513
        %v515 = vrot.slane %v421, %v514
        %v516 = vlaneseq
        %v517 = vshrl.u32 %v516, 7
        %v518 = vsub.s32 0, %v517
        %v519 = vrot.slane %v423, %v518
        %v520 = vlaneseq
        %v521 = vshrl.u32 %v520, 7
        %v522 = vsub.s32 1, %v521
        %v523 = vrot.slane %v423, %v522
        %v524 = vlaneseq
        %v525 = vshrl.u32 %v524, 7
        %v526 = vsub.s32 0, %v525
        %v527 = vrot.slane %v425, %v526
        %v528 = vlaneseq
        %v529 = vshrl.u32 %v528, 7
        %v530 = vsub.s32 1, %v529
        %v531 = vrot.slane %v425, %v530
        %v532 = vlaneseq
        %v533 = vshrl.u32 %v532, 7
        %v534 = vsub.s32 0, %v533
        %v535 = vrot.slane %v427, %v534
        %v536 = vlaneseq
        %v537 = vshrl.u32 %v536, 7
        %v538 = vsub.s32 1, %v537
        %v539 = vrot.slane %v427, %v538
        %v556 = vmul.f32 %v431, %v479
        %v557 = vmul.f32 %v431, %v483
        %v558 = vmul.f32 %v436, %v487
        %v559 = vmul.f32 %v436, %v491
        %v560 = vmul.f32 %v441, %v495
        %v561 = vmul.f32 %v441, %v499
        %v562 = vmul.f32 %v446, %v503
        %v563 = vmul.f32 %v446, %v507
        %v564 = vmul.f32 %v451, %v511
        %v565 = vmul.f32 %v451, %v515
        %v566 = vmul.f32 %v456, %v519
        %v567 = vmul.f32 %v456, %v523
        %v568 = vmul.f32 %v461, %v527
        %v569 = vmul.f32 %v461, %v531
        %v570 = vmul.f32 %v466, %v535
        %v571 = vmul.f32 %v466, %v539
        %v572 = vld [vmem:[%s271] sm:$0x1]
        %v573 = vld [vmem:[%s271 + $0x4] sm:$0x1]
        %v574 = vld [vmem:[%s271 + $0x8] sm:$0x1]
        %v575 = vld [vmem:[%s271 + $0xc] sm:$0x1]
        %v576 = vld [vmem:[%s271 + $0x10] sm:$0x1]
        %v577 = vld [vmem:[%s271 + $0x14] sm:$0x1]
        %v578 = vld [vmem:[%s271 + $0x18] sm:$0x1]
        %v579 = vld [vmem:[%s271 + $0x1c] sm:$0x1]
        %v580 = vmul.f32 %v431, %v572
        %v581 = vmul.f32 %v436, %v573
        %v582 = vmul.f32 %v441, %v574
        %v583 = vmul.f32 %v446, %v575
        %v584 = vmul.f32 %v451, %v576
        %v585 = vmul.f32 %v456, %v577
        %v586 = vmul.f32 %v461, %v578
        %v587 = vmul.f32 %v466, %v579
        %s588 = scalar_lea.vmem %s220, 1 [#allocation2]
        %v589 = vld [vmem:[%s588] ss:$4 sm:$0x3]
        %s590 = scalar_lea.vmem %s220, 9 [#allocation2]
        %v591 = vld [vmem:[%s590] ss:$4 sm:$0x3]
        %s592 = scalar_lea.vmem %s220, 17 [#allocation2]
        %v593 = vld [vmem:[%s592] ss:$4 sm:$0x3]
        %s594 = scalar_lea.vmem %s220, 25 [#allocation2]
        %v595 = vld [vmem:[%s594] ss:$4 sm:$0x3]
        %s596 = scalar_lea.vmem %s220, 33 [#allocation2]
        %v597 = vld [vmem:[%s596] ss:$4 sm:$0x3]
        %s598 = scalar_lea.vmem %s220, 41 [#allocation2]
        %v599 = vld [vmem:[%s598] ss:$4 sm:$0x3]
        %s600 = scalar_lea.vmem %s220, 49 [#allocation2]
        %v601 = vld [vmem:[%s600] ss:$4 sm:$0x3]
        %s602 = scalar_lea.vmem %s220, 57 [#allocation2]
        %v603 = vld [vmem:[%s602] ss:$4 sm:$0x3]
        %604 = vset.pattern.permute.xlu0 1
        %605 = vperm.xlu0 %604, %v398
        %v606 = vpop.permute.xlu0 %605
        %608 = vset.pattern.permute.xlu0 1
        %609 = vperm.xlu0 %608, %v400
        %v610 = vpop.permute.xlu0 %609
        %612 = vset.pattern.permute.xlu0 1
        %613 = vperm.xlu0 %612, %v402
        %v614 = vpop.permute.xlu0 %613
        %616 = vset.pattern.permute.xlu0 1
        %617 = vperm.xlu0 %616, %v404
        %v618 = vpop.permute.xlu0 %617
        %620 = vset.pattern.permute.xlu0 1
        %621 = vperm.xlu0 %620, %v406
        %v622 = vpop.permute.xlu0 %621
        %624 = vset.pattern.permute.xlu0 1
        %625 = vperm.xlu0 %624, %v408
        %v626 = vpop.permute.xlu0 %625
        %628 = vset.pattern.permute.xlu0 1
        %629 = vperm.xlu0 %628, %v410
        %v630 = vpop.permute.xlu0 %629
        %632 = vset.pattern.permute.xlu0 1
        %633 = vperm.xlu0 %632, %v412
        %v634 = vpop.permute.xlu0 %633
        %v644 = vlaneseq
        %v645 = vshrl.u32 %v644, 7
        %v646 = vsub.s32 0, %v645
        %v647 = vrot.slane %v589, %v646
        %v648 = vlaneseq
        %v649 = vshrl.u32 %v648, 7
        %v650 = vsub.s32 1, %v649
        %v651 = vrot.slane %v589, %v650
        %v652 = vlaneseq
        %v653 = vshrl.u32 %v652, 7
        %v654 = vsub.s32 0, %v653
        %v655 = vrot.slane %v591, %v654
        %v656 = vlaneseq
        %v657 = vshrl.u32 %v656, 7
        %v658 = vsub.s32 1, %v657
        %v659 = vrot.slane %v591, %v658
        %v660 = vlaneseq
        %v661 = vshrl.u32 %v660, 7
        %v662 = vsub.s32 0, %v661
        %v663 = vrot.slane %v593, %v662
        %v664 = vlaneseq
        %v665 = vshrl.u32 %v664, 7
        %v666 = vsub.s32 1, %v665
        %v667 = vrot.slane %v593, %v666
        %v668 = vlaneseq
        %v669 = vshrl.u32 %v668, 7
        %v670 = vsub.s32 0, %v669
        %v671 = vrot.slane %v595, %v670
        %v672 = vlaneseq
        %v673 = vshrl.u32 %v672, 7
        %v674 = vsub.s32 1, %v673
        %v675 = vrot.slane %v595, %v674
        %v676 = vlaneseq
        %v677 = vshrl.u32 %v676, 7
        %v678 = vsub.s32 0, %v677
        %v679 = vrot.slane %v597, %v678
        %v680 = vlaneseq
        %v681 = vshrl.u32 %v680, 7
        %v682 = vsub.s32 1, %v681
        %v683 = vrot.slane %v597, %v682
        %v684 = vlaneseq
        %v685 = vshrl.u32 %v684, 7
        %v686 = vsub.s32 0, %v685
        %v687 = vrot.slane %v599, %v686
        %v688 = vlaneseq
        %v689 = vshrl.u32 %v688, 7
        %v690 = vsub.s32 1, %v689
        %v691 = vrot.slane %v599, %v690
        %v692 = vlaneseq
        %v693 = vshrl.u32 %v692, 7
        %v694 = vsub.s32 0, %v693
        %v695 = vrot.slane %v601, %v694
        %v696 = vlaneseq
        %v697 = vshrl.u32 %v696, 7
        %v698 = vsub.s32 1, %v697
        %v699 = vrot.slane %v601, %v698
        %v700 = vlaneseq
        %v701 = vshrl.u32 %v700, 7
        %v702 = vsub.s32 0, %v701
        %v703 = vrot.slane %v603, %v702
        %v704 = vlaneseq
        %v705 = vshrl.u32 %v704, 7
        %v706 = vsub.s32 1, %v705
        %v707 = vrot.slane %v603, %v706
        %v724 = vmul.f32 %v606, %v647
        %v725 = vmul.f32 %v606, %v651
        %v726 = vmul.f32 %v610, %v655
        %v727 = vmul.f32 %v610, %v659
        %v728 = vmul.f32 %v614, %v663
        %v729 = vmul.f32 %v614, %v667
        %v730 = vmul.f32 %v618, %v671
        %v731 = vmul.f32 %v618, %v675
        %v732 = vmul.f32 %v622, %v679
        %v733 = vmul.f32 %v622, %v683
        %v734 = vmul.f32 %v626, %v687
        %v735 = vmul.f32 %v626, %v691
        %v736 = vmul.f32 %v630, %v695
        %v737 = vmul.f32 %v630, %v699
        %v738 = vmul.f32 %v634, %v703
        %v739 = vmul.f32 %v634, %v707
        %v740 = vadd.f32 %v556, %v724
        %v741 = vadd.f32 %v557, %v725
        %v742 = vadd.f32 %v558, %v726
        %v743 = vadd.f32 %v559, %v727
        %v744 = vadd.f32 %v560, %v728
        %v745 = vadd.f32 %v561, %v729
        %v746 = vadd.f32 %v562, %v730
        %v747 = vadd.f32 %v563, %v731
        %v748 = vadd.f32 %v564, %v732
        %v749 = vadd.f32 %v565, %v733
        %v750 = vadd.f32 %v566, %v734
        %v751 = vadd.f32 %v567, %v735
        %v752 = vadd.f32 %v568, %v736
        %v753 = vadd.f32 %v569, %v737
        %v754 = vadd.f32 %v570, %v738
        %v755 = vadd.f32 %v571, %v739
        %v756 = vld [vmem:[%s271 + $0x1] sm:$0x1]
        %v757 = vld [vmem:[%s271 + $0x5] sm:$0x1]
        %v758 = vld [vmem:[%s271 + $0x9] sm:$0x1]
        %v759 = vld [vmem:[%s271 + $0xd] sm:$0x1]
        %v760 = vld [vmem:[%s271 + $0x11] sm:$0x1]
        %v761 = vld [vmem:[%s271 + $0x15] sm:$0x1]
        %v762 = vld [vmem:[%s271 + $0x19] sm:$0x1]
        %v763 = vld [vmem:[%s271 + $0x1d] sm:$0x1]
        %v764 = vmul.f32 %v606, %v756
        %v765 = vmul.f32 %v610, %v757
        %v766 = vmul.f32 %v614, %v758
        %v767 = vmul.f32 %v618, %v759
        %v768 = vmul.f32 %v622, %v760
        %v769 = vmul.f32 %v626, %v761
        %v770 = vmul.f32 %v630, %v762
        %v771 = vmul.f32 %v634, %v763
        %v772 = vadd.f32 %v580, %v764
        %v773 = vadd.f32 %v581, %v765
        %v774 = vadd.f32 %v582, %v766
        %v775 = vadd.f32 %v583, %v767
        %v776 = vadd.f32 %v584, %v768
        %v777 = vadd.f32 %v585, %v769
        %v778 = vadd.f32 %v586, %v770
        %v779 = vadd.f32 %v587, %v771
        %s780 = scalar_lea.vmem %s220, 2 [#allocation2]
        %v781 = vld [vmem:[%s780] ss:$4 sm:$0x3]
        %s782 = scalar_lea.vmem %s220, 10 [#allocation2]
        %v783 = vld [vmem:[%s782] ss:$4 sm:$0x3]
        %s784 = scalar_lea.vmem %s220, 18 [#allocation2]
        %v785 = vld [vmem:[%s784] ss:$4 sm:$0x3]
        %s786 = scalar_lea.vmem %s220, 26 [#allocation2]
        %v787 = vld [vmem:[%s786] ss:$4 sm:$0x3]
        %s788 = scalar_lea.vmem %s220, 34 [#allocation2]
        %v789 = vld [vmem:[%s788] ss:$4 sm:$0x3]
        %s790 = scalar_lea.vmem %s220, 42 [#allocation2]
        %v791 = vld [vmem:[%s790] ss:$4 sm:$0x3]
        %s792 = scalar_lea.vmem %s220, 50 [#allocation2]
        %v793 = vld [vmem:[%s792] ss:$4 sm:$0x3]
        %s794 = scalar_lea.vmem %s220, 58 [#allocation2]
        %v795 = vld [vmem:[%s794] ss:$4 sm:$0x3]
        %796 = vset.pattern.permute.xlu0 2
        %797 = vperm.xlu0 %796, %v398
        %v798 = vpop.permute.xlu0 %797
        %800 = vset.pattern.permute.xlu0 2
        %801 = vperm.xlu0 %800, %v400
        %v802 = vpop.permute.xlu0 %801
        %804 = vset.pattern.permute.xlu0 2
        %805 = vperm.xlu0 %804, %v402
        %v806 = vpop.permute.xlu0 %805
        %808 = vset.pattern.permute.xlu0 2
        %809 = vperm.xlu0 %808, %v404
        %v810 = vpop.permute.xlu0 %809
        %812 = vset.pattern.permute.xlu0 2
        %813 = vperm.xlu0 %812, %v406
        %v814 = vpop.permute.xlu0 %813
        %816 = vset.pattern.permute.xlu0 2
        %817 = vperm.xlu0 %816, %v408
        %v818 = vpop.permute.xlu0 %817
        %820 = vset.pattern.permute.xlu0 2
        %821 = vperm.xlu0 %820, %v410
        %v822 = vpop.permute.xlu0 %821
        %824 = vset.pattern.permute.xlu0 2
        %825 = vperm.xlu0 %824, %v412
        %v826 = vpop.permute.xlu0 %825
        %v836 = vlaneseq
        %v837 = vshrl.u32 %v836, 7
        %v838 = vsub.s32 0, %v837
        %v839 = vrot.slane %v781, %v838
        %v840 = vlaneseq
        %v841 = vshrl.u32 %v840, 7
        %v842 = vsub.s32 1, %v841
        %v843 = vrot.slane %v781, %v842
        %v844 = vlaneseq
        %v845 = vshrl.u32 %v844, 7
        %v846 = vsub.s32 0, %v845
        %v847 = vrot.slane %v783, %v846
        %v848 = vlaneseq
        %v849 = vshrl.u32 %v848, 7
        %v850 = vsub.s32 1, %v849
        %v851 = vrot.slane %v783, %v850
        %v852 = vlaneseq
        %v853 = vshrl.u32 %v852, 7
        %v854 = vsub.s32 0, %v853
        %v855 = vrot.slane %v785, %v854
        %v856 = vlaneseq
        %v857 = vshrl.u32 %v856, 7
        %v858 = vsub.s32 1, %v857
        %v859 = vrot.slane %v785, %v858
        %v860 = vlaneseq
        %v861 = vshrl.u32 %v860, 7
        %v862 = vsub.s32 0, %v861
        %v863 = vrot.slane %v787, %v862
        %v864 = vlaneseq
        %v865 = vshrl.u32 %v864, 7
        %v866 = vsub.s32 1, %v865
        %v867 = vrot.slane %v787, %v866
        %v868 = vlaneseq
        %v869 = vshrl.u32 %v868, 7
        %v870 = vsub.s32 0, %v869
        %v871 = vrot.slane %v789, %v870
        %v872 = vlaneseq
        %v873 = vshrl.u32 %v872, 7
        %v874 = vsub.s32 1, %v873
        %v875 = vrot.slane %v789, %v874
        %v876 = vlaneseq
        %v877 = vshrl.u32 %v876, 7
        %v878 = vsub.s32 0, %v877
        %v879 = vrot.slane %v791, %v878
        %v880 = vlaneseq
        %v881 = vshrl.u32 %v880, 7
        %v882 = vsub.s32 1, %v881
        %v883 = vrot.slane %v791, %v882
        %v884 = vlaneseq
        %v885 = vshrl.u32 %v884, 7
        %v886 = vsub.s32 0, %v885
        %v887 = vrot.slane %v793, %v886
        %v888 = vlaneseq
        %v889 = vshrl.u32 %v888, 7
        %v890 = vsub.s32 1, %v889
        %v891 = vrot.slane %v793, %v890
        %v892 = vlaneseq
        %v893 = vshrl.u32 %v892, 7
        %v894 = vsub.s32 0, %v893
        %v895 = vrot.slane %v795, %v894
        %v896 = vlaneseq
        %v897 = vshrl.u32 %v896, 7
        %v898 = vsub.s32 1, %v897
        %v899 = vrot.slane %v795, %v898
        %v916 = vmul.f32 %v798, %v839
        %v917 = vmul.f32 %v798, %v843
        %v918 = vmul.f32 %v802, %v847
        %v919 = vmul.f32 %v802, %v851
        %v920 = vmul.f32 %v806, %v855
        %v921 = vmul.f32 %v806, %v859
        %v922 = vmul.f32 %v810, %v863
        %v923 = vmul.f32 %v810, %v867
        %v924 = vmul.f32 %v814, %v871
        %v925 = vmul.f32 %v814, %v875
        %v926 = vmul.f32 %v818, %v879
        %v927 = vmul.f32 %v818, %v883
        %v928 = vmul.f32 %v822, %v887
        %v929 = vmul.f32 %v822, %v891
        %v930 = vmul.f32 %v826, %v895
        %v931 = vmul.f32 %v826, %v899
        %v932 = vadd.f32 %v740, %v916
        %v933 = vadd.f32 %v741, %v917
        %v934 = vadd.f32 %v742, %v918
        %v935 = vadd.f32 %v743, %v919
        %v936 = vadd.f32 %v744, %v920
        %v937 = vadd.f32 %v745, %v921
        %v938 = vadd.f32 %v746, %v922
        %v939 = vadd.f32 %v747, %v923
        %v940 = vadd.f32 %v748, %v924
        %v941 = vadd.f32 %v749, %v925
        %v942 = vadd.f32 %v750, %v926
        %v943 = vadd.f32 %v751, %v927
        %v944 = vadd.f32 %v752, %v928
        %v945 = vadd.f32 %v753, %v929
        %v946 = vadd.f32 %v754, %v930
        %v947 = vadd.f32 %v755, %v931
        %v948 = vld [vmem:[%s271 + $0x2] sm:$0x1]
        %v949 = vld [vmem:[%s271 + $0x6] sm:$0x1]
        %v950 = vld [vmem:[%s271 + $0xa] sm:$0x1]
        %v951 = vld [vmem:[%s271 + $0xe] sm:$0x1]
        %v952 = vld [vmem:[%s271 + $0x12] sm:$0x1]
        %v953 = vld [vmem:[%s271 + $0x16] sm:$0x1]
        %v954 = vld [vmem:[%s271 + $0x1a] sm:$0x1]
        %v955 = vld [vmem:[%s271 + $0x1e] sm:$0x1]
        %v956 = vmul.f32 %v798, %v948
        %v957 = vmul.f32 %v802, %v949
        %v958 = vmul.f32 %v806, %v950
        %v959 = vmul.f32 %v810, %v951
        %v960 = vmul.f32 %v814, %v952
        %v961 = vmul.f32 %v818, %v953
        %v962 = vmul.f32 %v822, %v954
        %v963 = vmul.f32 %v826, %v955
        %v964 = vadd.f32 %v772, %v956
        %v965 = vadd.f32 %v773, %v957
        %v966 = vadd.f32 %v774, %v958
        %v967 = vadd.f32 %v775, %v959
        %v968 = vadd.f32 %v776, %v960
        %v969 = vadd.f32 %v777, %v961
        %v970 = vadd.f32 %v778, %v962
        %v971 = vadd.f32 %v779, %v963
        %s972 = scalar_lea.vmem %s220, 3 [#allocation2]
        %v973 = vld [vmem:[%s972] ss:$4 sm:$0x3]
        %s974 = scalar_lea.vmem %s220, 11 [#allocation2]
        %v975 = vld [vmem:[%s974] ss:$4 sm:$0x3]
        %s976 = scalar_lea.vmem %s220, 19 [#allocation2]
        %v977 = vld [vmem:[%s976] ss:$4 sm:$0x3]
        %s978 = scalar_lea.vmem %s220, 27 [#allocation2]
        %v979 = vld [vmem:[%s978] ss:$4 sm:$0x3]
        %s980 = scalar_lea.vmem %s220, 35 [#allocation2]
        %v981 = vld [vmem:[%s980] ss:$4 sm:$0x3]
        %s982 = scalar_lea.vmem %s220, 43 [#allocation2]
        %v983 = vld [vmem:[%s982] ss:$4 sm:$0x3]
        %s984 = scalar_lea.vmem %s220, 51 [#allocation2]
        %v985 = vld [vmem:[%s984] ss:$4 sm:$0x3]
        %s986 = scalar_lea.vmem %s220, 59 [#allocation2]
        %v987 = vld [vmem:[%s986] ss:$4 sm:$0x3]
        %988 = vset.pattern.permute.xlu0 3
        %989 = vperm.xlu0 %988, %v398
        %v990 = vpop.permute.xlu0 %989
        %992 = vset.pattern.permute.xlu0 3
        %993 = vperm.xlu0 %992, %v400
        %v994 = vpop.permute.xlu0 %993
        %996 = vset.pattern.permute.xlu0 3
        %997 = vperm.xlu0 %996, %v402
        %v998 = vpop.permute.xlu0 %997
        %1000 = vset.pattern.permute.xlu0 3
        %1001 = vperm.xlu0 %1000, %v404
        %v1002 = vpop.permute.xlu0 %1001
        %1004 = vset.pattern.permute.xlu0 3
        %1005 = vperm.xlu0 %1004, %v406
        %v1006 = vpop.permute.xlu0 %1005
        %1008 = vset.pattern.permute.xlu0 3
        %1009 = vperm.xlu0 %1008, %v408
        %v1010 = vpop.permute.xlu0 %1009
        %1012 = vset.pattern.permute.xlu0 3
        %1013 = vperm.xlu0 %1012, %v410
        %v1014 = vpop.permute.xlu0 %1013
        %1016 = vset.pattern.permute.xlu0 3
        %1017 = vperm.xlu0 %1016, %v412
        %v1018 = vpop.permute.xlu0 %1017
        %v1028 = vlaneseq
        %v1029 = vshrl.u32 %v1028, 7
        %v1030 = vsub.s32 0, %v1029
        %v1031 = vrot.slane %v973, %v1030
        %v1032 = vlaneseq
        %v1033 = vshrl.u32 %v1032, 7
        %v1034 = vsub.s32 1, %v1033
        %v1035 = vrot.slane %v973, %v1034
        %v1036 = vlaneseq
        %v1037 = vshrl.u32 %v1036, 7
        %v1038 = vsub.s32 0, %v1037
        %v1039 = vrot.slane %v975, %v1038
        %v1040 = vlaneseq
        %v1041 = vshrl.u32 %v1040, 7
        %v1042 = vsub.s32 1, %v1041
        %v1043 = vrot.slane %v975, %v1042
        %v1044 = vlaneseq
        %v1045 = vshrl.u32 %v1044, 7
        %v1046 = vsub.s32 0, %v1045
        %v1047 = vrot.slane %v977, %v1046
        %v1048 = vlaneseq
        %v1049 = vshrl.u32 %v1048, 7
        %v1050 = vsub.s32 1, %v1049
        %v1051 = vrot.slane %v977, %v1050
        %v1052 = vlaneseq
        %v1053 = vshrl.u32 %v1052, 7
        %v1054 = vsub.s32 0, %v1053
        %v1055 = vrot.slane %v979, %v1054
        %v1056 = vlaneseq
        %v1057 = vshrl.u32 %v1056, 7
        %v1058 = vsub.s32 1, %v1057
        %v1059 = vrot.slane %v979, %v1058
        %v1060 = vlaneseq
        %v1061 = vshrl.u32 %v1060, 7
        %v1062 = vsub.s32 0, %v1061
        %v1063 = vrot.slane %v981, %v1062
        %v1064 = vlaneseq
        %v1065 = vshrl.u32 %v1064, 7
        %v1066 = vsub.s32 1, %v1065
        %v1067 = vrot.slane %v981, %v1066
        %v1068 = vlaneseq
        %v1069 = vshrl.u32 %v1068, 7
        %v1070 = vsub.s32 0, %v1069
        %v1071 = vrot.slane %v983, %v1070
        %v1072 = vlaneseq
        %v1073 = vshrl.u32 %v1072, 7
        %v1074 = vsub.s32 1, %v1073
        %v1075 = vrot.slane %v983, %v1074
        %v1076 = vlaneseq
        %v1077 = vshrl.u32 %v1076, 7
        %v1078 = vsub.s32 0, %v1077
        %v1079 = vrot.slane %v985, %v1078
        %v1080 = vlaneseq
        %v1081 = vshrl.u32 %v1080, 7
        %v1082 = vsub.s32 1, %v1081
        %v1083 = vrot.slane %v985, %v1082
        %v1084 = vlaneseq
        %v1085 = vshrl.u32 %v1084, 7
        %v1086 = vsub.s32 0, %v1085
        %v1087 = vrot.slane %v987, %v1086
        %v1088 = vlaneseq
        %v1089 = vshrl.u32 %v1088, 7
        %v1090 = vsub.s32 1, %v1089
        %v1091 = vrot.slane %v987, %v1090
        %v1108 = vmul.f32 %v990, %v1031
        %v1109 = vmul.f32 %v990, %v1035
        %v1110 = vmul.f32 %v994, %v1039
        %v1111 = vmul.f32 %v994, %v1043
        %v1112 = vmul.f32 %v998, %v1047
        %v1113 = vmul.f32 %v998, %v1051
        %v1114 = vmul.f32 %v1002, %v1055
        %v1115 = vmul.f32 %v1002, %v1059
        %v1116 = vmul.f32 %v1006, %v1063
        %v1117 = vmul.f32 %v1006, %v1067
        %v1118 = vmul.f32 %v1010, %v1071
        %v1119 = vmul.f32 %v1010, %v1075
        %v1120 = vmul.f32 %v1014, %v1079
        %v1121 = vmul.f32 %v1014, %v1083
        %v1122 = vmul.f32 %v1018, %v1087
        %v1123 = vmul.f32 %v1018, %v1091
        %v1124 = vadd.f32 %v932, %v1108
        %v1125 = vadd.f32 %v933, %v1109
        %v1126 = vadd.f32 %v934, %v1110
        %v1127 = vadd.f32 %v935, %v1111
        %v1128 = vadd.f32 %v936, %v1112
        %v1129 = vadd.f32 %v937, %v1113
        %v1130 = vadd.f32 %v938, %v1114
        %v1131 = vadd.f32 %v939, %v1115
        %v1132 = vadd.f32 %v940, %v1116
        %v1133 = vadd.f32 %v941, %v1117
        %v1134 = vadd.f32 %v942, %v1118
        %v1135 = vadd.f32 %v943, %v1119
        %v1136 = vadd.f32 %v944, %v1120
        %v1137 = vadd.f32 %v945, %v1121
        %v1138 = vadd.f32 %v946, %v1122
        %v1139 = vadd.f32 %v947, %v1123
        %v1140 = vld [vmem:[%s271 + $0x3] sm:$0x1]
        %v1141 = vld [vmem:[%s271 + $0x7] sm:$0x1]
        %v1142 = vld [vmem:[%s271 + $0xb] sm:$0x1]
        %v1143 = vld [vmem:[%s271 + $0xf] sm:$0x1]
        %v1144 = vld [vmem:[%s271 + $0x13] sm:$0x1]
        %v1145 = vld [vmem:[%s271 + $0x17] sm:$0x1]
        %v1146 = vld [vmem:[%s271 + $0x1b] sm:$0x1]
        %v1147 = vld [vmem:[%s271 + $0x1f] sm:$0x1]
        %v1148 = vmul.f32 %v990, %v1140
        %v1149 = vmul.f32 %v994, %v1141
        %v1150 = vmul.f32 %v998, %v1142
        %v1151 = vmul.f32 %v1002, %v1143
        %v1152 = vmul.f32 %v1006, %v1144
        %v1153 = vmul.f32 %v1010, %v1145
        %v1154 = vmul.f32 %v1014, %v1146
        %v1155 = vmul.f32 %v1018, %v1147
        %v1156 = vadd.f32 %v964, %v1148
        %v1157 = vadd.f32 %v965, %v1149
        %v1158 = vadd.f32 %v966, %v1150
        %v1159 = vadd.f32 %v967, %v1151
        %v1160 = vadd.f32 %v968, %v1152
        %v1161 = vadd.f32 %v969, %v1153
        %v1162 = vadd.f32 %v970, %v1154
        %v1163 = vadd.f32 %v971, %v1155
        %v1180 = vrot.slane %v1126, 7
        %v1181 = vsel %vm290, %v1180, %v1124
        %v1182 = vrot.slane %v1128, 6
        %v1183 = vsel %vm293, %v1182, %v1181
        %v1184 = vrot.slane %v1130, 5
        %v1185 = vsel %vm296, %v1184, %v1183
        %v1186 = vrot.slane %v1132, 4
        %v1187 = vsel %vm299, %v1186, %v1185
        %v1188 = vrot.slane %v1134, 3
        %v1189 = vsel %vm302, %v1188, %v1187
        %v1190 = vrot.slane %v1136, 2
        %v1191 = vsel %vm305, %v1190, %v1189
        %v1192 = vrot.slane %v1138, 1
        %v1193 = vsel %vm308, %v1192, %v1191
        %v1194 = vrot.slane %v1127, 7
        %v1195 = vsel %vm290, %v1194, %v1125
        %v1196 = vrot.slane %v1129, 6
        %v1197 = vsel %vm293, %v1196, %v1195
        %v1198 = vrot.slane %v1131, 5
        %v1199 = vsel %vm296, %v1198, %v1197
        %v1200 = vrot.slane %v1133, 4
        %v1201 = vsel %vm299, %v1200, %v1199
        %v1202 = vrot.slane %v1135, 3
        %v1203 = vsel %vm302, %v1202, %v1201
        %v1204 = vrot.slane %v1137, 2
        %v1205 = vsel %vm305, %v1204, %v1203
        %v1206 = vrot.slane %v1139, 1
        %v1207 = vsel %vm308, %v1206, %v1205
        %1210 = vst [vmem:[%s252] sm:$0xff] %v1193
        %1211 = vst [vmem:[%s252 + $0x8] sm:$0xff] %v1207
        %v1212 = vld [vmem:[%s264 + $0x1] sm:$0x1]
        %v1213 = vld [vmem:[%s264 + $0x5] sm:$0x1]
        %v1214 = vld [vmem:[%s264 + $0x9] sm:$0x1]
        %v1215 = vld [vmem:[%s264 + $0xd] sm:$0x1]
        %v1216 = vld [vmem:[%s264 + $0x11] sm:$0x1]
        %v1217 = vld [vmem:[%s264 + $0x15] sm:$0x1]
        %v1218 = vld [vmem:[%s264 + $0x19] sm:$0x1]
        %v1219 = vld [vmem:[%s264 + $0x1d] sm:$0x1]
        %v1228 = vrot.slane %v1213, 7
        %v1229 = vsel %vm290, %v1228, %v1212
        %v1230 = vrot.slane %v1214, 6
        %v1231 = vsel %vm293, %v1230, %v1229
        %v1232 = vrot.slane %v1215, 5
        %v1233 = vsel %vm296, %v1232, %v1231
        %v1234 = vrot.slane %v1216, 4
        %v1235 = vsel %vm299, %v1234, %v1233
        %v1236 = vrot.slane %v1217, 3
        %v1237 = vsel %vm302, %v1236, %v1235
        %v1238 = vrot.slane %v1218, 2
        %v1239 = vsel %vm305, %v1238, %v1237
        %v1240 = vrot.slane %v1219, 1
        %v1241 = vsel %vm308, %v1240, %v1239
        %v1243 = vsel %vm311, %v1241, -inf
        %1244 = vmax.xlane.f32.xlu0 %v1243
        %v1245 = vpop.xlane.xlu0 %1244
        %v1247 = vrot.slane %v1245, 1
        %v1248 = vrot.slane %v1245, 2
        %v1249 = vrot.slane %v1245, 3
        %v1250 = vrot.slane %v1245, 4
        %v1251 = vrot.slane %v1245, 5
        %v1252 = vrot.slane %v1245, 6
        %v1253 = vrot.slane %v1245, 7
        %v1262 = vsub.f32 %v1212, %v1245
        %v1263 = vsub.f32 %v1213, %v1247
        %v1264 = vsub.f32 %v1214, %v1248
        %v1265 = vsub.f32 %v1215, %v1249
        %v1266 = vsub.f32 %v1216, %v1250
        %v1267 = vsub.f32 %v1217, %v1251
        %v1268 = vsub.f32 %v1218, %v1252
        %v1269 = vsub.f32 %v1219, %v1253
        %v1270 = vmul.f32 %v1262, 1.442695
        %v1271 = vpow.pop %v1270
        %v1272 = vmul.f32 %v1263, 1.442695
        %v1273 = vpow.pop %v1272
        %v1274 = vmul.f32 %v1264, 1.442695
        %v1275 = vpow.pop %v1274
        %v1276 = vmul.f32 %v1265, 1.442695
        %v1277 = vpow.pop %v1276
        %v1278 = vmul.f32 %v1266, 1.442695
        %v1279 = vpow.pop %v1278
        %v1280 = vmul.f32 %v1267, 1.442695
        %v1281 = vpow.pop %v1280
        %v1282 = vmul.f32 %v1268, 1.442695
        %v1283 = vpow.pop %v1282
        %v1284 = vmul.f32 %v1269, 1.442695
        %v1285 = vpow.pop %v1284
        %v1294 = vrot.slane %v1273, 7
        %v1295 = vsel %vm290, %v1294, %v1271
        %v1296 = vrot.slane %v1275, 6
        %v1297 = vsel %vm293, %v1296, %v1295
        %v1298 = vrot.slane %v1277, 5
        %v1299 = vsel %vm296, %v1298, %v1297
        %v1300 = vrot.slane %v1279, 4
        %v1301 = vsel %vm299, %v1300, %v1299
        %v1302 = vrot.slane %v1281, 3
        %v1303 = vsel %vm302, %v1302, %v1301
        %v1304 = vrot.slane %v1283, 2
        %v1305 = vsel %vm305, %v1304, %v1303
        %v1306 = vrot.slane %v1285, 1
        %v1307 = vsel %vm308, %v1306, %v1305
        %v1309 = vsel %vm311, %v1307, 0.0
        %1310 = vadd.xlane.f32.xlu0 %v1309
        %v1311 = vpop.xlane.xlu0 %1310
        %v1313 = vrot.slane %v1311, 1
        %v1314 = vrot.slane %v1311, 2
        %v1315 = vrot.slane %v1311, 3
        %v1316 = vrot.slane %v1311, 4
        %v1317 = vrot.slane %v1311, 5
        %v1318 = vrot.slane %v1311, 6
        %v1319 = vrot.slane %v1311, 7
        %v1328 = vrcp.pop %v1311
        %v1329 = vmul.f32 %v1271, %v1328
        %v1330 = vrcp.pop %v1313
        %v1331 = vmul.f32 %v1273, %v1330
        %v1332 = vrcp.pop %v1314
        %v1333 = vmul.f32 %v1275, %v1332
        %v1334 = vrcp.pop %v1315
        %v1335 = vmul.f32 %v1277, %v1334
        %v1336 = vrcp.pop %v1316
        %v1337 = vmul.f32 %v1279, %v1336
        %v1338 = vrcp.pop %v1317
        %v1339 = vmul.f32 %v1281, %v1338
        %v1340 = vrcp.pop %v1318
        %v1341 = vmul.f32 %v1283, %v1340
        %v1342 = vrcp.pop %v1319
        %v1343 = vmul.f32 %v1285, %v1342
        %v1344 = vld [vmem:[%s220] ss:$4 sm:$0x3]
        %v1345 = vld [vmem:[%s414] ss:$4 sm:$0x3]
        %v1346 = vld [vmem:[%s416] ss:$4 sm:$0x3]
        %v1347 = vld [vmem:[%s418] ss:$4 sm:$0x3]
        %v1348 = vld [vmem:[%s420] ss:$4 sm:$0x3]
        %v1349 = vld [vmem:[%s422] ss:$4 sm:$0x3]
        %v1350 = vld [vmem:[%s424] ss:$4 sm:$0x3]
        %v1351 = vld [vmem:[%s426] ss:$4 sm:$0x3]
        %1353 = vset.pattern.permute.xlu0 0
        %1354 = vperm.xlu0 %1353, %v1329
        %v1355 = vpop.permute.xlu0 %1354
        %1358 = vset.pattern.permute.xlu0 0
        %1359 = vperm.xlu0 %1358, %v1331
        %v1360 = vpop.permute.xlu0 %1359
        %1363 = vset.pattern.permute.xlu0 0
        %1364 = vperm.xlu0 %1363, %v1333
        %v1365 = vpop.permute.xlu0 %1364
        %1368 = vset.pattern.permute.xlu0 0
        %1369 = vperm.xlu0 %1368, %v1335
        %v1370 = vpop.permute.xlu0 %1369
        %1373 = vset.pattern.permute.xlu0 0
        %1374 = vperm.xlu0 %1373, %v1337
        %v1375 = vpop.permute.xlu0 %1374
        %1378 = vset.pattern.permute.xlu0 0
        %1379 = vperm.xlu0 %1378, %v1339
        %v1380 = vpop.permute.xlu0 %1379
        %1383 = vset.pattern.permute.xlu0 0
        %1384 = vperm.xlu0 %1383, %v1341
        %v1385 = vpop.permute.xlu0 %1384
        %1388 = vset.pattern.permute.xlu0 0
        %1389 = vperm.xlu0 %1388, %v1343
        %v1390 = vpop.permute.xlu0 %1389
        %v1400 = vlaneseq
        %v1401 = vshrl.u32 %v1400, 7
        %v1402 = vsub.s32 0, %v1401
        %v1403 = vrot.slane %v1344, %v1402
        %v1404 = vlaneseq
        %v1405 = vshrl.u32 %v1404, 7
        %v1406 = vsub.s32 1, %v1405
        %v1407 = vrot.slane %v1344, %v1406
        %v1408 = vlaneseq
        %v1409 = vshrl.u32 %v1408, 7
        %v1410 = vsub.s32 0, %v1409
        %v1411 = vrot.slane %v1345, %v1410
        %v1412 = vlaneseq
        %v1413 = vshrl.u32 %v1412, 7
        %v1414 = vsub.s32 1, %v1413
        %v1415 = vrot.slane %v1345, %v1414
        %v1416 = vlaneseq
        %v1417 = vshrl.u32 %v1416, 7
        %v1418 = vsub.s32 0, %v1417
        %v1419 = vrot.slane %v1346, %v1418
        %v1420 = vlaneseq
        %v1421 = vshrl.u32 %v1420, 7
        %v1422 = vsub.s32 1, %v1421
        %v1423 = vrot.slane %v1346, %v1422
        %v1424 = vlaneseq
        %v1425 = vshrl.u32 %v1424, 7
        %v1426 = vsub.s32 0, %v1425
        %v1427 = vrot.slane %v1347, %v1426
        %v1428 = vlaneseq
        %v1429 = vshrl.u32 %v1428, 7
        %v1430 = vsub.s32 1, %v1429
        %v1431 = vrot.slane %v1347, %v1430
        %v1432 = vlaneseq
        %v1433 = vshrl.u32 %v1432, 7
        %v1434 = vsub.s32 0, %v1433
        %v1435 = vrot.slane %v1348, %v1434
        %v1436 = vlaneseq
        %v1437 = vshrl.u32 %v1436, 7
        %v1438 = vsub.s32 1, %v1437
        %v1439 = vrot.slane %v1348, %v1438
        %v1440 = vlaneseq
        %v1441 = vshrl.u32 %v1440, 7
        %v1442 = vsub.s32 0, %v1441
        %v1443 = vrot.slane %v1349, %v1442
        %v1444 = vlaneseq
        %v1445 = vshrl.u32 %v1444, 7
        %v1446 = vsub.s32 1, %v1445
        %v1447 = vrot.slane %v1349, %v1446
        %v1448 = vlaneseq
        %v1449 = vshrl.u32 %v1448, 7
        %v1450 = vsub.s32 0, %v1449
        %v1451 = vrot.slane %v1350, %v1450
        %v1452 = vlaneseq
        %v1453 = vshrl.u32 %v1452, 7
        %v1454 = vsub.s32 1, %v1453
        %v1455 = vrot.slane %v1350, %v1454
        %v1456 = vlaneseq
        %v1457 = vshrl.u32 %v1456, 7
        %v1458 = vsub.s32 0, %v1457
        %v1459 = vrot.slane %v1351, %v1458
        %v1460 = vlaneseq
        %v1461 = vshrl.u32 %v1460, 7
        %v1462 = vsub.s32 1, %v1461
        %v1463 = vrot.slane %v1351, %v1462
        %v1480 = vmul.f32 %v1355, %v1403
        %v1481 = vmul.f32 %v1355, %v1407
        %v1482 = vmul.f32 %v1360, %v1411
        %v1483 = vmul.f32 %v1360, %v1415
        %v1484 = vmul.f32 %v1365, %v1419
        %v1485 = vmul.f32 %v1365, %v1423
        %v1486 = vmul.f32 %v1370, %v1427
        %v1487 = vmul.f32 %v1370, %v1431
        %v1488 = vmul.f32 %v1375, %v1435
        %v1489 = vmul.f32 %v1375, %v1439
        %v1490 = vmul.f32 %v1380, %v1443
        %v1491 = vmul.f32 %v1380, %v1447
        %v1492 = vmul.f32 %v1385, %v1451
        %v1493 = vmul.f32 %v1385, %v1455
        %v1494 = vmul.f32 %v1390, %v1459
        %v1495 = vmul.f32 %v1390, %v1463
        %v1496 = vld [vmem:[%s271] sm:$0x1]
        %v1497 = vld [vmem:[%s271 + $0x4] sm:$0x1]
        %v1498 = vld [vmem:[%s271 + $0x8] sm:$0x1]
        %v1499 = vld [vmem:[%s271 + $0xc] sm:$0x1]
        %v1500 = vld [vmem:[%s271 + $0x10] sm:$0x1]
        %v1501 = vld [vmem:[%s271 + $0x14] sm:$0x1]
        %v1502 = vld [vmem:[%s271 + $0x18] sm:$0x1]
        %v1503 = vld [vmem:[%s271 + $0x1c] sm:$0x1]
        %v1504 = vmul.f32 %v1355, %v1496
        %v1505 = vmul.f32 %v1360, %v1497
        %v1506 = vmul.f32 %v1365, %v1498
        %v1507 = vmul.f32 %v1370, %v1499
        %v1508 = vmul.f32 %v1375, %v1500
        %v1509 = vmul.f32 %v1380, %v1501
        %v1510 = vmul.f32 %v1385, %v1502
        %v1511 = vmul.f32 %v1390, %v1503
        %v1512 = vld [vmem:[%s588] ss:$4 sm:$0x3]
        %v1513 = vld [vmem:[%s590] ss:$4 sm:$0x3]
        %v1514 = vld [vmem:[%s592] ss:$4 sm:$0x3]
        %v1515 = vld [vmem:[%s594] ss:$4 sm:$0x3]
        %v1516 = vld [vmem:[%s596] ss:$4 sm:$0x3]
        %v1517 = vld [vmem:[%s598] ss:$4 sm:$0x3]
        %v1518 = vld [vmem:[%s600] ss:$4 sm:$0x3]
        %v1519 = vld [vmem:[%s602] ss:$4 sm:$0x3]
        %1520 = vset.pattern.permute.xlu0 1
        %1521 = vperm.xlu0 %1520, %v1329
        %v1522 = vpop.permute.xlu0 %1521
        %1524 = vset.pattern.permute.xlu0 1
        %1525 = vperm.xlu0 %1524, %v1331
        %v1526 = vpop.permute.xlu0 %1525
        %1528 = vset.pattern.permute.xlu0 1
        %1529 = vperm.xlu0 %1528, %v1333
        %v1530 = vpop.permute.xlu0 %1529
        %1532 = vset.pattern.permute.xlu0 1
        %1533 = vperm.xlu0 %1532, %v1335
        %v1534 = vpop.permute.xlu0 %1533
        %1536 = vset.pattern.permute.xlu0 1
        %1537 = vperm.xlu0 %1536, %v1337
        %v1538 = vpop.permute.xlu0 %1537
        %1540 = vset.pattern.permute.xlu0 1
        %1541 = vperm.xlu0 %1540, %v1339
        %v1542 = vpop.permute.xlu0 %1541
        %1544 = vset.pattern.permute.xlu0 1
        %1545 = vperm.xlu0 %1544, %v1341
        %v1546 = vpop.permute.xlu0 %1545
        %1548 = vset.pattern.permute.xlu0 1
        %1549 = vperm.xlu0 %1548, %v1343
        %v1550 = vpop.permute.xlu0 %1549
        %v1560 = vlaneseq
        %v1561 = vshrl.u32 %v1560, 7
        %v1562 = vsub.s32 0, %v1561
        %v1563 = vrot.slane %v1512, %v1562
        %v1564 = vlaneseq
        %v1565 = vshrl.u32 %v1564, 7
        %v1566 = vsub.s32 1, %v1565
        %v1567 = vrot.slane %v1512, %v1566
        %v1568 = vlaneseq
        %v1569 = vshrl.u32 %v1568, 7
        %v1570 = vsub.s32 0, %v1569
        %v1571 = vrot.slane %v1513, %v1570
        %v1572 = vlaneseq
        %v1573 = vshrl.u32 %v1572, 7
        %v1574 = vsub.s32 1, %v1573
        %v1575 = vrot.slane %v1513, %v1574
        %v1576 = vlaneseq
        %v1577 = vshrl.u32 %v1576, 7
        %v1578 = vsub.s32 0, %v1577
        %v1579 = vrot.slane %v1514, %v1578
        %v1580 = vlaneseq
        %v1581 = vshrl.u32 %v1580, 7
        %v1582 = vsub.s32 1, %v1581
        %v1583 = vrot.slane %v1514, %v1582
        %v1584 = vlaneseq
        %v1585 = vshrl.u32 %v1584, 7
        %v1586 = vsub.s32 0, %v1585
        %v1587 = vrot.slane %v1515, %v1586
        %v1588 = vlaneseq
        %v1589 = vshrl.u32 %v1588, 7
        %v1590 = vsub.s32 1, %v1589
        %v1591 = vrot.slane %v1515, %v1590
        %v1592 = vlaneseq
        %v1593 = vshrl.u32 %v1592, 7
        %v1594 = vsub.s32 0, %v1593
        %v1595 = vrot.slane %v1516, %v1594
        %v1596 = vlaneseq
        %v1597 = vshrl.u32 %v1596, 7
        %v1598 = vsub.s32 1, %v1597
        %v1599 = vrot.slane %v1516, %v1598
        %v1600 = vlaneseq
        %v1601 = vshrl.u32 %v1600, 7
        %v1602 = vsub.s32 0, %v1601
        %v1603 = vrot.slane %v1517, %v1602
        %v1604 = vlaneseq
        %v1605 = vshrl.u32 %v1604, 7
        %v1606 = vsub.s32 1, %v1605
        %v1607 = vrot.slane %v1517, %v1606
        %v1608 = vlaneseq
        %v1609 = vshrl.u32 %v1608, 7
        %v1610 = vsub.s32 0, %v1609
        %v1611 = vrot.slane %v1518, %v1610
        %v1612 = vlaneseq
        %v1613 = vshrl.u32 %v1612, 7
        %v1614 = vsub.s32 1, %v1613
        %v1615 = vrot.slane %v1518, %v1614
        %v1616 = vlaneseq
        %v1617 = vshrl.u32 %v1616, 7
        %v1618 = vsub.s32 0, %v1617
        %v1619 = vrot.slane %v1519, %v1618
        %v1620 = vlaneseq
        %v1621 = vshrl.u32 %v1620, 7
        %v1622 = vsub.s32 1, %v1621
        %v1623 = vrot.slane %v1519, %v1622
        %v1640 = vmul.f32 %v1522, %v1563
        %v1641 = vmul.f32 %v1522, %v1567
        %v1642 = vmul.f32 %v1526, %v1571
        %v1643 = vmul.f32 %v1526, %v1575
        %v1644 = vmul.f32 %v1530, %v1579
        %v1645 = vmul.f32 %v1530, %v1583
        %v1646 = vmul.f32 %v1534, %v1587
        %v1647 = vmul.f32 %v1534, %v1591
        %v1648 = vmul.f32 %v1538, %v1595
        %v1649 = vmul.f32 %v1538, %v1599
        %v1650 = vmul.f32 %v1542, %v1603
        %v1651 = vmul.f32 %v1542, %v1607
        %v1652 = vmul.f32 %v1546, %v1611
        %v1653 = vmul.f32 %v1546, %v1615
        %v1654 = vmul.f32 %v1550, %v1619
        %v1655 = vmul.f32 %v1550, %v1623
        %v1656 = vadd.f32 %v1480, %v1640
        %v1657 = vadd.f32 %v1481, %v1641
        %v1658 = vadd.f32 %v1482, %v1642
        %v1659 = vadd.f32 %v1483, %v1643
        %v1660 = vadd.f32 %v1484, %v1644
        %v1661 = vadd.f32 %v1485, %v1645
        %v1662 = vadd.f32 %v1486, %v1646
        %v1663 = vadd.f32 %v1487, %v1647
        %v1664 = vadd.f32 %v1488, %v1648
        %v1665 = vadd.f32 %v1489, %v1649
        %v1666 = vadd.f32 %v1490, %v1650
        %v1667 = vadd.f32 %v1491, %v1651
        %v1668 = vadd.f32 %v1492, %v1652
        %v1669 = vadd.f32 %v1493, %v1653
        %v1670 = vadd.f32 %v1494, %v1654
        %v1671 = vadd.f32 %v1495, %v1655
        %v1672 = vld [vmem:[%s271 + $0x1] sm:$0x1]
        %v1673 = vld [vmem:[%s271 + $0x5] sm:$0x1]
        %v1674 = vld [vmem:[%s271 + $0x9] sm:$0x1]
        %v1675 = vld [vmem:[%s271 + $0xd] sm:$0x1]
        %v1676 = vld [vmem:[%s271 + $0x11] sm:$0x1]
        %v1677 = vld [vmem:[%s271 + $0x15] sm:$0x1]
        %v1678 = vld [vmem:[%s271 + $0x19] sm:$0x1]
        %v1679 = vld [vmem:[%s271 + $0x1d] sm:$0x1]
        %v1680 = vmul.f32 %v1522, %v1672
        %v1681 = vmul.f32 %v1526, %v1673
        %v1682 = vmul.f32 %v1530, %v1674
        %v1683 = vmul.f32 %v1534, %v1675
        %v1684 = vmul.f32 %v1538, %v1676
        %v1685 = vmul.f32 %v1542, %v1677
        %v1686 = vmul.f32 %v1546, %v1678
        %v1687 = vmul.f32 %v1550, %v1679
        %v1688 = vadd.f32 %v1504, %v1680
        %v1689 = vadd.f32 %v1505, %v1681
        %v1690 = vadd.f32 %v1506, %v1682
        %v1691 = vadd.f32 %v1507, %v1683
        %v1692 = vadd.f32 %v1508, %v1684
        %v1693 = vadd.f32 %v1509, %v1685
        %v1694 = vadd.f32 %v1510, %v1686
        %v1695 = vadd.f32 %v1511, %v1687
        %v1696 = vld [vmem:[%s780] ss:$4 sm:$0x3]
        %v1697 = vld [vmem:[%s782] ss:$4 sm:$0x3]
        %v1698 = vld [vmem:[%s784] ss:$4 sm:$0x3]
        %v1699 = vld [vmem:[%s786] ss:$4 sm:$0x3]
        %v1700 = vld [vmem:[%s788] ss:$4 sm:$0x3]
        %v1701 = vld [vmem:[%s790] ss:$4 sm:$0x3]
        %v1702 = vld [vmem:[%s792] ss:$4 sm:$0x3]
        %v1703 = vld [vmem:[%s794] ss:$4 sm:$0x3]
        %1704 = vset.pattern.permute.xlu0 2
        %1705 = vperm.xlu0 %1704, %v1329
        %v1706 = vpop.permute.xlu0 %1705
        %1708 = vset.pattern.permute.xlu0 2
        %1709 = vperm.xlu0 %1708, %v1331
        %v1710 = vpop.permute.xlu0 %1709
        %1712 = vset.pattern.permute.xlu0 2
        %1713 = vperm.xlu0 %1712, %v1333
        %v1714 = vpop.permute.xlu0 %1713
        %1716 = vset.pattern.permute.xlu0 2
        %1717 = vperm.xlu0 %1716, %v1335
        %v1718 = vpop.permute.xlu0 %1717
        %1720 = vset.pattern.permute.xlu0 2
        %1721 = vperm.xlu0 %1720, %v1337
        %v1722 = vpop.permute.xlu0 %1721
        %1724 = vset.pattern.permute.xlu0 2
        %1725 = vperm.xlu0 %1724, %v1339
        %v1726 = vpop.permute.xlu0 %1725
        %1728 = vset.pattern.permute.xlu0 2
        %1729 = vperm.xlu0 %1728, %v1341
        %v1730 = vpop.permute.xlu0 %1729
        %1732 = vset.pattern.permute.xlu0 2
        %1733 = vperm.xlu0 %1732, %v1343
        %v1734 = vpop.permute.xlu0 %1733
        %v1744 = vlaneseq
        %v1745 = vshrl.u32 %v1744, 7
        %v1746 = vsub.s32 0, %v1745
        %v1747 = vrot.slane %v1696, %v1746
        %v1748 = vlaneseq
        %v1749 = vshrl.u32 %v1748, 7
        %v1750 = vsub.s32 1, %v1749
        %v1751 = vrot.slane %v1696, %v1750
        %v1752 = vlaneseq
        %v1753 = vshrl.u32 %v1752, 7
        %v1754 = vsub.s32 0, %v1753
        %v1755 = vrot.slane %v1697, %v1754
        %v1756 = vlaneseq
        %v1757 = vshrl.u32 %v1756, 7
        %v1758 = vsub.s32 1, %v1757
        %v1759 = vrot.slane %v1697, %v1758
        %v1760 = vlaneseq
        %v1761 = vshrl.u32 %v1760, 7
        %v1762 = vsub.s32 0, %v1761
        %v1763 = vrot.slane %v1698, %v1762
        %v1764 = vlaneseq
        %v1765 = vshrl.u32 %v1764, 7
        %v1766 = vsub.s32 1, %v1765
        %v1767 = vrot.slane %v1698, %v1766
        %v1768 = vlaneseq
        %v1769 = vshrl.u32 %v1768, 7
        %v1770 = vsub.s32 0, %v1769
        %v1771 = vrot.slane %v1699, %v1770
        %v1772 = vlaneseq
        %v1773 = vshrl.u32 %v1772, 7
        %v1774 = vsub.s32 1, %v1773
        %v1775 = vrot.slane %v1699, %v1774
        %v1776 = vlaneseq
        %v1777 = vshrl.u32 %v1776, 7
        %v1778 = vsub.s32 0, %v1777
        %v1779 = vrot.slane %v1700, %v1778
        %v1780 = vlaneseq
        %v1781 = vshrl.u32 %v1780, 7
        %v1782 = vsub.s32 1, %v1781
        %v1783 = vrot.slane %v1700, %v1782
        %v1784 = vlaneseq
        %v1785 = vshrl.u32 %v1784, 7
        %v1786 = vsub.s32 0, %v1785
        %v1787 = vrot.slane %v1701, %v1786
        %v1788 = vlaneseq
        %v1789 = vshrl.u32 %v1788, 7
        %v1790 = vsub.s32 1, %v1789
        %v1791 = vrot.slane %v1701, %v1790
        %v1792 = vlaneseq
        %v1793 = vshrl.u32 %v1792, 7
        %v1794 = vsub.s32 0, %v1793
        %v1795 = vrot.slane %v1702, %v1794
        %v1796 = vlaneseq
        %v1797 = vshrl.u32 %v1796, 7
        %v1798 = vsub.s32 1, %v1797
        %v1799 = vrot.slane %v1702, %v1798
        %v1800 = vlaneseq
        %v1801 = vshrl.u32 %v1800, 7
        %v1802 = vsub.s32 0, %v1801
        %v1803 = vrot.slane %v1703, %v1802
        %v1804 = vlaneseq
        %v1805 = vshrl.u32 %v1804, 7
        %v1806 = vsub.s32 1, %v1805
        %v1807 = vrot.slane %v1703, %v1806
        %v1824 = vmul.f32 %v1706, %v1747
        %v1825 = vmul.f32 %v1706, %v1751
        %v1826 = vmul.f32 %v1710, %v1755
        %v1827 = vmul.f32 %v1710, %v1759
        %v1828 = vmul.f32 %v1714, %v1763
        %v1829 = vmul.f32 %v1714, %v1767
        %v1830 = vmul.f32 %v1718, %v1771
        %v1831 = vmul.f32 %v1718, %v1775
        %v1832 = vmul.f32 %v1722, %v1779
        %v1833 = vmul.f32 %v1722, %v1783
        %v1834 = vmul.f32 %v1726, %v1787
        %v1835 = vmul.f32 %v1726, %v1791
        %v1836 = vmul.f32 %v1730, %v1795
        %v1837 = vmul.f32 %v1730, %v1799
        %v1838 = vmul.f32 %v1734, %v1803
        %v1839 = vmul.f32 %v1734, %v1807
        %v1840 = vadd.f32 %v1656, %v1824
        %v1841 = vadd.f32 %v1657, %v1825
        %v1842 = vadd.f32 %v1658, %v1826
        %v1843 = vadd.f32 %v1659, %v1827
        %v1844 = vadd.f32 %v1660, %v1828
        %v1845 = vadd.f32 %v1661, %v1829
        %v1846 = vadd.f32 %v1662, %v1830
        %v1847 = vadd.f32 %v1663, %v1831
        %v1848 = vadd.f32 %v1664, %v1832
        %v1849 = vadd.f32 %v1665, %v1833
        %v1850 = vadd.f32 %v1666, %v1834
        %v1851 = vadd.f32 %v1667, %v1835
        %v1852 = vadd.f32 %v1668, %v1836
        %v1853 = vadd.f32 %v1669, %v1837
        %v1854 = vadd.f32 %v1670, %v1838
        %v1855 = vadd.f32 %v1671, %v1839
        %v1856 = vld [vmem:[%s271 + $0x2] sm:$0x1]
        %v1857 = vld [vmem:[%s271 + $0x6] sm:$0x1]
        %v1858 = vld [vmem:[%s271 + $0xa] sm:$0x1]
        %v1859 = vld [vmem:[%s271 + $0xe] sm:$0x1]
        %v1860 = vld [vmem:[%s271 + $0x12] sm:$0x1]
        %v1861 = vld [vmem:[%s271 + $0x16] sm:$0x1]
        %v1862 = vld [vmem:[%s271 + $0x1a] sm:$0x1]
        %v1863 = vld [vmem:[%s271 + $0x1e] sm:$0x1]
        %v1864 = vmul.f32 %v1706, %v1856
        %v1865 = vmul.f32 %v1710, %v1857
        %v1866 = vmul.f32 %v1714, %v1858
        %v1867 = vmul.f32 %v1718, %v1859
        %v1868 = vmul.f32 %v1722, %v1860
        %v1869 = vmul.f32 %v1726, %v1861
        %v1870 = vmul.f32 %v1730, %v1862
        %v1871 = vmul.f32 %v1734, %v1863
        %v1872 = vadd.f32 %v1688, %v1864
        %v1873 = vadd.f32 %v1689, %v1865
        %v1874 = vadd.f32 %v1690, %v1866
        %v1875 = vadd.f32 %v1691, %v1867
        %v1876 = vadd.f32 %v1692, %v1868
        %v1877 = vadd.f32 %v1693, %v1869
        %v1878 = vadd.f32 %v1694, %v1870
        %v1879 = vadd.f32 %v1695, %v1871
        %v1880 = vld [vmem:[%s972] ss:$4 sm:$0x3]
        %v1881 = vld [vmem:[%s974] ss:$4 sm:$0x3]
        %v1882 = vld [vmem:[%s976] ss:$4 sm:$0x3]
        %v1883 = vld [vmem:[%s978] ss:$4 sm:$0x3]
        %v1884 = vld [vmem:[%s980] ss:$4 sm:$0x3]
        %v1885 = vld [vmem:[%s982] ss:$4 sm:$0x3]
        %v1886 = vld [vmem:[%s984] ss:$4 sm:$0x3]
        %v1887 = vld [vmem:[%s986] ss:$4 sm:$0x3]
        %1888 = vset.pattern.permute.xlu0 3
        %1889 = vperm.xlu0 %1888, %v1329
        %v1890 = vpop.permute.xlu0 %1889
        %1892 = vset.pattern.permute.xlu0 3
        %1893 = vperm.xlu0 %1892, %v1331
        %v1894 = vpop.permute.xlu0 %1893
        %1896 = vset.pattern.permute.xlu0 3
        %1897 = vperm.xlu0 %1896, %v1333
        %v1898 = vpop.permute.xlu0 %1897
        %1900 = vset.pattern.permute.xlu0 3
        %1901 = vperm.xlu0 %1900, %v1335
        %v1902 = vpop.permute.xlu0 %1901
        %1904 = vset.pattern.permute.xlu0 3
        %1905 = vperm.xlu0 %1904, %v1337
        %v1906 = vpop.permute.xlu0 %1905
        %1908 = vset.pattern.permute.xlu0 3
        %1909 = vperm.xlu0 %1908, %v1339
        %v1910 = vpop.permute.xlu0 %1909
        %1912 = vset.pattern.permute.xlu0 3
        %1913 = vperm.xlu0 %1912, %v1341
        %v1914 = vpop.permute.xlu0 %1913
        %1916 = vset.pattern.permute.xlu0 3
        %1917 = vperm.xlu0 %1916, %v1343
        %v1918 = vpop.permute.xlu0 %1917
        %v1928 = vlaneseq
        %v1929 = vshrl.u32 %v1928, 7
        %v1930 = vsub.s32 0, %v1929
        %v1931 = vrot.slane %v1880, %v1930
        %v1932 = vlaneseq
        %v1933 = vshrl.u32 %v1932, 7
        %v1934 = vsub.s32 1, %v1933
        %v1935 = vrot.slane %v1880, %v1934
        %v1936 = vlaneseq
        %v1937 = vshrl.u32 %v1936, 7
        %v1938 = vsub.s32 0, %v1937
        %v1939 = vrot.slane %v1881, %v1938
        %v1940 = vlaneseq
        %v1941 = vshrl.u32 %v1940, 7
        %v1942 = vsub.s32 1, %v1941
        %v1943 = vrot.slane %v1881, %v1942
        %v1944 = vlaneseq
        %v1945 = vshrl.u32 %v1944, 7
        %v1946 = vsub.s32 0, %v1945
        %v1947 = vrot.slane %v1882, %v1946
        %v1948 = vlaneseq
        %v1949 = vshrl.u32 %v1948, 7
        %v1950 = vsub.s32 1, %v1949
        %v1951 = vrot.slane %v1882, %v1950
        %v1952 = vlaneseq
        %v1953 = vshrl.u32 %v1952, 7
        %v1954 = vsub.s32 0, %v1953
        %v1955 = vrot.slane %v1883, %v1954
        %v1956 = vlaneseq
        %v1957 = vshrl.u32 %v1956, 7
        %v1958 = vsub.s32 1, %v1957
        %v1959 = vrot.slane %v1883, %v1958
        %v1960 = vlaneseq
        %v1961 = vshrl.u32 %v1960, 7
        %v1962 = vsub.s32 0, %v1961
        %v1963 = vrot.slane %v1884, %v1962
        %v1964 = vlaneseq
        %v1965 = vshrl.u32 %v1964, 7
        %v1966 = vsub.s32 1, %v1965
        %v1967 = vrot.slane %v1884, %v1966
        %v1968 = vlaneseq
        %v1969 = vshrl.u32 %v1968, 7
        %v1970 = vsub.s32 0, %v1969
        %v1971 = vrot.slane %v1885, %v1970
        %v1972 = vlaneseq
        %v1973 = vshrl.u32 %v1972, 7
        %v1974 = vsub.s32 1, %v1973
        %v1975 = vrot.slane %v1885, %v1974
        %v1976 = vlaneseq
        %v1977 = vshrl.u32 %v1976, 7
        %v1978 = vsub.s32 0, %v1977
        %v1979 = vrot.slane %v1886, %v1978
        %v1980 = vlaneseq
        %v1981 = vshrl.u32 %v1980, 7
        %v1982 = vsub.s32 1, %v1981
        %v1983 = vrot.slane %v1886, %v1982
        %v1984 = vlaneseq
        %v1985 = vshrl.u32 %v1984, 7
        %v1986 = vsub.s32 0, %v1985
        %v1987 = vrot.slane %v1887, %v1986
        %v1988 = vlaneseq
        %v1989 = vshrl.u32 %v1988, 7
        %v1990 = vsub.s32 1, %v1989
        %v1991 = vrot.slane %v1887, %v1990
        %v2008 = vmul.f32 %v1890, %v1931
        %v2009 = vmul.f32 %v1890, %v1935
        %v2010 = vmul.f32 %v1894, %v1939
        %v2011 = vmul.f32 %v1894, %v1943
        %v2012 = vmul.f32 %v1898, %v1947
        %v2013 = vmul.f32 %v1898, %v1951
        %v2014 = vmul.f32 %v1902, %v1955
        %v2015 = vmul.f32 %v1902, %v1959
        %v2016 = vmul.f32 %v1906, %v1963
        %v2017 = vmul.f32 %v1906, %v1967
        %v2018 = vmul.f32 %v1910, %v1971
        %v2019 = vmul.f32 %v1910, %v1975
        %v2020 = vmul.f32 %v1914, %v1979
        %v2021 = vmul.f32 %v1914, %v1983
        %v2022 = vmul.f32 %v1918, %v1987
        %v2023 = vmul.f32 %v1918, %v1991
        %v2024 = vadd.f32 %v1840, %v2008
        %v2025 = vadd.f32 %v1841, %v2009
        %v2026 = vadd.f32 %v1842, %v2010
        %v2027 = vadd.f32 %v1843, %v2011
        %v2028 = vadd.f32 %v1844, %v2012
        %v2029 = vadd.f32 %v1845, %v2013
        %v2030 = vadd.f32 %v1846, %v2014
        %v2031 = vadd.f32 %v1847, %v2015
        %v2032 = vadd.f32 %v1848, %v2016
        %v2033 = vadd.f32 %v1849, %v2017
        %v2034 = vadd.f32 %v1850, %v2018
        %v2035 = vadd.f32 %v1851, %v2019
        %v2036 = vadd.f32 %v1852, %v2020
        %v2037 = vadd.f32 %v1853, %v2021
        %v2038 = vadd.f32 %v1854, %v2022
        %v2039 = vadd.f32 %v1855, %v2023
        %v2040 = vld [vmem:[%s271 + $0x3] sm:$0x1]
        %v2041 = vld [vmem:[%s271 + $0x7] sm:$0x1]
        %v2042 = vld [vmem:[%s271 + $0xb] sm:$0x1]
        %v2043 = vld [vmem:[%s271 + $0xf] sm:$0x1]
        %v2044 = vld [vmem:[%s271 + $0x13] sm:$0x1]
        %v2045 = vld [vmem:[%s271 + $0x17] sm:$0x1]
        %v2046 = vld [vmem:[%s271 + $0x1b] sm:$0x1]
        %v2047 = vld [vmem:[%s271 + $0x1f] sm:$0x1]
        %v2048 = vmul.f32 %v1890, %v2040
        %v2049 = vmul.f32 %v1894, %v2041
        %v2050 = vmul.f32 %v1898, %v2042
        %v2051 = vmul.f32 %v1902, %v2043
        %v2052 = vmul.f32 %v1906, %v2044
        %v2053 = vmul.f32 %v1910, %v2045
        %v2054 = vmul.f32 %v1914, %v2046
        %v2055 = vmul.f32 %v1918, %v2047
        %v2056 = vadd.f32 %v1872, %v2048
        %v2057 = vadd.f32 %v1873, %v2049
        %v2058 = vadd.f32 %v1874, %v2050
        %v2059 = vadd.f32 %v1875, %v2051
        %v2060 = vadd.f32 %v1876, %v2052
        %v2061 = vadd.f32 %v1877, %v2053
        %v2062 = vadd.f32 %v1878, %v2054
        %v2063 = vadd.f32 %v1879, %v2055
        %v2080 = vrot.slane %v2026, 7
        %v2081 = vsel %vm290, %v2080, %v2024
        %v2082 = vrot.slane %v2028, 6
        %v2083 = vsel %vm293, %v2082, %v2081
        %v2084 = vrot.slane %v2030, 5
        %v2085 = vsel %vm296, %v2084, %v2083
        %v2086 = vrot.slane %v2032, 4
        %v2087 = vsel %vm299, %v2086, %v2085
        %v2088 = vrot.slane %v2034, 3
        %v2089 = vsel %vm302, %v2088, %v2087
        %v2090 = vrot.slane %v2036, 2
        %v2091 = vsel %vm305, %v2090, %v2089
        %v2092 = vrot.slane %v2038, 1
        %v2093 = vsel %vm308, %v2092, %v2091
        %v2094 = vrot.slane %v2027, 7
        %v2095 = vsel %vm290, %v2094, %v2025
        %v2096 = vrot.slane %v2029, 6
        %v2097 = vsel %vm293, %v2096, %v2095
        %v2098 = vrot.slane %v2031, 5
        %v2099 = vsel %vm296, %v2098, %v2097
        %v2100 = vrot.slane %v2033, 4
        %v2101 = vsel %vm299, %v2100, %v2099
        %v2102 = vrot.slane %v2035, 3
        %v2103 = vsel %vm302, %v2102, %v2101
        %v2104 = vrot.slane %v2037, 2
        %v2105 = vsel %vm305, %v2104, %v2103
        %v2106 = vrot.slane %v2039, 1
        %v2107 = vsel %vm308, %v2106, %v2105
        %2110 = vst [vmem:[%s252 + $0x10] sm:$0xff] %v2093
        %2111 = vst [vmem:[%s252 + $0x18] sm:$0xff] %v2107
        %v2112 = vld [vmem:[%s264 + $0x2] sm:$0x1]
        %v2113 = vld [vmem:[%s264 + $0x6] sm:$0x1]
        %v2114 = vld [vmem:[%s264 + $0xa] sm:$0x1]
        %v2115 = vld [vmem:[%s264 + $0xe] sm:$0x1]
        %v2116 = vld [vmem:[%s264 + $0x12] sm:$0x1]
        %v2117 = vld [vmem:[%s264 + $0x16] sm:$0x1]
        %v2118 = vld [vmem:[%s264 + $0x1a] sm:$0x1]
        %v2119 = vld [vmem:[%s264 + $0x1e] sm:$0x1]
        %v2128 = vrot.slane %v2113, 7
        %v2129 = vsel %vm290, %v2128, %v2112
        %v2130 = vrot.slane %v2114, 6
        %v2131 = vsel %vm293, %v2130, %v2129
        %v2132 = vrot.slane %v2115, 5
        %v2133 = vsel %vm296, %v2132, %v2131
        %v2134 = vrot.slane %v2116, 4
        %v2135 = vsel %vm299, %v2134, %v2133
        %v2136 = vrot.slane %v2117, 3
        %v2137 = vsel %vm302, %v2136, %v2135
        %v2138 = vrot.slane %v2118, 2
        %v2139 = vsel %vm305, %v2138, %v2137
        %v2140 = vrot.slane %v2119, 1
        %v2141 = vsel %vm308, %v2140, %v2139
        %v2143 = vsel %vm311, %v2141, -inf
        %2144 = vmax.xlane.f32.xlu0 %v2143
        %v2145 = vpop.xlane.xlu0 %2144
        %v2147 = vrot.slane %v2145, 1
        %v2148 = vrot.slane %v2145, 2
        %v2149 = vrot.slane %v2145, 3
        %v2150 = vrot.slane %v2145, 4
        %v2151 = vrot.slane %v2145, 5
        %v2152 = vrot.slane %v2145, 6
        %v2153 = vrot.slane %v2145, 7
        %v2162 = vsub.f32 %v2112, %v2145
        %v2163 = vsub.f32 %v2113, %v2147
        %v2164 = vsub.f32 %v2114, %v2148
        %v2165 = vsub.f32 %v2115, %v2149
        %v2166 = vsub.f32 %v2116, %v2150
        %v2167 = vsub.f32 %v2117, %v2151
        %v2168 = vsub.f32 %v2118, %v2152
        %v2169 = vsub.f32 %v2119, %v2153
        %v2170 = vmul.f32 %v2162, 1.442695
        %v2171 = vpow.pop %v2170
        %v2172 = vmul.f32 %v2163, 1.442695
        %v2173 = vpow.pop %v2172
        %v2174 = vmul.f32 %v2164, 1.442695
        %v2175 = vpow.pop %v2174
        %v2176 = vmul.f32 %v2165, 1.442695
        %v2177 = vpow.pop %v2176
        %v2178 = vmul.f32 %v2166, 1.442695
        %v2179 = vpow.pop %v2178
        %v2180 = vmul.f32 %v2167, 1.442695
        %v2181 = vpow.pop %v2180
        %v2182 = vmul.f32 %v2168, 1.442695
        %v2183 = vpow.pop %v2182
        %v2184 = vmul.f32 %v2169, 1.442695
        %v2185 = vpow.pop %v2184
        %v2194 = vrot.slane %v2173, 7
        %v2195 = vsel %vm290, %v2194, %v2171
        %v2196 = vrot.slane %v2175, 6
        %v2197 = vsel %vm293, %v2196, %v2195
        %v2198 = vrot.slane %v2177, 5
        %v2199 = vsel %vm296, %v2198, %v2197
        %v2200 = vrot.slane %v2179, 4
        %v2201 = vsel %vm299, %v2200, %v2199
        %v2202 = vrot.slane %v2181, 3
        %v2203 = vsel %vm302, %v2202, %v2201
        %v2204 = vrot.slane %v2183, 2
        %v2205 = vsel %vm305, %v2204, %v2203
        %v2206 = vrot.slane %v2185, 1
        %v2207 = vsel %vm308, %v2206, %v2205
        %v2209 = vsel %vm311, %v2207, 0.0
        %2210 = vadd.xlane.f32.xlu0 %v2209
        %v2211 = vpop.xlane.xlu0 %2210
        %v2213 = vrot.slane %v2211, 1
        %v2214 = vrot.slane %v2211, 2
        %v2215 = vrot.slane %v2211, 3
        %v2216 = vrot.slane %v2211, 4
        %v2217 = vrot.slane %v2211, 5
        %v2218 = vrot.slane %v2211, 6
        %v2219 = vrot.slane %v2211, 7
        %v2228 = vrcp.pop %v2211
        %v2229 = vmul.f32 %v2171, %v2228
        %v2230 = vrcp.pop %v2213
        %v2231 = vmul.f32 %v2173, %v2230
        %v2232 = vrcp.pop %v2214
        %v2233 = vmul.f32 %v2175, %v2232
        %v2234 = vrcp.pop %v2215
        %v2235 = vmul.f32 %v2177, %v2234
        %v2236 = vrcp.pop %v2216
        %v2237 = vmul.f32 %v2179, %v2236
        %v2238 = vrcp.pop %v2217
        %v2239 = vmul.f32 %v2181, %v2238
        %v2240 = vrcp.pop %v2218
        %v2241 = vmul.f32 %v2183, %v2240
        %v2242 = vrcp.pop %v2219
        %v2243 = vmul.f32 %v2185, %v2242
        %v2244 = vld [vmem:[%s220] ss:$4 sm:$0x3]
        %v2245 = vld [vmem:[%s414] ss:$4 sm:$0x3]
        %v2246 = vld [vmem:[%s416] ss:$4 sm:$0x3]
        %v2247 = vld [vmem:[%s418] ss:$4 sm:$0x3]
        %v2248 = vld [vmem:[%s420] ss:$4 sm:$0x3]
        %v2249 = vld [vmem:[%s422] ss:$4 sm:$0x3]
        %v2250 = vld [vmem:[%s424] ss:$4 sm:$0x3]
        %v2251 = vld [vmem:[%s426] ss:$4 sm:$0x3]
        %2253 = vset.pattern.permute.xlu0 0
        %2254 = vperm.xlu0 %2253, %v2229
        %v2255 = vpop.permute.xlu0 %2254
        %2258 = vset.pattern.permute.xlu0 0
        %2259 = vperm.xlu0 %2258, %v2231
        %v2260 = vpop.permute.xlu0 %2259
        %2263 = vset.pattern.permute.xlu0 0
        %2264 = vperm.xlu0 %2263, %v2233
        %v2265 = vpop.permute.xlu0 %2264
        %2268 = vset.pattern.permute.xlu0 0
        %2269 = vperm.xlu0 %2268, %v2235
        %v2270 = vpop.permute.xlu0 %2269
        %2273 = vset.pattern.permute.xlu0 0
        %2274 = vperm.xlu0 %2273, %v2237
        %v2275 = vpop.permute.xlu0 %2274
        %2278 = vset.pattern.permute.xlu0 0
        %2279 = vperm.xlu0 %2278, %v2239
        %v2280 = vpop.permute.xlu0 %2279
        %2283 = vset.pattern.permute.xlu0 0
        %2284 = vperm.xlu0 %2283, %v2241
        %v2285 = vpop.permute.xlu0 %2284
        %2288 = vset.pattern.permute.xlu0 0
        %2289 = vperm.xlu0 %2288, %v2243
        %v2290 = vpop.permute.xlu0 %2289
        %v2300 = vlaneseq
        %v2301 = vshrl.u32 %v2300, 7
        %v2302 = vsub.s32 0, %v2301
        %v2303 = vrot.slane %v2244, %v2302
        %v2304 = vlaneseq
        %v2305 = vshrl.u32 %v2304, 7
        %v2306 = vsub.s32 1, %v2305
        %v2307 = vrot.slane %v2244, %v2306
        %v2308 = vlaneseq
        %v2309 = vshrl.u32 %v2308, 7
        %v2310 = vsub.s32 0, %v2309
        %v2311 = vrot.slane %v2245, %v2310
        %v2312 = vlaneseq
        %v2313 = vshrl.u32 %v2312, 7
        %v2314 = vsub.s32 1, %v2313
        %v2315 = vrot.slane %v2245, %v2314
        %v2316 = vlaneseq
        %v2317 = vshrl.u32 %v2316, 7
        %v2318 = vsub.s32 0, %v2317
        %v2319 = vrot.slane %v2246, %v2318
        %v2320 = vlaneseq
        %v2321 = vshrl.u32 %v2320, 7
        %v2322 = vsub.s32 1, %v2321
        %v2323 = vrot.slane %v2246, %v2322
        %v2324 = vlaneseq
        %v2325 = vshrl.u32 %v2324, 7
        %v2326 = vsub.s32 0, %v2325
        %v2327 = vrot.slane %v2247, %v2326
        %v2328 = vlaneseq
        %v2329 = vshrl.u32 %v2328, 7
        %v2330 = vsub.s32 1, %v2329
        %v2331 = vrot.slane %v2247, %v2330
        %v2332 = vlaneseq
        %v2333 = vshrl.u32 %v2332, 7
        %v2334 = vsub.s32 0, %v2333
        %v2335 = vrot.slane %v2248, %v2334
        %v2336 = vlaneseq
        %v2337 = vshrl.u32 %v2336, 7
        %v2338 = vsub.s32 1, %v2337
        %v2339 = vrot.slane %v2248, %v2338
        %v2340 = vlaneseq
        %v2341 = vshrl.u32 %v2340, 7
        %v2342 = vsub.s32 0, %v2341
        %v2343 = vrot.slane %v2249, %v2342
        %v2344 = vlaneseq
        %v2345 = vshrl.u32 %v2344, 7
        %v2346 = vsub.s32 1, %v2345
        %v2347 = vrot.slane %v2249, %v2346
        %v2348 = vlaneseq
        %v2349 = vshrl.u32 %v2348, 7
        %v2350 = vsub.s32 0, %v2349
        %v2351 = vrot.slane %v2250, %v2350
        %v2352 = vlaneseq
        %v2353 = vshrl.u32 %v2352, 7
        %v2354 = vsub.s32 1, %v2353
        %v2355 = vrot.slane %v2250, %v2354
        %v2356 = vlaneseq
        %v2357 = vshrl.u32 %v2356, 7
        %v2358 = vsub.s32 0, %v2357
        %v2359 = vrot.slane %v2251, %v2358
        %v2360 = vlaneseq
        %v2361 = vshrl.u32 %v2360, 7
        %v2362 = vsub.s32 1, %v2361
        %v2363 = vrot.slane %v2251, %v2362
        %v2380 = vmul.f32 %v2255, %v2303
        %v2381 = vmul.f32 %v2255, %v2307
        %v2382 = vmul.f32 %v2260, %v2311
        %v2383 = vmul.f32 %v2260, %v2315
        %v2384 = vmul.f32 %v2265, %v2319
        %v2385 = vmul.f32 %v2265, %v2323
        %v2386 = vmul.f32 %v2270, %v2327
        %v2387 = vmul.f32 %v2270, %v2331
        %v2388 = vmul.f32 %v2275, %v2335
        %v2389 = vmul.f32 %v2275, %v2339
        %v2390 = vmul.f32 %v2280, %v2343
        %v2391 = vmul.f32 %v2280, %v2347
        %v2392 = vmul.f32 %v2285, %v2351
        %v2393 = vmul.f32 %v2285, %v2355
        %v2394 = vmul.f32 %v2290, %v2359
        %v2395 = vmul.f32 %v2290, %v2363
        %v2396 = vld [vmem:[%s271] sm:$0x1]
        %v2397 = vld [vmem:[%s271 + $0x4] sm:$0x1]
        %v2398 = vld [vmem:[%s271 + $0x8] sm:$0x1]
        %v2399 = vld [vmem:[%s271 + $0xc] sm:$0x1]
        %v2400 = vld [vmem:[%s271 + $0x10] sm:$0x1]
        %v2401 = vld [vmem:[%s271 + $0x14] sm:$0x1]
        %v2402 = vld [vmem:[%s271 + $0x18] sm:$0x1]
        %v2403 = vld [vmem:[%s271 + $0x1c] sm:$0x1]
        %v2404 = vmul.f32 %v2255, %v2396
        %v2405 = vmul.f32 %v2260, %v2397
        %v2406 = vmul.f32 %v2265, %v2398
        %v2407 = vmul.f32 %v2270, %v2399
        %v2408 = vmul.f32 %v2275, %v2400
        %v2409 = vmul.f32 %v2280, %v2401
        %v2410 = vmul.f32 %v2285, %v2402
        %v2411 = vmul.f32 %v2290, %v2403
        %v2412 = vld [vmem:[%s588] ss:$4 sm:$0x3]
        %v2413 = vld [vmem:[%s590] ss:$4 sm:$0x3]
        %v2414 = vld [vmem:[%s592] ss:$4 sm:$0x3]
        %v2415 = vld [vmem:[%s594] ss:$4 sm:$0x3]
        %v2416 = vld [vmem:[%s596] ss:$4 sm:$0x3]
        %v2417 = vld [vmem:[%s598] ss:$4 sm:$0x3]
        %v2418 = vld [vmem:[%s600] ss:$4 sm:$0x3]
        %v2419 = vld [vmem:[%s602] ss:$4 sm:$0x3]
        %2420 = vset.pattern.permute.xlu0 1
        %2421 = vperm.xlu0 %2420, %v2229
        %v2422 = vpop.permute.xlu0 %2421
        %2424 = vset.pattern.permute.xlu0 1
        %2425 = vperm.xlu0 %2424, %v2231
        %v2426 = vpop.permute.xlu0 %2425
        %2428 = vset.pattern.permute.xlu0 1
        %2429 = vperm.xlu0 %2428, %v2233
        %v2430 = vpop.permute.xlu0 %2429
        %2432 = vset.pattern.permute.xlu0 1
        %2433 = vperm.xlu0 %2432, %v2235
        %v2434 = vpop.permute.xlu0 %2433
        %2436 = vset.pattern.permute.xlu0 1
        %2437 = vperm.xlu0 %2436, %v2237
        %v2438 = vpop.permute.xlu0 %2437
        %2440 = vset.pattern.permute.xlu0 1
        %2441 = vperm.xlu0 %2440, %v2239
        %v2442 = vpop.permute.xlu0 %2441
        %2444 = vset.pattern.permute.xlu0 1
        %2445 = vperm.xlu0 %2444, %v2241
        %v2446 = vpop.permute.xlu0 %2445
        %2448 = vset.pattern.permute.xlu0 1
        %2449 = vperm.xlu0 %2448, %v2243
        %v2450 = vpop.permute.xlu0 %2449
        %v2460 = vlaneseq
        %v2461 = vshrl.u32 %v2460, 7
        %v2462 = vsub.s32 0, %v2461
        %v2463 = vrot.slane %v2412, %v2462
        %v2464 = vlaneseq
        %v2465 = vshrl.u32 %v2464, 7
        %v2466 = vsub.s32 1, %v2465
        %v2467 = vrot.slane %v2412, %v2466
        %v2468 = vlaneseq
        %v2469 = vshrl.u32 %v2468, 7
        %v2470 = vsub.s32 0, %v2469
        %v2471 = vrot.slane %v2413, %v2470
        %v2472 = vlaneseq
        %v2473 = vshrl.u32 %v2472, 7
        %v2474 = vsub.s32 1, %v2473
        %v2475 = vrot.slane %v2413, %v2474
        %v2476 = vlaneseq
        %v2477 = vshrl.u32 %v2476, 7
        %v2478 = vsub.s32 0, %v2477
        %v2479 = vrot.slane %v2414, %v2478
        %v2480 = vlaneseq
        %v2481 = vshrl.u32 %v2480, 7
        %v2482 = vsub.s32 1, %v2481
        %v2483 = vrot.slane %v2414, %v2482
        %v2484 = vlaneseq
        %v2485 = vshrl.u32 %v2484, 7
        %v2486 = vsub.s32 0, %v2485
        %v2487 = vrot.slane %v2415, %v2486
        %v2488 = vlaneseq
        %v2489 = vshrl.u32 %v2488, 7
        %v2490 = vsub.s32 1, %v2489
        %v2491 = vrot.slane %v2415, %v2490
        %v2492 = vlaneseq
        %v2493 = vshrl.u32 %v2492, 7
        %v2494 = vsub.s32 0, %v2493
        %v2495 = vrot.slane %v2416, %v2494
        %v2496 = vlaneseq
        %v2497 = vshrl.u32 %v2496, 7
        %v2498 = vsub.s32 1, %v2497
        %v2499 = vrot.slane %v2416, %v2498
        %v2500 = vlaneseq
        %v2501 = vshrl.u32 %v2500, 7
        %v2502 = vsub.s32 0, %v2501
        %v2503 = vrot.slane %v2417, %v2502
        %v2504 = vlaneseq
        %v2505 = vshrl.u32 %v2504, 7
        %v2506 = vsub.s32 1, %v2505
        %v2507 = vrot.slane %v2417, %v2506
        %v2508 = vlaneseq
        %v2509 = vshrl.u32 %v2508, 7
        %v2510 = vsub.s32 0, %v2509
        %v2511 = vrot.slane %v2418, %v2510
        %v2512 = vlaneseq
        %v2513 = vshrl.u32 %v2512, 7
        %v2514 = vsub.s32 1, %v2513
        %v2515 = vrot.slane %v2418, %v2514
        %v2516 = vlaneseq
        %v2517 = vshrl.u32 %v2516, 7
        %v2518 = vsub.s32 0, %v2517
        %v2519 = vrot.slane %v2419, %v2518
        %v2520 = vlaneseq
        %v2521 = vshrl.u32 %v2520, 7
        %v2522 = vsub.s32 1, %v2521
        %v2523 = vrot.slane %v2419, %v2522
        %v2540 = vmul.f32 %v2422, %v2463
        %v2541 = vmul.f32 %v2422, %v2467
        %v2542 = vmul.f32 %v2426, %v2471
        %v2543 = vmul.f32 %v2426, %v2475
        %v2544 = vmul.f32 %v2430, %v2479
        %v2545 = vmul.f32 %v2430, %v2483
        %v2546 = vmul.f32 %v2434, %v2487
        %v2547 = vmul.f32 %v2434, %v2491
        %v2548 = vmul.f32 %v2438, %v2495
        %v2549 = vmul.f32 %v2438, %v2499
        %v2550 = vmul.f32 %v2442, %v2503
        %v2551 = vmul.f32 %v2442, %v2507
        %v2552 = vmul.f32 %v2446, %v2511
        %v2553 = vmul.f32 %v2446, %v2515
        %v2554 = vmul.f32 %v2450, %v2519
        %v2555 = vmul.f32 %v2450, %v2523
        %v2556 = vadd.f32 %v2380, %v2540
        %v2557 = vadd.f32 %v2381, %v2541
        %v2558 = vadd.f32 %v2382, %v2542
        %v2559 = vadd.f32 %v2383, %v2543
        %v2560 = vadd.f32 %v2384, %v2544
        %v2561 = vadd.f32 %v2385, %v2545
        %v2562 = vadd.f32 %v2386, %v2546
        %v2563 = vadd.f32 %v2387, %v2547
        %v2564 = vadd.f32 %v2388, %v2548
        %v2565 = vadd.f32 %v2389, %v2549
        %v2566 = vadd.f32 %v2390, %v2550
        %v2567 = vadd.f32 %v2391, %v2551
        %v2568 = vadd.f32 %v2392, %v2552
        %v2569 = vadd.f32 %v2393, %v2553
        %v2570 = vadd.f32 %v2394, %v2554
        %v2571 = vadd.f32 %v2395, %v2555
        %v2572 = vld [vmem:[%s271 + $0x1] sm:$0x1]
        %v2573 = vld [vmem:[%s271 + $0x5] sm:$0x1]
        %v2574 = vld [vmem:[%s271 + $0x9] sm:$0x1]
        %v2575 = vld [vmem:[%s271 + $0xd] sm:$0x1]
        %v2576 = vld [vmem:[%s271 + $0x11] sm:$0x1]
        %v2577 = vld [vmem:[%s271 + $0x15] sm:$0x1]
        %v2578 = vld [vmem:[%s271 + $0x19] sm:$0x1]
        %v2579 = vld [vmem:[%s271 + $0x1d] sm:$0x1]
        %v2580 = vmul.f32 %v2422, %v2572
        %v2581 = vmul.f32 %v2426, %v2573
        %v2582 = vmul.f32 %v2430, %v2574
        %v2583 = vmul.f32 %v2434, %v2575
        %v2584 = vmul.f32 %v2438, %v2576
        %v2585 = vmul.f32 %v2442, %v2577
        %v2586 = vmul.f32 %v2446, %v2578
        %v2587 = vmul.f32 %v2450, %v2579
        %v2588 = vadd.f32 %v2404, %v2580
        %v2589 = vadd.f32 %v2405, %v2581
        %v2590 = vadd.f32 %v2406, %v2582
        %v2591 = vadd.f32 %v2407, %v2583
        %v2592 = vadd.f32 %v2408, %v2584
        %v2593 = vadd.f32 %v2409, %v2585
        %v2594 = vadd.f32 %v2410, %v2586
        %v2595 = vadd.f32 %v2411, %v2587
        %v2596 = vld [vmem:[%s780] ss:$4 sm:$0x3]
        %v2597 = vld [vmem:[%s782] ss:$4 sm:$0x3]
        %v2598 = vld [vmem:[%s784] ss:$4 sm:$0x3]
        %v2599 = vld [vmem:[%s786] ss:$4 sm:$0x3]
        %v2600 = vld [vmem:[%s788] ss:$4 sm:$0x3]
        %v2601 = vld [vmem:[%s790] ss:$4 sm:$0x3]
        %v2602 = vld [vmem:[%s792] ss:$4 sm:$0x3]
        %v2603 = vld [vmem:[%s794] ss:$4 sm:$0x3]
        %2604 = vset.pattern.permute.xlu0 2
        %2605 = vperm.xlu0 %2604, %v2229
        %v2606 = vpop.permute.xlu0 %2605
        %2608 = vset.pattern.permute.xlu0 2
        %2609 = vperm.xlu0 %2608, %v2231
        %v2610 = vpop.permute.xlu0 %2609
        %2612 = vset.pattern.permute.xlu0 2
        %2613 = vperm.xlu0 %2612, %v2233
        %v2614 = vpop.permute.xlu0 %2613
        %2616 = vset.pattern.permute.xlu0 2
        %2617 = vperm.xlu0 %2616, %v2235
        %v2618 = vpop.permute.xlu0 %2617
        %2620 = vset.pattern.permute.xlu0 2
        %2621 = vperm.xlu0 %2620, %v2237
        %v2622 = vpop.permute.xlu0 %2621
        %2624 = vset.pattern.permute.xlu0 2
        %2625 = vperm.xlu0 %2624, %v2239
        %v2626 = vpop.permute.xlu0 %2625
        %2628 = vset.pattern.permute.xlu0 2
        %2629 = vperm.xlu0 %2628, %v2241
        %v2630 = vpop.permute.xlu0 %2629
        %2632 = vset.pattern.permute.xlu0 2
        %2633 = vperm.xlu0 %2632, %v2243
        %v2634 = vpop.permute.xlu0 %2633
        %v2644 = vlaneseq
        %v2645 = vshrl.u32 %v2644, 7
        %v2646 = vsub.s32 0, %v2645
        %v2647 = vrot.slane %v2596, %v2646
        %v2648 = vlaneseq
        %v2649 = vshrl.u32 %v2648, 7
        %v2650 = vsub.s32 1, %v2649
        %v2651 = vrot.slane %v2596, %v2650
        %v2652 = vlaneseq
        %v2653 = vshrl.u32 %v2652, 7
        %v2654 = vsub.s32 0, %v2653
        %v2655 = vrot.slane %v2597, %v2654
        %v2656 = vlaneseq
        %v2657 = vshrl.u32 %v2656, 7
        %v2658 = vsub.s32 1, %v2657
        %v2659 = vrot.slane %v2597, %v2658
        %v2660 = vlaneseq
        %v2661 = vshrl.u32 %v2660, 7
        %v2662 = vsub.s32 0, %v2661
        %v2663 = vrot.slane %v2598, %v2662
        %v2664 = vlaneseq
        %v2665 = vshrl.u32 %v2664, 7
        %v2666 = vsub.s32 1, %v2665
        %v2667 = vrot.slane %v2598, %v2666
        %v2668 = vlaneseq
        %v2669 = vshrl.u32 %v2668, 7
        %v2670 = vsub.s32 0, %v2669
        %v2671 = vrot.slane %v2599, %v2670
        %v2672 = vlaneseq
        %v2673 = vshrl.u32 %v2672, 7
        %v2674 = vsub.s32 1, %v2673
        %v2675 = vrot.slane %v2599, %v2674
        %v2676 = vlaneseq
        %v2677 = vshrl.u32 %v2676, 7
        %v2678 = vsub.s32 0, %v2677
        %v2679 = vrot.slane %v2600, %v2678
        %v2680 = vlaneseq
        %v2681 = vshrl.u32 %v2680, 7
        %v2682 = vsub.s32 1, %v2681
        %v2683 = vrot.slane %v2600, %v2682
        %v2684 = vlaneseq
        %v2685 = vshrl.u32 %v2684, 7
        %v2686 = vsub.s32 0, %v2685
        %v2687 = vrot.slane %v2601, %v2686
        %v2688 = vlaneseq
        %v2689 = vshrl.u32 %v2688, 7
        %v2690 = vsub.s32 1, %v2689
        %v2691 = vrot.slane %v2601, %v2690
        %v2692 = vlaneseq
        %v2693 = vshrl.u32 %v2692, 7
        %v2694 = vsub.s32 0, %v2693
        %v2695 = vrot.slane %v2602, %v2694
        %v2696 = vlaneseq
        %v2697 = vshrl.u32 %v2696, 7
        %v2698 = vsub.s32 1, %v2697
        %v2699 = vrot.slane %v2602, %v2698
        %v2700 = vlaneseq
        %v2701 = vshrl.u32 %v2700, 7
        %v2702 = vsub.s32 0, %v2701
        %v2703 = vrot.slane %v2603, %v2702
        %v2704 = vlaneseq
        %v2705 = vshrl.u32 %v2704, 7
        %v2706 = vsub.s32 1, %v2705
        %v2707 = vrot.slane %v2603, %v2706
        %v2724 = vmul.f32 %v2606, %v2647
        %v2725 = vmul.f32 %v2606, %v2651
        %v2726 = vmul.f32 %v2610, %v2655
        %v2727 = vmul.f32 %v2610, %v2659
        %v2728 = vmul.f32 %v2614, %v2663
        %v2729 = vmul.f32 %v2614, %v2667
        %v2730 = vmul.f32 %v2618, %v2671
        %v2731 = vmul.f32 %v2618, %v2675
        %v2732 = vmul.f32 %v2622, %v2679
        %v2733 = vmul.f32 %v2622, %v2683
        %v2734 = vmul.f32 %v2626, %v2687
        %v2735 = vmul.f32 %v2626, %v2691
        %v2736 = vmul.f32 %v2630, %v2695
        %v2737 = vmul.f32 %v2630, %v2699
        %v2738 = vmul.f32 %v2634, %v2703
        %v2739 = vmul.f32 %v2634, %v2707
        %v2740 = vadd.f32 %v2556, %v2724
        %v2741 = vadd.f32 %v2557, %v2725
        %v2742 = vadd.f32 %v2558, %v2726
        %v2743 = vadd.f32 %v2559, %v2727
        %v2744 = vadd.f32 %v2560, %v2728
        %v2745 = vadd.f32 %v2561, %v2729
        %v2746 = vadd.f32 %v2562, %v2730
        %v2747 = vadd.f32 %v2563, %v2731
        %v2748 = vadd.f32 %v2564, %v2732
        %v2749 = vadd.f32 %v2565, %v2733
        %v2750 = vadd.f32 %v2566, %v2734
        %v2751 = vadd.f32 %v2567, %v2735
        %v2752 = vadd.f32 %v2568, %v2736
        %v2753 = vadd.f32 %v2569, %v2737
        %v2754 = vadd.f32 %v2570, %v2738
        %v2755 = vadd.f32 %v2571, %v2739
        %v2756 = vld [vmem:[%s271 + $0x2] sm:$0x1]
        %v2757 = vld [vmem:[%s271 + $0x6] sm:$0x1]
        %v2758 = vld [vmem:[%s271 + $0xa] sm:$0x1]
        %v2759 = vld [vmem:[%s271 + $0xe] sm:$0x1]
        %v2760 = vld [vmem:[%s271 + $0x12] sm:$0x1]
        %v2761 = vld [vmem:[%s271 + $0x16] sm:$0x1]
        %v2762 = vld [vmem:[%s271 + $0x1a] sm:$0x1]
        %v2763 = vld [vmem:[%s271 + $0x1e] sm:$0x1]
        %v2764 = vmul.f32 %v2606, %v2756
        %v2765 = vmul.f32 %v2610, %v2757
        %v2766 = vmul.f32 %v2614, %v2758
        %v2767 = vmul.f32 %v2618, %v2759
        %v2768 = vmul.f32 %v2622, %v2760
        %v2769 = vmul.f32 %v2626, %v2761
        %v2770 = vmul.f32 %v2630, %v2762
        %v2771 = vmul.f32 %v2634, %v2763
        %v2772 = vadd.f32 %v2588, %v2764
        %v2773 = vadd.f32 %v2589, %v2765
        %v2774 = vadd.f32 %v2590, %v2766
        %v2775 = vadd.f32 %v2591, %v2767
        %v2776 = vadd.f32 %v2592, %v2768
        %v2777 = vadd.f32 %v2593, %v2769
        %v2778 = vadd.f32 %v2594, %v2770
        %v2779 = vadd.f32 %v2595, %v2771
        %v2780 = vld [vmem:[%s972] ss:$4 sm:$0x3]
        %v2781 = vld [vmem:[%s974] ss:$4 sm:$0x3]
        %v2782 = vld [vmem:[%s976] ss:$4 sm:$0x3]
        %v2783 = vld [vmem:[%s978] ss:$4 sm:$0x3]
        %v2784 = vld [vmem:[%s980] ss:$4 sm:$0x3]
        %v2785 = vld [vmem:[%s982] ss:$4 sm:$0x3]
        %v2786 = vld [vmem:[%s984] ss:$4 sm:$0x3]
        %v2787 = vld [vmem:[%s986] ss:$4 sm:$0x3]
        %2788 = vset.pattern.permute.xlu0 3
        %2789 = vperm.xlu0 %2788, %v2229
        %v2790 = vpop.permute.xlu0 %2789
        %2792 = vset.pattern.permute.xlu0 3
        %2793 = vperm.xlu0 %2792, %v2231
        %v2794 = vpop.permute.xlu0 %2793
        %2796 = vset.pattern.permute.xlu0 3
        %2797 = vperm.xlu0 %2796, %v2233
        %v2798 = vpop.permute.xlu0 %2797
        %2800 = vset.pattern.permute.xlu0 3
        %2801 = vperm.xlu0 %2800, %v2235
        %v2802 = vpop.permute.xlu0 %2801
        %2804 = vset.pattern.permute.xlu0 3
        %2805 = vperm.xlu0 %2804, %v2237
        %v2806 = vpop.permute.xlu0 %2805
        %2808 = vset.pattern.permute.xlu0 3
        %2809 = vperm.xlu0 %2808, %v2239
        %v2810 = vpop.permute.xlu0 %2809
        %2812 = vset.pattern.permute.xlu0 3
        %2813 = vperm.xlu0 %2812, %v2241
        %v2814 = vpop.permute.xlu0 %2813
        %2816 = vset.pattern.permute.xlu0 3
        %2817 = vperm.xlu0 %2816, %v2243
        %v2818 = vpop.permute.xlu0 %2817
        %v2828 = vlaneseq
        %v2829 = vshrl.u32 %v2828, 7
        %v2830 = vsub.s32 0, %v2829
        %v2831 = vrot.slane %v2780, %v2830
        %v2832 = vlaneseq
        %v2833 = vshrl.u32 %v2832, 7
        %v2834 = vsub.s32 1, %v2833
        %v2835 = vrot.slane %v2780, %v2834
        %v2836 = vlaneseq
        %v2837 = vshrl.u32 %v2836, 7
        %v2838 = vsub.s32 0, %v2837
        %v2839 = vrot.slane %v2781, %v2838
        %v2840 = vlaneseq
        %v2841 = vshrl.u32 %v2840, 7
        %v2842 = vsub.s32 1, %v2841
        %v2843 = vrot.slane %v2781, %v2842
        %v2844 = vlaneseq
        %v2845 = vshrl.u32 %v2844, 7
        %v2846 = vsub.s32 0, %v2845
        %v2847 = vrot.slane %v2782, %v2846
        %v2848 = vlaneseq
        %v2849 = vshrl.u32 %v2848, 7
        %v2850 = vsub.s32 1, %v2849
        %v2851 = vrot.slane %v2782, %v2850
        %v2852 = vlaneseq
        %v2853 = vshrl.u32 %v2852, 7
        %v2854 = vsub.s32 0, %v2853
        %v2855 = vrot.slane %v2783, %v2854
        %v2856 = vlaneseq
        %v2857 = vshrl.u32 %v2856, 7
        %v2858 = vsub.s32 1, %v2857
        %v2859 = vrot.slane %v2783, %v2858
        %v2860 = vlaneseq
        %v2861 = vshrl.u32 %v2860, 7
        %v2862 = vsub.s32 0, %v2861
        %v2863 = vrot.slane %v2784, %v2862
        %v2864 = vlaneseq
        %v2865 = vshrl.u32 %v2864, 7
        %v2866 = vsub.s32 1, %v2865
        %v2867 = vrot.slane %v2784, %v2866
        %v2868 = vlaneseq
        %v2869 = vshrl.u32 %v2868, 7
        %v2870 = vsub.s32 0, %v2869
        %v2871 = vrot.slane %v2785, %v2870
        %v2872 = vlaneseq
        %v2873 = vshrl.u32 %v2872, 7
        %v2874 = vsub.s32 1, %v2873
        %v2875 = vrot.slane %v2785, %v2874
        %v2876 = vlaneseq
        %v2877 = vshrl.u32 %v2876, 7
        %v2878 = vsub.s32 0, %v2877
        %v2879 = vrot.slane %v2786, %v2878
        %v2880 = vlaneseq
        %v2881 = vshrl.u32 %v2880, 7
        %v2882 = vsub.s32 1, %v2881
        %v2883 = vrot.slane %v2786, %v2882
        %v2884 = vlaneseq
        %v2885 = vshrl.u32 %v2884, 7
        %v2886 = vsub.s32 0, %v2885
        %v2887 = vrot.slane %v2787, %v2886
        %v2888 = vlaneseq
        %v2889 = vshrl.u32 %v2888, 7
        %v2890 = vsub.s32 1, %v2889
        %v2891 = vrot.slane %v2787, %v2890
        %v2908 = vmul.f32 %v2790, %v2831
        %v2909 = vmul.f32 %v2790, %v2835
        %v2910 = vmul.f32 %v2794, %v2839
        %v2911 = vmul.f32 %v2794, %v2843
        %v2912 = vmul.f32 %v2798, %v2847
        %v2913 = vmul.f32 %v2798, %v2851
        %v2914 = vmul.f32 %v2802, %v2855
        %v2915 = vmul.f32 %v2802, %v2859
        %v2916 = vmul.f32 %v2806, %v2863
        %v2917 = vmul.f32 %v2806, %v2867
        %v2918 = vmul.f32 %v2810, %v2871
        %v2919 = vmul.f32 %v2810, %v2875
        %v2920 = vmul.f32 %v2814, %v2879
        %v2921 = vmul.f32 %v2814, %v2883
        %v2922 = vmul.f32 %v2818, %v2887
        %v2923 = vmul.f32 %v2818, %v2891
        %v2924 = vadd.f32 %v2740, %v2908
        %v2925 = vadd.f32 %v2741, %v2909
        %v2926 = vadd.f32 %v2742, %v2910
        %v2927 = vadd.f32 %v2743, %v2911
        %v2928 = vadd.f32 %v2744, %v2912
        %v2929 = vadd.f32 %v2745, %v2913
        %v2930 = vadd.f32 %v2746, %v2914
        %v2931 = vadd.f32 %v2747, %v2915
        %v2932 = vadd.f32 %v2748, %v2916
        %v2933 = vadd.f32 %v2749, %v2917
        %v2934 = vadd.f32 %v2750, %v2918
        %v2935 = vadd.f32 %v2751, %v2919
        %v2936 = vadd.f32 %v2752, %v2920
        %v2937 = vadd.f32 %v2753, %v2921
        %v2938 = vadd.f32 %v2754, %v2922
        %v2939 = vadd.f32 %v2755, %v2923
        %v2940 = vld [vmem:[%s271 + $0x3] sm:$0x1]
        %v2941 = vld [vmem:[%s271 + $0x7] sm:$0x1]
        %v2942 = vld [vmem:[%s271 + $0xb] sm:$0x1]
        %v2943 = vld [vmem:[%s271 + $0xf] sm:$0x1]
        %v2944 = vld [vmem:[%s271 + $0x13] sm:$0x1]
        %v2945 = vld [vmem:[%s271 + $0x17] sm:$0x1]
        %v2946 = vld [vmem:[%s271 + $0x1b] sm:$0x1]
        %v2947 = vld [vmem:[%s271 + $0x1f] sm:$0x1]
        %v2948 = vmul.f32 %v2790, %v2940
        %v2949 = vmul.f32 %v2794, %v2941
        %v2950 = vmul.f32 %v2798, %v2942
        %v2951 = vmul.f32 %v2802, %v2943
        %v2952 = vmul.f32 %v2806, %v2944
        %v2953 = vmul.f32 %v2810, %v2945
        %v2954 = vmul.f32 %v2814, %v2946
        %v2955 = vmul.f32 %v2818, %v2947
        %v2956 = vadd.f32 %v2772, %v2948
        %v2957 = vadd.f32 %v2773, %v2949
        %v2958 = vadd.f32 %v2774, %v2950
        %v2959 = vadd.f32 %v2775, %v2951
        %v2960 = vadd.f32 %v2776, %v2952
        %v2961 = vadd.f32 %v2777, %v2953
        %v2962 = vadd.f32 %v2778, %v2954
        %v2963 = vadd.f32 %v2779, %v2955
        %v2980 = vrot.slane %v2926, 7
        %v2981 = vsel %vm290, %v2980, %v2924
        %v2982 = vrot.slane %v2928, 6
        %v2983 = vsel %vm293, %v2982, %v2981
        %v2984 = vrot.slane %v2930, 5
        %v2985 = vsel %vm296, %v2984, %v2983
        %v2986 = vrot.slane %v2932, 4
        %v2987 = vsel %vm299, %v2986, %v2985
        %v2988 = vrot.slane %v2934, 3
        %v2989 = vsel %vm302, %v2988, %v2987
        %v2990 = vrot.slane %v2936, 2
        %v2991 = vsel %vm305, %v2990, %v2989
        %v2992 = vrot.slane %v2938, 1
        %v2993 = vsel %vm308, %v2992, %v2991
        %v2994 = vrot.slane %v2927, 7
        %v2995 = vsel %vm290, %v2994, %v2925
        %v2996 = vrot.slane %v2929, 6
        %v2997 = vsel %vm293, %v2996, %v2995
        %v2998 = vrot.slane %v2931, 5
        %v2999 = vsel %vm296, %v2998, %v2997
        %v3000 = vrot.slane %v2933, 4
        %v3001 = vsel %vm299, %v3000, %v2999
        %v3002 = vrot.slane %v2935, 3
        %v3003 = vsel %vm302, %v3002, %v3001
        %v3004 = vrot.slane %v2937, 2
        %v3005 = vsel %vm305, %v3004, %v3003
        %v3006 = vrot.slane %v2939, 1
        %v3007 = vsel %vm308, %v3006, %v3005
        %3010 = vst [vmem:[%s252 + $0x20] sm:$0xff] %v2993
        %3011 = vst [vmem:[%s252 + $0x28] sm:$0xff] %v3007
        %v3012 = vld [vmem:[%s264 + $0x3] sm:$0x1]
        %v3013 = vld [vmem:[%s264 + $0x7] sm:$0x1]
        %v3014 = vld [vmem:[%s264 + $0xb] sm:$0x1]
        %v3015 = vld [vmem:[%s264 + $0xf] sm:$0x1]
        %v3016 = vld [vmem:[%s264 + $0x13] sm:$0x1]
        %v3017 = vld [vmem:[%s264 + $0x17] sm:$0x1]
        %v3018 = vld [vmem:[%s264 + $0x1b] sm:$0x1]
        %v3019 = vld [vmem:[%s264 + $0x1f] sm:$0x1]
        %v3028 = vrot.slane %v3013, 7
        %v3029 = vsel %vm290, %v3028, %v3012
        %v3030 = vrot.slane %v3014, 6
        %v3031 = vsel %vm293, %v3030, %v3029
        %v3032 = vrot.slane %v3015, 5
        %v3033 = vsel %vm296, %v3032, %v3031
        %v3034 = vrot.slane %v3016, 4
        %v3035 = vsel %vm299, %v3034, %v3033
        %v3036 = vrot.slane %v3017, 3
        %v3037 = vsel %vm302, %v3036, %v3035
        %v3038 = vrot.slane %v3018, 2
        %v3039 = vsel %vm305, %v3038, %v3037
        %v3040 = vrot.slane %v3019, 1
        %v3041 = vsel %vm308, %v3040, %v3039
        %v3043 = vsel %vm311, %v3041, -inf
        %3044 = vmax.xlane.f32.xlu0 %v3043
        %v3045 = vpop.xlane.xlu0 %3044
        %v3047 = vrot.slane %v3045, 1
        %v3048 = vrot.slane %v3045, 2
        %v3049 = vrot.slane %v3045, 3
        %v3050 = vrot.slane %v3045, 4
        %v3051 = vrot.slane %v3045, 5
        %v3052 = vrot.slane %v3045, 6
        %v3053 = vrot.slane %v3045, 7
        %v3062 = vsub.f32 %v3012, %v3045
        %v3063 = vsub.f32 %v3013, %v3047
        %v3064 = vsub.f32 %v3014, %v3048
        %v3065 = vsub.f32 %v3015, %v3049
        %v3066 = vsub.f32 %v3016, %v3050
        %v3067 = vsub.f32 %v3017, %v3051
        %v3068 = vsub.f32 %v3018, %v3052
        %v3069 = vsub.f32 %v3019, %v3053
        %v3070 = vmul.f32 %v3062, 1.442695
        %v3071 = vpow.pop %v3070
        %v3072 = vmul.f32 %v3063, 1.442695
        %v3073 = vpow.pop %v3072
        %v3074 = vmul.f32 %v3064, 1.442695
        %v3075 = vpow.pop %v3074
        %v3076 = vmul.f32 %v3065, 1.442695
        %v3077 = vpow.pop %v3076
        %v3078 = vmul.f32 %v3066, 1.442695
        %v3079 = vpow.pop %v3078
        %v3080 = vmul.f32 %v3067, 1.442695
        %v3081 = vpow.pop %v3080
        %v3082 = vmul.f32 %v3068, 1.442695
        %v3083 = vpow.pop %v3082
        %v3084 = vmul.f32 %v3069, 1.442695
        %v3085 = vpow.pop %v3084
        %v3094 = vrot.slane %v3073, 7
        %v3095 = vsel %vm290, %v3094, %v3071
        %v3096 = vrot.slane %v3075, 6
        %v3097 = vsel %vm293, %v3096, %v3095
        %v3098 = vrot.slane %v3077, 5
        %v3099 = vsel %vm296, %v3098, %v3097
        %v3100 = vrot.slane %v3079, 4
        %v3101 = vsel %vm299, %v3100, %v3099
        %v3102 = vrot.slane %v3081, 3
        %v3103 = vsel %vm302, %v3102, %v3101
        %v3104 = vrot.slane %v3083, 2
        %v3105 = vsel %vm305, %v3104, %v3103
        %v3106 = vrot.slane %v3085, 1
        %v3107 = vsel %vm308, %v3106, %v3105
        %v3109 = vsel %vm311, %v3107, 0.0
        %3110 = vadd.xlane.f32.xlu0 %v3109
        %v3111 = vpop.xlane.xlu0 %3110
        %v3113 = vrot.slane %v3111, 1
        %v3114 = vrot.slane %v3111, 2
        %v3115 = vrot.slane %v3111, 3
        %v3116 = vrot.slane %v3111, 4
        %v3117 = vrot.slane %v3111, 5
        %v3118 = vrot.slane %v3111, 6
        %v3119 = vrot.slane %v3111, 7
        %v3128 = vrcp.pop %v3111
        %v3129 = vmul.f32 %v3071, %v3128
        %v3130 = vrcp.pop %v3113
        %v3131 = vmul.f32 %v3073, %v3130
        %v3132 = vrcp.pop %v3114
        %v3133 = vmul.f32 %v3075, %v3132
        %v3134 = vrcp.pop %v3115
        %v3135 = vmul.f32 %v3077, %v3134
        %v3136 = vrcp.pop %v3116
        %v3137 = vmul.f32 %v3079, %v3136
        %v3138 = vrcp.pop %v3117
        %v3139 = vmul.f32 %v3081, %v3138
        %v3140 = vrcp.pop %v3118
        %v3141 = vmul.f32 %v3083, %v3140
        %v3142 = vrcp.pop %v3119
        %v3143 = vmul.f32 %v3085, %v3142
        %v3144 = vld [vmem:[%s220] ss:$4 sm:$0x3]
        %v3145 = vld [vmem:[%s414] ss:$4 sm:$0x3]
        %v3146 = vld [vmem:[%s416] ss:$4 sm:$0x3]
        %v3147 = vld [vmem:[%s418] ss:$4 sm:$0x3]
        %v3148 = vld [vmem:[%s420] ss:$4 sm:$0x3]
        %v3149 = vld [vmem:[%s422] ss:$4 sm:$0x3]
        %v3150 = vld [vmem:[%s424] ss:$4 sm:$0x3]
        %v3151 = vld [vmem:[%s426] ss:$4 sm:$0x3]
        %3153 = vset.pattern.permute.xlu0 0
        %3154 = vperm.xlu0 %3153, %v3129
        %v3155 = vpop.permute.xlu0 %3154
        %3158 = vset.pattern.permute.xlu0 0
        %3159 = vperm.xlu0 %3158, %v3131
        %v3160 = vpop.permute.xlu0 %3159
        %3163 = vset.pattern.permute.xlu0 0
        %3164 = vperm.xlu0 %3163, %v3133
        %v3165 = vpop.permute.xlu0 %3164
        %3168 = vset.pattern.permute.xlu0 0
        %3169 = vperm.xlu0 %3168, %v3135
        %v3170 = vpop.permute.xlu0 %3169
        %3173 = vset.pattern.permute.xlu0 0
        %3174 = vperm.xlu0 %3173, %v3137
        %v3175 = vpop.permute.xlu0 %3174
        %3178 = vset.pattern.permute.xlu0 0
        %3179 = vperm.xlu0 %3178, %v3139
        %v3180 = vpop.permute.xlu0 %3179
        %3183 = vset.pattern.permute.xlu0 0
        %3184 = vperm.xlu0 %3183, %v3141
        %v3185 = vpop.permute.xlu0 %3184
        %3188 = vset.pattern.permute.xlu0 0
        %3189 = vperm.xlu0 %3188, %v3143
        %v3190 = vpop.permute.xlu0 %3189
        %v3200 = vlaneseq
        %v3201 = vshrl.u32 %v3200, 7
        %v3202 = vsub.s32 0, %v3201
        %v3203 = vrot.slane %v3144, %v3202
        %v3204 = vlaneseq
        %v3205 = vshrl.u32 %v3204, 7
        %v3206 = vsub.s32 1, %v3205
        %v3207 = vrot.slane %v3144, %v3206
        %v3208 = vlaneseq
        %v3209 = vshrl.u32 %v3208, 7
        %v3210 = vsub.s32 0, %v3209
        %v3211 = vrot.slane %v3145, %v3210
        %v3212 = vlaneseq
        %v3213 = vshrl.u32 %v3212, 7
        %v3214 = vsub.s32 1, %v3213
        %v3215 = vrot.slane %v3145, %v3214
        %v3216 = vlaneseq
        %v3217 = vshrl.u32 %v3216, 7
        %v3218 = vsub.s32 0, %v3217
        %v3219 = vrot.slane %v3146, %v3218
        %v3220 = vlaneseq
        %v3221 = vshrl.u32 %v3220, 7
        %v3222 = vsub.s32 1, %v3221
        %v3223 = vrot.slane %v3146, %v3222
        %v3224 = vlaneseq
        %v3225 = vshrl.u32 %v3224, 7
        %v3226 = vsub.s32 0, %v3225
        %v3227 = vrot.slane %v3147, %v3226
        %v3228 = vlaneseq
        %v3229 = vshrl.u32 %v3228, 7
        %v3230 = vsub.s32 1, %v3229
        %v3231 = vrot.slane %v3147, %v3230
        %v3232 = vlaneseq
        %v3233 = vshrl.u32 %v3232, 7
        %v3234 = vsub.s32 0, %v3233
        %v3235 = vrot.slane %v3148, %v3234
        %v3236 = vlaneseq
        %v3237 = vshrl.u32 %v3236, 7
        %v3238 = vsub.s32 1, %v3237
        %v3239 = vrot.slane %v3148, %v3238
        %v3240 = vlaneseq
        %v3241 = vshrl.u32 %v3240, 7
        %v3242 = vsub.s32 0, %v3241
        %v3243 = vrot.slane %v3149, %v3242
        %v3244 = vlaneseq
        %v3245 = vshrl.u32 %v3244, 7
        %v3246 = vsub.s32 1, %v3245
        %v3247 = vrot.slane %v3149, %v3246
        %v3248 = vlaneseq
        %v3249 = vshrl.u32 %v3248, 7
        %v3250 = vsub.s32 0, %v3249
        %v3251 = vrot.slane %v3150, %v3250
        %v3252 = vlaneseq
        %v3253 = vshrl.u32 %v3252, 7
        %v3254 = vsub.s32 1, %v3253
        %v3255 = vrot.slane %v3150, %v3254
        %v3256 = vlaneseq
        %v3257 = vshrl.u32 %v3256, 7
        %v3258 = vsub.s32 0, %v3257
        %v3259 = vrot.slane %v3151, %v3258
        %v3260 = vlaneseq
        %v3261 = vshrl.u32 %v3260, 7
        %v3262 = vsub.s32 1, %v3261
        %v3263 = vrot.slane %v3151, %v3262
        %v3280 = vmul.f32 %v3155, %v3203
        %v3281 = vmul.f32 %v3155, %v3207
        %v3282 = vmul.f32 %v3160, %v3211
        %v3283 = vmul.f32 %v3160, %v3215
        %v3284 = vmul.f32 %v3165, %v3219
        %v3285 = vmul.f32 %v3165, %v3223
        %v3286 = vmul.f32 %v3170, %v3227
        %v3287 = vmul.f32 %v3170, %v3231
        %v3288 = vmul.f32 %v3175, %v3235
        %v3289 = vmul.f32 %v3175, %v3239
        %v3290 = vmul.f32 %v3180, %v3243
        %v3291 = vmul.f32 %v3180, %v3247
        %v3292 = vmul.f32 %v3185, %v3251
        %v3293 = vmul.f32 %v3185, %v3255
        %v3294 = vmul.f32 %v3190, %v3259
        %v3295 = vmul.f32 %v3190, %v3263
        %v3296 = vld [vmem:[%s271] sm:$0x1]
        %v3297 = vld [vmem:[%s271 + $0x4] sm:$0x1]
        %v3298 = vld [vmem:[%s271 + $0x8] sm:$0x1]
        %v3299 = vld [vmem:[%s271 + $0xc] sm:$0x1]
        %v3300 = vld [vmem:[%s271 + $0x10] sm:$0x1]
        %v3301 = vld [vmem:[%s271 + $0x14] sm:$0x1]
        %v3302 = vld [vmem:[%s271 + $0x18] sm:$0x1]
        %v3303 = vld [vmem:[%s271 + $0x1c] sm:$0x1]
        %v3304 = vmul.f32 %v3155, %v3296
        %v3305 = vmul.f32 %v3160, %v3297
        %v3306 = vmul.f32 %v3165, %v3298
        %v3307 = vmul.f32 %v3170, %v3299
        %v3308 = vmul.f32 %v3175, %v3300
        %v3309 = vmul.f32 %v3180, %v3301
        %v3310 = vmul.f32 %v3185, %v3302
        %v3311 = vmul.f32 %v3190, %v3303
        %v3312 = vld [vmem:[%s588] ss:$4 sm:$0x3]
        %v3313 = vld [vmem:[%s590] ss:$4 sm:$0x3]
        %v3314 = vld [vmem:[%s592] ss:$4 sm:$0x3]
        %v3315 = vld [vmem:[%s594] ss:$4 sm:$0x3]
        %v3316 = vld [vmem:[%s596] ss:$4 sm:$0x3]
        %v3317 = vld [vmem:[%s598] ss:$4 sm:$0x3]
        %v3318 = vld [vmem:[%s600] ss:$4 sm:$0x3]
        %v3319 = vld [vmem:[%s602] ss:$4 sm:$0x3]
        %3320 = vset.pattern.permute.xlu0 1
        %3321 = vperm.xlu0 %3320, %v3129
        %v3322 = vpop.permute.xlu0 %3321
        %3324 = vset.pattern.permute.xlu0 1
        %3325 = vperm.xlu0 %3324, %v3131
        %v3326 = vpop.permute.xlu0 %3325
        %3328 = vset.pattern.permute.xlu0 1
        %3329 = vperm.xlu0 %3328, %v3133
        %v3330 = vpop.permute.xlu0 %3329
        %3332 = vset.pattern.permute.xlu0 1
        %3333 = vperm.xlu0 %3332, %v3135
        %v3334 = vpop.permute.xlu0 %3333
        %3336 = vset.pattern.permute.xlu0 1
        %3337 = vperm.xlu0 %3336, %v3137
        %v3338 = vpop.permute.xlu0 %3337
        %3340 = vset.pattern.permute.xlu0 1
        %3341 = vperm.xlu0 %3340, %v3139
        %v3342 = vpop.permute.xlu0 %3341
        %3344 = vset.pattern.permute.xlu0 1
        %3345 = vperm.xlu0 %3344, %v3141
        %v3346 = vpop.permute.xlu0 %3345
        %3348 = vset.pattern.permute.xlu0 1
        %3349 = vperm.xlu0 %3348, %v3143
        %v3350 = vpop.permute.xlu0 %3349
        %v3360 = vlaneseq
        %v3361 = vshrl.u32 %v3360, 7
        %v3362 = vsub.s32 0, %v3361
        %v3363 = vrot.slane %v3312, %v3362
        %v3364 = vlaneseq
        %v3365 = vshrl.u32 %v3364, 7
        %v3366 = vsub.s32 1, %v3365
        %v3367 = vrot.slane %v3312, %v3366
        %v3368 = vlaneseq
        %v3369 = vshrl.u32 %v3368, 7
        %v3370 = vsub.s32 0, %v3369
        %v3371 = vrot.slane %v3313, %v3370
        %v3372 = vlaneseq
        %v3373 = vshrl.u32 %v3372, 7
        %v3374 = vsub.s32 1, %v3373
        %v3375 = vrot.slane %v3313, %v3374
        %v3376 = vlaneseq
        %v3377 = vshrl.u32 %v3376, 7
        %v3378 = vsub.s32 0, %v3377
        %v3379 = vrot.slane %v3314, %v3378
        %v3380 = vlaneseq
        %v3381 = vshrl.u32 %v3380, 7
        %v3382 = vsub.s32 1, %v3381
        %v3383 = vrot.slane %v3314, %v3382
        %v3384 = vlaneseq
        %v3385 = vshrl.u32 %v3384, 7
        %v3386 = vsub.s32 0, %v3385
        %v3387 = vrot.slane %v3315, %v3386
        %v3388 = vlaneseq
        %v3389 = vshrl.u32 %v3388, 7
        %v3390 = vsub.s32 1, %v3389
        %v3391 = vrot.slane %v3315, %v3390
        %v3392 = vlaneseq
        %v3393 = vshrl.u32 %v3392, 7
        %v3394 = vsub.s32 0, %v3393
        %v3395 = vrot.slane %v3316, %v3394
        %v3396 = vlaneseq
        %v3397 = vshrl.u32 %v3396, 7
        %v3398 = vsub.s32 1, %v3397
        %v3399 = vrot.slane %v3316, %v3398
        %v3400 = vlaneseq
        %v3401 = vshrl.u32 %v3400, 7
        %v3402 = vsub.s32 0, %v3401
        %v3403 = vrot.slane %v3317, %v3402
        %v3404 = vlaneseq
        %v3405 = vshrl.u32 %v3404, 7
        %v3406 = vsub.s32 1, %v3405
        %v3407 = vrot.slane %v3317, %v3406
        %v3408 = vlaneseq
        %v3409 = vshrl.u32 %v3408, 7
        %v3410 = vsub.s32 0, %v3409
        %v3411 = vrot.slane %v3318, %v3410
        %v3412 = vlaneseq
        %v3413 = vshrl.u32 %v3412, 7
        %v3414 = vsub.s32 1, %v3413
        %v3415 = vrot.slane %v3318, %v3414
        %v3416 = vlaneseq
        %v3417 = vshrl.u32 %v3416, 7
        %v3418 = vsub.s32 0, %v3417
        %v3419 = vrot.slane %v3319, %v3418
        %v3420 = vlaneseq
        %v3421 = vshrl.u32 %v3420, 7
        %v3422 = vsub.s32 1, %v3421
        %v3423 = vrot.slane %v3319, %v3422
        %v3440 = vmul.f32 %v3322, %v3363
        %v3441 = vmul.f32 %v3322, %v3367
        %v3442 = vmul.f32 %v3326, %v3371
        %v3443 = vmul.f32 %v3326, %v3375
        %v3444 = vmul.f32 %v3330, %v3379
        %v3445 = vmul.f32 %v3330, %v3383
        %v3446 = vmul.f32 %v3334, %v3387
        %v3447 = vmul.f32 %v3334, %v3391
        %v3448 = vmul.f32 %v3338, %v3395
        %v3449 = vmul.f32 %v3338, %v3399
        %v3450 = vmul.f32 %v3342, %v3403
        %v3451 = vmul.f32 %v3342, %v3407
        %v3452 = vmul.f32 %v3346, %v3411
        %v3453 = vmul.f32 %v3346, %v3415
        %v3454 = vmul.f32 %v3350, %v3419
        %v3455 = vmul.f32 %v3350, %v3423
        %v3456 = vadd.f32 %v3280, %v3440
        %v3457 = vadd.f32 %v3281, %v3441
        %v3458 = vadd.f32 %v3282, %v3442
        %v3459 = vadd.f32 %v3283, %v3443
        %v3460 = vadd.f32 %v3284, %v3444
        %v3461 = vadd.f32 %v3285, %v3445
        %v3462 = vadd.f32 %v3286, %v3446
        %v3463 = vadd.f32 %v3287, %v3447
        %v3464 = vadd.f32 %v3288, %v3448
        %v3465 = vadd.f32 %v3289, %v3449
        %v3466 = vadd.f32 %v3290, %v3450
        %v3467 = vadd.f32 %v3291, %v3451
        %v3468 = vadd.f32 %v3292, %v3452
        %v3469 = vadd.f32 %v3293, %v3453
        %v3470 = vadd.f32 %v3294, %v3454
        %v3471 = vadd.f32 %v3295, %v3455
        %v3472 = vld [vmem:[%s271 + $0x1] sm:$0x1]
        %v3473 = vld [vmem:[%s271 + $0x5] sm:$0x1]
        %v3474 = vld [vmem:[%s271 + $0x9] sm:$0x1]
        %v3475 = vld [vmem:[%s271 + $0xd] sm:$0x1]
        %v3476 = vld [vmem:[%s271 + $0x11] sm:$0x1]
        %v3477 = vld [vmem:[%s271 + $0x15] sm:$0x1]
        %v3478 = vld [vmem:[%s271 + $0x19] sm:$0x1]
        %v3479 = vld [vmem:[%s271 + $0x1d] sm:$0x1]
        %v3480 = vmul.f32 %v3322, %v3472
        %v3481 = vmul.f32 %v3326, %v3473
        %v3482 = vmul.f32 %v3330, %v3474
        %v3483 = vmul.f32 %v3334, %v3475
        %v3484 = vmul.f32 %v3338, %v3476
        %v3485 = vmul.f32 %v3342, %v3477
        %v3486 = vmul.f32 %v3346, %v3478
        %v3487 = vmul.f32 %v3350, %v3479
        %v3488 = vadd.f32 %v3304, %v3480
        %v3489 = vadd.f32 %v3305, %v3481
        %v3490 = vadd.f32 %v3306, %v3482
        %v3491 = vadd.f32 %v3307, %v3483
        %v3492 = vadd.f32 %v3308, %v3484
        %v3493 = vadd.f32 %v3309, %v3485
        %v3494 = vadd.f32 %v3310, %v3486
        %v3495 = vadd.f32 %v3311, %v3487
        %v3496 = vld [vmem:[%s780] ss:$4 sm:$0x3]
        %v3497 = vld [vmem:[%s782] ss:$4 sm:$0x3]
        %v3498 = vld [vmem:[%s784] ss:$4 sm:$0x3]
        %v3499 = vld [vmem:[%s786] ss:$4 sm:$0x3]
        %v3500 = vld [vmem:[%s788] ss:$4 sm:$0x3]
        %v3501 = vld [vmem:[%s790] ss:$4 sm:$0x3]
        %v3502 = vld [vmem:[%s792] ss:$4 sm:$0x3]
        %v3503 = vld [vmem:[%s794] ss:$4 sm:$0x3]
        %3504 = vset.pattern.permute.xlu0 2
        %3505 = vperm.xlu0 %3504, %v3129
        %v3506 = vpop.permute.xlu0 %3505
        %3508 = vset.pattern.permute.xlu0 2
        %3509 = vperm.xlu0 %3508, %v3131
        %v3510 = vpop.permute.xlu0 %3509
        %3512 = vset.pattern.permute.xlu0 2
        %3513 = vperm.xlu0 %3512, %v3133
        %v3514 = vpop.permute.xlu0 %3513
        %3516 = vset.pattern.permute.xlu0 2
        %3517 = vperm.xlu0 %3516, %v3135
        %v3518 = vpop.permute.xlu0 %3517
        %3520 = vset.pattern.permute.xlu0 2
        %3521 = vperm.xlu0 %3520, %v3137
        %v3522 = vpop.permute.xlu0 %3521
        %3524 = vset.pattern.permute.xlu0 2
        %3525 = vperm.xlu0 %3524, %v3139
        %v3526 = vpop.permute.xlu0 %3525
        %3528 = vset.pattern.permute.xlu0 2
        %3529 = vperm.xlu0 %3528, %v3141
        %v3530 = vpop.permute.xlu0 %3529
        %3532 = vset.pattern.permute.xlu0 2
        %3533 = vperm.xlu0 %3532, %v3143
        %v3534 = vpop.permute.xlu0 %3533
        %v3544 = vlaneseq
        %v3545 = vshrl.u32 %v3544, 7
        %v3546 = vsub.s32 0, %v3545
        %v3547 = vrot.slane %v3496, %v3546
        %v3548 = vlaneseq
        %v3549 = vshrl.u32 %v3548, 7
        %v3550 = vsub.s32 1, %v3549
        %v3551 = vrot.slane %v3496, %v3550
        %v3552 = vlaneseq
        %v3553 = vshrl.u32 %v3552, 7
        %v3554 = vsub.s32 0, %v3553
        %v3555 = vrot.slane %v3497, %v3554
        %v3556 = vlaneseq
        %v3557 = vshrl.u32 %v3556, 7
        %v3558 = vsub.s32 1, %v3557
        %v3559 = vrot.slane %v3497, %v3558
        %v3560 = vlaneseq
        %v3561 = vshrl.u32 %v3560, 7
        %v3562 = vsub.s32 0, %v3561
        %v3563 = vrot.slane %v3498, %v3562
        %v3564 = vlaneseq
        %v3565 = vshrl.u32 %v3564, 7
        %v3566 = vsub.s32 1, %v3565
        %v3567 = vrot.slane %v3498, %v3566
        %v3568 = vlaneseq
        %v3569 = vshrl.u32 %v3568, 7
        %v3570 = vsub.s32 0, %v3569
        %v3571 = vrot.slane %v3499, %v3570
        %v3572 = vlaneseq
        %v3573 = vshrl.u32 %v3572, 7
        %v3574 = vsub.s32 1, %v3573
        %v3575 = vrot.slane %v3499, %v3574
        %v3576 = vlaneseq
        %v3577 = vshrl.u32 %v3576, 7
        %v3578 = vsub.s32 0, %v3577
        %v3579 = vrot.slane %v3500, %v3578
        %v3580 = vlaneseq
        %v3581 = vshrl.u32 %v3580, 7
        %v3582 = vsub.s32 1, %v3581
        %v3583 = vrot.slane %v3500, %v3582
        %v3584 = vlaneseq
        %v3585 = vshrl.u32 %v3584, 7
        %v3586 = vsub.s32 0, %v3585
        %v3587 = vrot.slane %v3501, %v3586
        %v3588 = vlaneseq
        %v3589 = vshrl.u32 %v3588, 7
        %v3590 = vsub.s32 1, %v3589
        %v3591 = vrot.slane %v3501, %v3590
        %v3592 = vlaneseq
        %v3593 = vshrl.u32 %v3592, 7
        %v3594 = vsub.s32 0, %v3593
        %v3595 = vrot.slane %v3502, %v3594
        %v3596 = vlaneseq
        %v3597 = vshrl.u32 %v3596, 7
        %v3598 = vsub.s32 1, %v3597
        %v3599 = vrot.slane %v3502, %v3598
        %v3600 = vlaneseq
        %v3601 = vshrl.u32 %v3600, 7
        %v3602 = vsub.s32 0, %v3601
        %v3603 = vrot.slane %v3503, %v3602
        %v3604 = vlaneseq
        %v3605 = vshrl.u32 %v3604, 7
        %v3606 = vsub.s32 1, %v3605
        %v3607 = vrot.slane %v3503, %v3606
        %v3624 = vmul.f32 %v3506, %v3547
        %v3625 = vmul.f32 %v3506, %v3551
        %v3626 = vmul.f32 %v3510, %v3555
        %v3627 = vmul.f32 %v3510, %v3559
        %v3628 = vmul.f32 %v3514, %v3563
        %v3629 = vmul.f32 %v3514, %v3567
        %v3630 = vmul.f32 %v3518, %v3571
        %v3631 = vmul.f32 %v3518, %v3575
        %v3632 = vmul.f32 %v3522, %v3579
        %v3633 = vmul.f32 %v3522, %v3583
        %v3634 = vmul.f32 %v3526, %v3587
        %v3635 = vmul.f32 %v3526, %v3591
        %v3636 = vmul.f32 %v3530, %v3595
        %v3637 = vmul.f32 %v3530, %v3599
        %v3638 = vmul.f32 %v3534, %v3603
        %v3639 = vmul.f32 %v3534, %v3607
        %v3640 = vadd.f32 %v3456, %v3624
        %v3641 = vadd.f32 %v3457, %v3625
        %v3642 = vadd.f32 %v3458, %v3626
        %v3643 = vadd.f32 %v3459, %v3627
        %v3644 = vadd.f32 %v3460, %v3628
        %v3645 = vadd.f32 %v3461, %v3629
        %v3646 = vadd.f32 %v3462, %v3630
        %v3647 = vadd.f32 %v3463, %v3631
        %v3648 = vadd.f32 %v3464, %v3632
        %v3649 = vadd.f32 %v3465, %v3633
        %v3650 = vadd.f32 %v3466, %v3634
        %v3651 = vadd.f32 %v3467, %v3635
        %v3652 = vadd.f32 %v3468, %v3636
        %v3653 = vadd.f32 %v3469, %v3637
        %v3654 = vadd.f32 %v3470, %v3638
        %v3655 = vadd.f32 %v3471, %v3639
        %v3656 = vld [vmem:[%s271 + $0x2] sm:$0x1]
        %v3657 = vld [vmem:[%s271 + $0x6] sm:$0x1]
        %v3658 = vld [vmem:[%s271 + $0xa] sm:$0x1]
        %v3659 = vld [vmem:[%s271 + $0xe] sm:$0x1]
        %v3660 = vld [vmem:[%s271 + $0x12] sm:$0x1]
        %v3661 = vld [vmem:[%s271 + $0x16] sm:$0x1]
        %v3662 = vld [vmem:[%s271 + $0x1a] sm:$0x1]
        %v3663 = vld [vmem:[%s271 + $0x1e] sm:$0x1]
        %v3664 = vmul.f32 %v3506, %v3656
        %v3665 = vmul.f32 %v3510, %v3657
        %v3666 = vmul.f32 %v3514, %v3658
        %v3667 = vmul.f32 %v3518, %v3659
        %v3668 = vmul.f32 %v3522, %v3660
        %v3669 = vmul.f32 %v3526, %v3661
        %v3670 = vmul.f32 %v3530, %v3662
        %v3671 = vmul.f32 %v3534, %v3663
        %v3672 = vadd.f32 %v3488, %v3664
        %v3673 = vadd.f32 %v3489, %v3665
        %v3674 = vadd.f32 %v3490, %v3666
        %v3675 = vadd.f32 %v3491, %v3667
        %v3676 = vadd.f32 %v3492, %v3668
        %v3677 = vadd.f32 %v3493, %v3669
        %v3678 = vadd.f32 %v3494, %v3670
        %v3679 = vadd.f32 %v3495, %v3671
        %v3680 = vld [vmem:[%s972] ss:$4 sm:$0x3]
        %v3681 = vld [vmem:[%s974] ss:$4 sm:$0x3]
        %v3682 = vld [vmem:[%s976] ss:$4 sm:$0x3]
        %v3683 = vld [vmem:[%s978] ss:$4 sm:$0x3]
        %v3684 = vld [vmem:[%s980] ss:$4 sm:$0x3]
        %v3685 = vld [vmem:[%s982] ss:$4 sm:$0x3]
        %v3686 = vld [vmem:[%s984] ss:$4 sm:$0x3]
        %v3687 = vld [vmem:[%s986] ss:$4 sm:$0x3]
        %3688 = vset.pattern.permute.xlu0 3
        %3689 = vperm.xlu0 %3688, %v3129
        %v3690 = vpop.permute.xlu0 %3689
        %3692 = vset.pattern.permute.xlu0 3
        %3693 = vperm.xlu0 %3692, %v3131
        %v3694 = vpop.permute.xlu0 %3693
        %3696 = vset.pattern.permute.xlu0 3
        %3697 = vperm.xlu0 %3696, %v3133
        %v3698 = vpop.permute.xlu0 %3697
        %3700 = vset.pattern.permute.xlu0 3
        %3701 = vperm.xlu0 %3700, %v3135
        %v3702 = vpop.permute.xlu0 %3701
        %3704 = vset.pattern.permute.xlu0 3
        %3705 = vperm.xlu0 %3704, %v3137
        %v3706 = vpop.permute.xlu0 %3705
        %3708 = vset.pattern.permute.xlu0 3
        %3709 = vperm.xlu0 %3708, %v3139
        %v3710 = vpop.permute.xlu0 %3709
        %3712 = vset.pattern.permute.xlu0 3
        %3713 = vperm.xlu0 %3712, %v3141
        %v3714 = vpop.permute.xlu0 %3713
        %3716 = vset.pattern.permute.xlu0 3
        %3717 = vperm.xlu0 %3716, %v3143
        %v3718 = vpop.permute.xlu0 %3717
        %v3728 = vlaneseq
        %v3729 = vshrl.u32 %v3728, 7
        %v3730 = vsub.s32 0, %v3729
        %v3731 = vrot.slane %v3680, %v3730
        %v3732 = vlaneseq
        %v3733 = vshrl.u32 %v3732, 7
        %v3734 = vsub.s32 1, %v3733
        %v3735 = vrot.slane %v3680, %v3734
        %v3736 = vlaneseq
        %v3737 = vshrl.u32 %v3736, 7
        %v3738 = vsub.s32 0, %v3737
        %v3739 = vrot.slane %v3681, %v3738
        %v3740 = vlaneseq
        %v3741 = vshrl.u32 %v3740, 7
        %v3742 = vsub.s32 1, %v3741
        %v3743 = vrot.slane %v3681, %v3742
        %v3744 = vlaneseq
        %v3745 = vshrl.u32 %v3744, 7
        %v3746 = vsub.s32 0, %v3745
        %v3747 = vrot.slane %v3682, %v3746
        %v3748 = vlaneseq
        %v3749 = vshrl.u32 %v3748, 7
        %v3750 = vsub.s32 1, %v3749
        %v3751 = vrot.slane %v3682, %v3750
        %v3752 = vlaneseq
        %v3753 = vshrl.u32 %v3752, 7
        %v3754 = vsub.s32 0, %v3753
        %v3755 = vrot.slane %v3683, %v3754
        %v3756 = vlaneseq
        %v3757 = vshrl.u32 %v3756, 7
        %v3758 = vsub.s32 1, %v3757
        %v3759 = vrot.slane %v3683, %v3758
        %v3760 = vlaneseq
        %v3761 = vshrl.u32 %v3760, 7
        %v3762 = vsub.s32 0, %v3761
        %v3763 = vrot.slane %v3684, %v3762
        %v3764 = vlaneseq
        %v3765 = vshrl.u32 %v3764, 7
        %v3766 = vsub.s32 1, %v3765
        %v3767 = vrot.slane %v3684, %v3766
        %v3768 = vlaneseq
        %v3769 = vshrl.u32 %v3768, 7
        %v3770 = vsub.s32 0, %v3769
        %v3771 = vrot.slane %v3685, %v3770
        %v3772 = vlaneseq
        %v3773 = vshrl.u32 %v3772, 7
        %v3774 = vsub.s32 1, %v3773
        %v3775 = vrot.slane %v3685, %v3774
        %v3776 = vlaneseq
        %v3777 = vshrl.u32 %v3776, 7
        %v3778 = vsub.s32 0, %v3777
        %v3779 = vrot.slane %v3686, %v3778
        %v3780 = vlaneseq
        %v3781 = vshrl.u32 %v3780, 7
        %v3782 = vsub.s32 1, %v3781
        %v3783 = vrot.slane %v3686, %v3782
        %v3784 = vlaneseq
        %v3785 = vshrl.u32 %v3784, 7
        %v3786 = vsub.s32 0, %v3785
        %v3787 = vrot.slane %v3687, %v3786
        %v3788 = vlaneseq
        %v3789 = vshrl.u32 %v3788, 7
        %v3790 = vsub.s32 1, %v3789
        %v3791 = vrot.slane %v3687, %v3790
        %v3808 = vmul.f32 %v3690, %v3731
        %v3809 = vmul.f32 %v3690, %v3735
        %v3810 = vmul.f32 %v3694, %v3739
        %v3811 = vmul.f32 %v3694, %v3743
        %v3812 = vmul.f32 %v3698, %v3747
        %v3813 = vmul.f32 %v3698, %v3751
        %v3814 = vmul.f32 %v3702, %v3755
        %v3815 = vmul.f32 %v3702, %v3759
        %v3816 = vmul.f32 %v3706, %v3763
        %v3817 = vmul.f32 %v3706, %v3767
        %v3818 = vmul.f32 %v3710, %v3771
        %v3819 = vmul.f32 %v3710, %v3775
        %v3820 = vmul.f32 %v3714, %v3779
        %v3821 = vmul.f32 %v3714, %v3783
        %v3822 = vmul.f32 %v3718, %v3787
        %v3823 = vmul.f32 %v3718, %v3791
        %v3824 = vadd.f32 %v3640, %v3808
        %v3825 = vadd.f32 %v3641, %v3809
        %v3826 = vadd.f32 %v3642, %v3810
        %v3827 = vadd.f32 %v3643, %v3811
        %v3828 = vadd.f32 %v3644, %v3812
        %v3829 = vadd.f32 %v3645, %v3813
        %v3830 = vadd.f32 %v3646, %v3814
        %v3831 = vadd.f32 %v3647, %v3815
        %v3832 = vadd.f32 %v3648, %v3816
        %v3833 = vadd.f32 %v3649, %v3817
        %v3834 = vadd.f32 %v3650, %v3818
        %v3835 = vadd.f32 %v3651, %v3819
        %v3836 = vadd.f32 %v3652, %v3820
        %v3837 = vadd.f32 %v3653, %v3821
        %v3838 = vadd.f32 %v3654, %v3822
        %v3839 = vadd.f32 %v3655, %v3823
        %v3840 = vld [vmem:[%s271 + $0x3] sm:$0x1]
        %v3841 = vld [vmem:[%s271 + $0x7] sm:$0x1]
        %v3842 = vld [vmem:[%s271 + $0xb] sm:$0x1]
        %v3843 = vld [vmem:[%s271 + $0xf] sm:$0x1]
        %v3844 = vld [vmem:[%s271 + $0x13] sm:$0x1]
        %v3845 = vld [vmem:[%s271 + $0x17] sm:$0x1]
        %v3846 = vld [vmem:[%s271 + $0x1b] sm:$0x1]
        %v3847 = vld [vmem:[%s271 + $0x1f] sm:$0x1]
        %v3848 = vmul.f32 %v3690, %v3840
        %v3849 = vmul.f32 %v3694, %v3841
        %v3850 = vmul.f32 %v3698, %v3842
        %v3851 = vmul.f32 %v3702, %v3843
        %v3852 = vmul.f32 %v3706, %v3844
        %v3853 = vmul.f32 %v3710, %v3845
        %v3854 = vmul.f32 %v3714, %v3846
        %v3855 = vmul.f32 %v3718, %v3847
        %v3856 = vadd.f32 %v3672, %v3848
        %v3857 = vadd.f32 %v3673, %v3849
        %v3858 = vadd.f32 %v3674, %v3850
        %v3859 = vadd.f32 %v3675, %v3851
        %v3860 = vadd.f32 %v3676, %v3852
        %v3861 = vadd.f32 %v3677, %v3853
        %v3862 = vadd.f32 %v3678, %v3854
        %v3863 = vadd.f32 %v3679, %v3855
        %v3880 = vrot.slane %v3826, 7
        %v3881 = vsel %vm290, %v3880, %v3824
        %v3882 = vrot.slane %v3828, 6
        %v3883 = vsel %vm293, %v3882, %v3881
        %v3884 = vrot.slane %v3830, 5
        %v3885 = vsel %vm296, %v3884, %v3883
        %v3886 = vrot.slane %v3832, 4
        %v3887 = vsel %vm299, %v3886, %v3885
        %v3888 = vrot.slane %v3834, 3
        %v3889 = vsel %vm302, %v3888, %v3887
        %v3890 = vrot.slane %v3836, 2
        %v3891 = vsel %vm305, %v3890, %v3889
        %v3892 = vrot.slane %v3838, 1
        %v3893 = vsel %vm308, %v3892, %v3891
        %v3894 = vrot.slane %v3827, 7
        %v3895 = vsel %vm290, %v3894, %v3825
        %v3896 = vrot.slane %v3829, 6
        %v3897 = vsel %vm293, %v3896, %v3895
        %v3898 = vrot.slane %v3831, 5
        %v3899 = vsel %vm296, %v3898, %v3897
        %v3900 = vrot.slane %v3833, 4
        %v3901 = vsel %vm299, %v3900, %v3899
        %v3902 = vrot.slane %v3835, 3
        %v3903 = vsel %vm302, %v3902, %v3901
        %v3904 = vrot.slane %v3837, 2
        %v3905 = vsel %vm305, %v3904, %v3903
        %v3906 = vrot.slane %v3839, 1
        %v3907 = vsel %vm308, %v3906, %v3905
        %3910 = vst [vmem:[%s252 + $0x30] sm:$0xff] %v3893
        %3911 = vst [vmem:[%s252 + $0x38] sm:$0xff] %v3907
        %v3920 = vrot.slane %v1157, 7
        %v3921 = vsel %vm290, %v3920, %v1156
        %v3922 = vrot.slane %v1158, 6
        %v3923 = vsel %vm293, %v3922, %v3921
        %v3924 = vrot.slane %v1159, 5
        %v3925 = vsel %vm296, %v3924, %v3923
        %v3926 = vrot.slane %v1160, 4
        %v3927 = vsel %vm299, %v3926, %v3925
        %v3928 = vrot.slane %v1161, 3
        %v3929 = vsel %vm302, %v3928, %v3927
        %v3930 = vrot.slane %v1162, 2
        %v3931 = vsel %vm305, %v3930, %v3929
        %v3932 = vrot.slane %v1163, 1
        %v3933 = vsel %vm308, %v3932, %v3931
        %v3943 = vrot.slane %v2057, 7
        %v3944 = vsel %vm290, %v3943, %v2056
        %v3945 = vrot.slane %v2058, 6
        %v3946 = vsel %vm293, %v3945, %v3944
        %v3947 = vrot.slane %v2059, 5
        %v3948 = vsel %vm296, %v3947, %v3946
        %v3949 = vrot.slane %v2060, 4
        %v3950 = vsel %vm299, %v3949, %v3948
        %v3951 = vrot.slane %v2061, 3
        %v3952 = vsel %vm302, %v3951, %v3950
        %v3953 = vrot.slane %v2062, 2
        %v3954 = vsel %vm305, %v3953, %v3952
        %v3955 = vrot.slane %v2063, 1
        %v3956 = vsel %vm308, %v3955, %v3954
        %3957 = vrot.lane.b32.xlu0 %v3956, 16
        %v3958 = vpop.permute.xlu0 %3957
        %v3968 = vrot.slane %v2957, 7
        %v3969 = vsel %vm290, %v3968, %v2956
        %v3970 = vrot.slane %v2958, 6
        %v3971 = vsel %vm293, %v3970, %v3969
        %v3972 = vrot.slane %v2959, 5
        %v3973 = vsel %vm296, %v3972, %v3971
        %v3974 = vrot.slane %v2960, 4
        %v3975 = vsel %vm299, %v3974, %v3973
        %v3976 = vrot.slane %v2961, 3
        %v3977 = vsel %vm302, %v3976, %v3975
        %v3978 = vrot.slane %v2962, 2
        %v3979 = vsel %vm305, %v3978, %v3977
        %v3980 = vrot.slane %v2963, 1
        %v3981 = vsel %vm308, %v3980, %v3979
        %3982 = vrot.lane.b32.xlu0 %v3981, 32
        %v3983 = vpop.permute.xlu0 %3982
        %v3993 = vrot.slane %v3857, 7
        %v3994 = vsel %vm290, %v3993, %v3856
        %v3995 = vrot.slane %v3858, 6
        %v3996 = vsel %vm293, %v3995, %v3994
        %v3997 = vrot.slane %v3859, 5
        %v3998 = vsel %vm296, %v3997, %v3996
        %v3999 = vrot.slane %v3860, 4
        %v4000 = vsel %vm299, %v3999, %v3998
        %v4001 = vrot.slane %v3861, 3
        %v4002 = vsel %vm302, %v4001, %v4000
        %v4003 = vrot.slane %v3862, 2
        %v4004 = vsel %vm305, %v4003, %v4002
        %v4005 = vrot.slane %v3863, 1
        %v4006 = vsel %vm308, %v4005, %v4004
        %4007 = vrot.lane.b32.xlu0 %v4006, 48
        %v4008 = vpop.permute.xlu0 %4007
        %vm4010 = vcmask 130048
        %v4011 = vsel %vm4010, %v3933, %v3958
        %vm4012 = vcmask 261120
        %v4013 = vsel %vm4012, %v4011, %v3983
        %vm4014 = vcmask 392192
        %v4015 = vsel %vm4014, %v4013, %v4008
        %vm4016 = vcmask 523264
        %4017 = vst.msk [vmem:[%s259] sm:$0xff] %vm4016, %v4015
        %s4018 = sand.u32 %s111, 1
        %s4019 = scalar_lea.sflag [#allocation4], %s4018
        %s4020 = sand.u32 %s111, 1
        %s4021 = smul.addr %s4020, 64
        %s4022 = scalar_lea.vmem [#allocation5], %s4021
        %s4023 = sand.u32 %s137, 1
        %s4024 = scalar_lea.sflag [#allocation7], %s4023
        %s4025 = sand.u32 %s137, 1
        %s4026 = smul.addr %s4025, 8
        %s4027 = scalar_lea.vmem [#allocation6], %s4026
        // Predicated region
        $region37: #{_memory_expression_flat.1} parent=31 // pred_check
          %p4028 = pneg %p121
        $region38: #{_memory_expression_flat.1} parent=31 // pred_check_branch
          %4030 = sbr.rel (%p4028) target = $region40
        $region39: #{_memory_expression_flat.1} parent=31 // pred_region
          %s4032 = ssub.s32 1024, 1024
          %4033 = vsyncadd %s4019, %s4032
          %s4034 = smul.addr %s25, 8
          %s4035 = smul.addr %s4034, 128
          %s4036 = scalar_lea.hbm %s3, %s4035
          %s4038 = sshll.u32 %s4022, 4
          %s4039 = int_to_ptr.vmem [resolvable:$true] %s4038
          %4041 = dma.vmem_to_hbm [thread:$0]  %s4039, 1024, %s4036, %s4019
        $region40: #{_memory_expression_flat.1} parent=31 // pred_fallthru
          _
        // Predicated region
        $region41: #{_memory_expression_flat.1} parent=31 // pred_check
          %p4042 = pneg %p147
        $region42: #{_memory_expression_flat.1} parent=31 // pred_check_branch
          %4044 = sbr.rel (%p4042) target = $region44
        $region43: #{_memory_expression_flat.1} parent=31 // pred_region
          %s4046 = ssub.s32 128, 128
          %4047 = vsyncadd %s4024, %s4046
          %s4048 = smul.addr %s25, 128
          %s4049 = scalar_lea.hbm %s4, %s4048
          %s4051 = sshll.u32 %s4027, 4
          %s4052 = int_to_ptr.vmem [resolvable:$true] %s4051
          %4054 = dma.vmem_to_hbm [thread:$0]  %s4052, 128, %s4049, %s4024
        $region44: #{_memory_expression_flat.1} parent=31 // pred_fallthru
          _
      $region32: #{_memory_expression_flat.1} parent=5 // pred_fallthru
        _
      %p4055 = scmp.le.s32.totalorder 2, %s20
      // Predicated region
      $region45: #{_memory_expression_flat.1} parent=5 // pred_check
        %p4056 = pneg %p4055
      $region46: #{_memory_expression_flat.1} parent=5 // pred_check_branch
        %4058 = sbr.rel (%p4056) target = $region48
      $region47: #{_memory_expression_flat.1} parent=5 // pred_region
        %s4059 = ssub.s32 %s20, 2
        // Predicated region
        $region49: #{_memory_expression_flat.1} parent=47 // pred_check
          %p4060 = pneg %p127
        $region50: #{_memory_expression_flat.1} parent=47 // pred_check_branch
          %4062 = sbr.rel (%p4060) target = $region52
        $region51: #{_memory_expression_flat.1} parent=47 // pred_region
          %s4063 = sand.u32 %s112, 1
          %s4064 = scalar_lea.sflag [#allocation4], %s4063
          %s4065 = sand.u32 %s112, 1
          %s4066 = smul.addr %s4065, 64
          %s4067 = scalar_lea.vmem [#allocation5], %s4066
          %4068 = dma.done %s4064, 1024
        $region52: #{_memory_expression_flat.1} parent=47 // pred_fallthru
          _
        // Predicated region
        $region53: #{_memory_expression_flat.1} parent=47 // pred_check
          %p4069 = pneg %p153
        $region54: #{_memory_expression_flat.1} parent=47 // pred_check_branch
          %4071 = sbr.rel (%p4069) target = $region56
        $region55: #{_memory_expression_flat.1} parent=47 // pred_region
          %s4072 = sand.u32 %s138, 1
          %s4073 = scalar_lea.sflag [#allocation7], %s4072
          %s4074 = sand.u32 %s138, 1
          %s4075 = smul.addr %s4074, 8
          %s4076 = scalar_lea.vmem [#allocation6], %s4075
          %4077 = dma.done %s4073, 128
        $region56: #{_memory_expression_flat.1} parent=47 // pred_fallthru
          _
      $region48: #{_memory_expression_flat.1} parent=5 // pred_fallthru
        _
    $region6: #{_memory_expression_flat.1} parent=1 // loop_footer
      %s24 = sadd.s32 1, %s20
    $region7: #{_memory_expression_flat.1} parent=1 // loop_footer_branch
      %19 = sbr.rel target = $region3
    $region8: #{_memory_expression_flat.1} parent=1 // loop_exit
      _
    %4078 = vsyncpa [#allocation3], 1
    %s4079 = scalar_lea.sflag [#allocation3], 1
    %4080 = vsyncpa %s4079, 1
    %4081 = vsyncpa [#allocation4], 1
    %s4082 = scalar_lea.sflag [#allocation4], 1
    %4083 = vsyncpa %s4082, 1
    %4084 = vsyncpa [#allocation7], 1
    %s4085 = scalar_lea.sflag [#allocation7], 1
    %4086 = vsyncpa %s4085, 1

</llo_original>
